<compile_context>
chip_gen: v7x
topology: tpu7x:2x2x1
jax: 0.10.0
libtpu: 0.0.40
codegen_flags: <defaults>
</compile_context>

<pallas_src>
import functools

import jax
import jax.numpy as jnp
from jax.experimental import pallas as pl
from jax.experimental.pallas import tpu as pltpu


# Explicit scoped-VMEM budget: within v5e/v6e (128 MiB phys) and v7x (64 MiB phys).
_VMEM_LIMIT = 32 * 1024 * 1024


def _round_up(x, m):
    return (x + m - 1) // m * m


# ----------------------------------------------------------------------------
# Kernel 1: fused  out = act((A @ W) * scale + bias [+ residual])
#   grid = (M tiles, K tiles); K is the reduction axis (last, "arbitrary"),
#   f32 accumulator scratch persists across the K loop, BN/residual/ReLU are
#   applied in the epilogue on the final K step.
# ----------------------------------------------------------------------------
def _mm_bn_kernel(a_ref, b_ref, s_ref, c_ref, *rest, relu, has_res):
    if has_res:
        r_ref, o_ref, acc_ref = rest
    else:
        r_ref = None
        o_ref, acc_ref = rest

    k = pl.program_id(1)

    @pl.when(k == 0)
    def _():
        acc_ref[...] = jnp.zeros_like(acc_ref)

    acc_ref[...] += jnp.dot(a_ref[...], b_ref[...],
                            preferred_element_type=jnp.float32)

    @pl.when(k == pl.num_programs(1) - 1)
    def _():
        y = acc_ref[...] * s_ref[...] + c_ref[...]
        if has_res:
            y = y + r_ref[...]
        if relu:
            y = jnp.maximum(y, 0.0)
        o_ref[...] = y


def mm_bn_act(a, w, scale, bias, residual=None, relu=True, tm=128, tk=128):
    """act((a @ w) * scale + bias (+ residual)). a:[M,K], w:[K,N], scale/bias:[1,N]."""
    M, K = a.shape
    Kw, N = w.shape
    assert K == Kw
    # NOTE: tm/tk=128 matches the v5e MXU exactly; on v6e/v7x these could be
    # raised to 256 (2x256x256 bf16 MXU) -- kept at 128 so one config runs
    # everywhere and per-step VMEM stays far below every generation's limit.
    tm = min(tm, _round_up(M, 8))
    Mp = _round_up(M, tm)
    if K <= tk:
        tk, Kp = K, K
    else:
        Kp = _round_up(K, tk)

    a_p = a
    if (Mp, Kp) != (M, K):
        a_p = jnp.zeros((Mp, Kp), a.dtype).at[:M, :K].set(a)
    w_p = w if Kp == K else jnp.zeros((Kp, N), w.dtype).at[:K].set(w)

    # bf16 operands / f32 accumulate: halves DMA bytes, doubles MXU rate (v6e/v7x).
    inputs = [a_p.astype(jnp.bfloat16), w_p.astype(jnp.bfloat16), scale, bias]
    in_specs = [
        pl.BlockSpec((tm, tk), lambda i, k: (i, k)),
        pl.BlockSpec((tk, N), lambda i, k: (k, 0)),
        pl.BlockSpec((1, N), lambda i, k: (0, 0)),
        pl.BlockSpec((1, N), lambda i, k: (0, 0)),
    ]
    if residual is not None:
        r_p = residual
        if Mp != M:
            r_p = jnp.zeros((Mp, N), residual.dtype).at[:M].set(residual)
        inputs.append(r_p)
        in_specs.append(pl.BlockSpec((tm, N), lambda i, k: (i, 0)))

    out = pl.pallas_call(
        functools.partial(_mm_bn_kernel, relu=relu,
                          has_res=residual is not None),
        out_shape=jax.ShapeDtypeStruct((Mp, N), jnp.float32),
        grid=(Mp // tm, Kp // tk),
        in_specs=in_specs,
        out_specs=pl.BlockSpec((tm, N), lambda i, k: (i, 0)),
        scratch_shapes=[pltpu.VMEM((tm, N), jnp.float32)],
        compiler_params=pltpu.CompilerParams(
            dimension_semantics=("parallel", "arbitrary"),
            vmem_limit_bytes=_VMEM_LIMIT),
    )(*inputs)
    return out[:M] if Mp != M else out


# ----------------------------------------------------------------------------
# Kernel 2: grouped 3x3 conv as ONE pallas_call with a group grid axis.
#   A: [G, M, Kg]   W: [G, Kg, Ng]   scale/bias: [G, 1, Ng]   out: [G, M, Ng]
# ----------------------------------------------------------------------------
def _grouped_mm_bn_kernel(a_ref, b_ref, s_ref, c_ref, o_ref, *, relu):
    y = jnp.dot(a_ref[...], b_ref[...],
                preferred_element_type=jnp.float32) * s_ref[...] + c_ref[...]
    if relu:
        y = jnp.maximum(y, 0.0)
    o_ref[...] = y


def grouped_conv3x3_bn_relu(x_nhwc, w_gm, scale_g, bias_g, tm=128):
    """Grouped 3x3 / stride 1 / pad 1 conv + folded BN + ReLU."""
    N, H, W, Cin = x_nhwc.shape
    G, Kg, Ng = w_gm.shape
    cin_g = Cin // G
    assert Kg == 9 * cin_g

    patches, Ho, Wo = _extract_patches(x_nhwc, 3, 3, 1, 1)    # [N,Ho,Wo,9,Cin]
    M = N * Ho * Wo
    # -> [G, M, 9*cin_g]  (per-group contiguous K slab, patch-pos major / chan minor)
    a = patches.reshape(M, 9, G, cin_g).transpose(2, 0, 1, 3).reshape(G, M, Kg)

    tm = min(tm, _round_up(M, 8))
    Mp = _round_up(M, tm)
    if Mp != M:
        a = jnp.zeros((G, Mp, Kg), a.dtype).at[:, :M].set(a)

    out = pl.pallas_call(
        functools.partial(_grouped_mm_bn_kernel, relu=True),
        out_shape=jax.ShapeDtypeStruct((G, Mp, Ng), jnp.float32),
        grid=(Mp // tm, G),
        in_specs=[
            pl.BlockSpec((None, tm, Kg), lambda i, g: (g, i, 0)),
            pl.BlockSpec((None, Kg, Ng), lambda i, g: (g, 0, 0)),
            pl.BlockSpec((None, 1, Ng), lambda i, g: (g, 0, 0)),
            pl.BlockSpec((None, 1, Ng), lambda i, g: (g, 0, 0)),
        ],
        out_specs=pl.BlockSpec((None, tm, Ng), lambda i, g: (g, i, 0)),
        compiler_params=pltpu.CompilerParams(
            dimension_semantics=("parallel", "parallel"),
            vmem_limit_bytes=_VMEM_LIMIT),
    )(a.astype(jnp.bfloat16), w_gm.astype(jnp.bfloat16), scale_g, bias_g)

    out = out.transpose(1, 0, 2).reshape(Mp, G * Ng)[:M]      # group-major channels
    return out.reshape(N, Ho, Wo, G * Ng)


# ----------------------------------------------------------------------------
# Kernel 3: fused 3x3 / stride-2 / pad-1 maxpool via even/odd phase views
#           (no [M, 9, C] patch tensor; 9 running maxima on the VPU).
# ----------------------------------------------------------------------------
def _maxpool3x3s2_kernel(ee_ref, eo_ref, oe_ref, oo_ref, o_ref):
    Ho, Wo, _ = o_ref.shape
    ee = ee_ref[...]
    eo = eo_ref[...]
    oe = oe_ref[...]
    oo = oo_ref[...]
    r = oo[:Ho, :Wo]
    r = jnp.maximum(r, ee[:Ho, :Wo])
    r = jnp.maximum(r, ee[1:, :Wo])
    r = jnp.maximum(r, ee[:Ho, 1:])
    r = jnp.maximum(r, ee[1:, 1:])
    r = jnp.maximum(r, eo[:Ho, :Wo])
    r = jnp.maximum(r, eo[1:, :Wo])
    r = jnp.maximum(r, oe[:Ho, :Wo])
    r = jnp.maximum(r, oe[:Ho, 1:])
    o_ref[...] = r


def maxpool2d_3x3_s2(x_nhwc):
    N, H, W, C = x_nhwc.shape
    Ho = (H + 2 - 3) // 2 + 1
    Wo = (W + 2 - 3) // 2 + 1
    xp = jnp.pad(x_nhwc, ((0, 0), (1, 1), (1, 1), (0, 0)),
                 constant_values=-jnp.inf)

    def phase(r0, c0):
        ph = xp[:, r0::2, c0::2, :][:, :Ho + 1, :Wo + 1, :]
        pr, pc = Ho + 1 - ph.shape[1], Wo + 1 - ph.shape[2]
        if pr or pc:
            ph = jnp.pad(ph, ((0, 0), (0, pr), (0, pc), (0, 0)),
                         constant_values=-jnp.inf)
        return ph

    ee, eo, oe, oo = phase(0, 0), phase(0, 1), phase(1, 0), phase(1, 1)
    return pl.pallas_call(
        _maxpool3x3s2_kernel,
        out_shape=jax.ShapeDtypeStruct((N, Ho, Wo, C), jnp.float32),
        grid=(N,),
        in_specs=[pl.BlockSpec((None, Ho + 1, Wo + 1, C),
                               lambda n: (n, 0, 0, 0))] * 4,
        out_specs=pl.BlockSpec((None, Ho, Wo, C), lambda n: (n, 0, 0, 0)),
        compiler_params=pltpu.CompilerParams(
            dimension_semantics=("parallel",),
            vmem_limit_bytes=_VMEM_LIMIT),
    )(ee, eo, oe, oo)


# ----------------------------------------------------------------------------
# Kernel 4: fused global-average-pool + FC head.
# ----------------------------------------------------------------------------
def _gap_fc_kernel(x_ref, w_ref, b_ref, o_ref):
    pooled = jnp.mean(x_ref[...], axis=1)                      # [N, C]
    o_ref[...] = jnp.dot(pooled, w_ref[...],
                         preferred_element_type=jnp.float32) + b_ref[...]


def gap_fc(x_nsc, w_cn, bias):
    N, HW, C = x_nsc.shape
    num_classes = w_cn.shape[1]
    return pl.pallas_call(
        _gap_fc_kernel,
        out_shape=jax.ShapeDtypeStruct((N, num_classes), jnp.float32),
    )(x_nsc, w_cn, bias)


# ----------------------------------------------------------------------------
# Conv glue (im2col only when kernel > 1x1; 1x1 convs are pure reshape).
# ----------------------------------------------------------------------------
def _extract_patches(x_nhwc, kh, kw, stride, pad):
    x = jnp.pad(x_nhwc, ((0, 0), (pad, pad), (pad, pad), (0, 0)))
    N, H, W, C = x.shape
    Ho = (H - kh) // stride + 1
    Wo = (W - kw) // stride + 1
    pieces = []
    for i in range(kh):
        for j in range(kw):
            pieces.append(x[:, i:i + stride * Ho:stride,
                             j:j + stride * Wo:stride, :])
    patches = jnp.stack(pieces, axis=3)        # [N, Ho, Wo, kh*kw, C]
    return patches, Ho, Wo


def conv2d_bn(x_nhwc, wm, kh, kw, stride, pad, scale, bias,
              residual=None, relu=True):
    """Dense conv + folded BN (+ residual add) (+ ReLU) via one fused matmul kernel.

    wm: matmul-ready weight [K(+pad to 128), Cout]; K ordering = (kh, kw, cin).
    """
    N, H, W, Cin = x_nhwc.shape
    if kh == 1 and kw == 1 and stride == 1 and pad == 0:
        Ho, Wo = H, W
        M = N * Ho * Wo
        a = x_nhwc.reshape(M, Cin)                            # no im2col for 1x1
    else:
        patches, Ho, Wo = _extract_patches(x_nhwc, kh, kw, stride, pad)
        M = N * Ho * Wo
        a = patches.reshape(M, kh * kw * Cin)
        Kp = wm.shape[0]
        if Kp != kh * kw * Cin:                               # weights pre-padded on K
            a = jnp.pad(a, ((0, 0), (0, Kp - kh * kw * Cin)))
    r2d = None if residual is None else residual.reshape(M, -1)
    out = mm_bn_act(a, wm, scale, bias, residual=r2d, relu=relu)
    return out.reshape(N, Ho, Wo, wm.shape[1])


# ----------------------------------------------------------------------------
# Deterministic parameters (ResNeXt-style, scaled down).  All matmul-ready
# weight matrices are precomputed here (no per-forward transposes).
# ----------------------------------------------------------------------------
def _fold_bn(key, c):
    k1, k2, k3 = jax.random.split(key, 3)
    gamma = 1.0 + 0.05 * jax.random.normal(k1, (c,), jnp.float32)
    beta = 0.05 * jax.random.normal(k2, (c,), jnp.float32)
    mean = 0.05 * jax.random.normal(k3, (c,), jnp.float32)
    var = jnp.ones((c,), jnp.float32)
    scale = gamma / jnp.sqrt(var + 1e-5)
    bias = beta - mean * scale
    return scale.reshape(1, c), bias.reshape(1, c)


def _conv_wm(key, cout, cin, kh, kw, k_pad_to=None):
    """PyTorch-layout conv weight folded to a matmul matrix [kh*kw*cin, cout]."""
    w = 0.05 * jax.random.normal(key, (cout, cin, kh, kw), jnp.float32)
    wm = jnp.transpose(w, (2, 3, 1, 0)).reshape(kh * kw * cin, cout)
    if k_pad_to is not None and wm.shape[0] % k_pad_to:
        wm = jnp.pad(wm, ((0, k_pad_to - wm.shape[0] % k_pad_to), (0, 0)))
    return wm


def _grouped_wm(key, width, card):
    """Grouped 3x3 weight -> stacked per-group matmul matrices [G, 9*cin_g, ng]."""
    cin_g = width // card
    ng = width // card
    w = 0.05 * jax.random.normal(key, (width, cin_g, 3, 3), jnp.float32)
    mats = []
    for g in range(card):
        wg = w[g * ng:(g + 1) * ng]
        mats.append(jnp.transpose(wg, (2, 3, 1, 0)).reshape(9 * cin_g, ng))
    return jnp.stack(mats, axis=0)


def make_params(key, num_classes=6):
    ks = iter(jax.random.split(key, 64))
    # Scaled ResNeXt-64x4d: cardinality=4, group width=4 -> bottleneck width 16.
    stem_c, width, out_c, card = 16, 16, 32, 4
    p = {"cardinality": card}
    p["stem_wm"] = _conv_wm(next(ks), stem_c, 3, 7, 7, k_pad_to=128)  # K 147 -> 256
    p["stem_bn"] = _fold_bn(next(ks), stem_c)

    def block(in_c, has_down):
        ng = width // card
        b = {"w1m": _conv_wm(next(ks), width, in_c, 1, 1),
             "bn1": _fold_bn(next(ks), width),
             "w2m": _grouped_wm(next(ks), width, card)}
        s2, c2 = _fold_bn(next(ks), width)
        b["bn2"] = (s2.reshape(card, 1, ng), c2.reshape(card, 1, ng))
        b["w3m"] = _conv_wm(next(ks), out_c, width, 1, 1)
        b["bn3"] = _fold_bn(next(ks), out_c)
        if has_down:
            b["wdm"] = _conv_wm(next(ks), out_c, in_c, 1, 1)
            b["bnd"] = _fold_bn(next(ks), out_c)
        return b

    p["block1"] = block(stem_c, has_down=True)
    p["block2"] = block(out_c, has_down=False)
    p["fc_w"] = 0.05 * jax.random.normal(next(ks), (out_c, num_classes), jnp.float32)
    p["fc_b"] = 0.05 * jax.random.normal(next(ks), (1, num_classes), jnp.float32)
    return p


# ----------------------------------------------------------------------------
# Forward pass (mirrors resnext.forward: output = model(input))
# ----------------------------------------------------------------------------
def resnext_forward(params, x_nchw):
    x = jnp.transpose(x_nchw, (0, 2, 3, 1)).astype(jnp.float32)   # NCHW -> NHWC

    # stem: conv7x7/s2 (+BN+ReLU fused in-kernel), then fused maxpool 3x3/s2
    s0, b0 = params["stem_bn"]
    x = conv2d_bn(x, params["stem_wm"], 7, 7, 2, 3, s0, b0, relu=True)
    x = maxpool2d_3x3_s2(x)

    def bottleneck(x, blk):
        s1, b1 = blk["bn1"]
        y = conv2d_bn(x, blk["w1m"], 1, 1, 1, 0, s1, b1, relu=True)
        s2, b2 = blk["bn2"]
        y = grouped_conv3x3_bn_relu(y, blk["w2m"], s2, b2)
        if "wdm" in blk:
            sd, bd = blk["bnd"]
            identity = conv2d_bn(x, blk["wdm"], 1, 1, 1, 0, sd, bd, relu=False)
        else:
            identity = x
        s3, b3 = blk["bn3"]
        # 1x1 conv + BN + residual add + ReLU all fused into one kernel epilogue
        return conv2d_bn(y, blk["w3m"], 1, 1, 1, 0, s3, b3,
                         residual=identity, relu=True)

    x = bottleneck(x, params["block1"])
    x = bottleneck(x, params["block2"])

    N, H, W, C = x.shape
    return gap_fc(x.reshape(N, H * W, C), params["fc_w"], params["fc_b"])  # [N, 6]


# ----------------------------------------------------------------------------
# Main
# ----------------------------------------------------------------------------
if __name__ == "__main__":
    key = jax.random.PRNGKey(0)
    k_params, k_input = jax.random.split(key)
    params = make_params(k_params, num_classes=6)

    # PyTorch-convention NCHW input (small spatial size for a synthetic run).
    x = jax.random.normal(k_input, (2, 3, 32, 32), dtype=jnp.float32)

    logits = jax.jit(lambda inp: resnext_forward(params, inp))(x)
    logits = jax.block_until_ready(logits)

    assert logits.shape == (2, 6), logits.shape
    assert bool(jnp.all(jnp.isfinite(logits)))
    print("KERNEL_OK")
</pallas_src>

<mosaic_0001>
module attributes {stable_mosaic.version = 11 : i64} {
  func.func @_mm_bn_kernel(%arg0: i32, %arg1: i32, %arg2: memref<128x128xbf16, #tpu.memory_space<vmem>>, %arg3: memref<128x16xbf16, #tpu.memory_space<vmem>>, %arg4: memref<1x16xf32, #tpu.memory_space<vmem>>, %arg5: memref<1x16xf32, #tpu.memory_space<vmem>>, %arg6: memref<128x16xf32, #tpu.memory_space<vmem>>, %arg7: memref<128x16xf32, #tpu.memory_space<vmem>>) attributes {dimension_semantics = [#tpu.dimension_semantics<parallel>, #tpu.dimension_semantics<arbitrary>], iteration_bounds = array<i64: 4, 2>, scalar_prefetch = 0 : i64, scratch_operands = 1 : i64, tpu.core_type = #tpu.core_type<tc>, window_params = [{transform_indices = @transform_0, window_bounds = array<i64: 128, 128>}, {transform_indices = @transform_1, window_bounds = array<i64: 128, 16>}, {pipeline_mode = #tpu.pipeline_mode<synchronous>, transform_indices = @transform_2, window_bounds = array<i64: 1, 16>}, {pipeline_mode = #tpu.pipeline_mode<synchronous>, transform_indices = @transform_3, window_bounds = array<i64: 1, 16>}, {transform_indices = @transform_4, window_bounds = array<i64: 128, 16>}]} {
    %c0_i32 = arith.constant 0 : i32
    %0 = arith.cmpi eq, %arg1, %c0_i32 : i32
    %1 = arith.extui %0 : i1 to i32
    %c0_i32_0 = arith.constant 0 : i32
    %2 = arith.cmpi ne, %1, %c0_i32_0 : i32
    scf.if %2 {
      %cst_9 = arith.constant 0.000000e+00 : f32
      %12 = vector.broadcast %cst_9 : f32 to vector<128x16xf32>
      %c0_10 = arith.constant 0 : index
      %c0_11 = arith.constant 0 : index
      %13 = vector.load %arg7[%c0_10, %c0_11] : memref<128x16xf32, #tpu.memory_space<vmem>>, vector<128x16xf32>
      tpu.vector_store %arg7[%c0_10, %c0_11], %12 {strides = array<i32>} : memref<128x16xf32, #tpu.memory_space<vmem>>, vector<128x16xf32>,
    } else {
    }
    %c0 = arith.constant 0 : index
    %c0_1 = arith.constant 0 : index
    %3 = vector.load %arg7[%c0, %c0_1] : memref<128x16xf32, #tpu.memory_space<vmem>>, vector<128x16xf32>
    %c0_2 = arith.constant 0 : index
    %c0_3 = arith.constant 0 : index
    %4 = vector.load %arg2[%c0_2, %c0_3] : memref<128x128xbf16, #tpu.memory_space<vmem>>, vector<128x128xbf16>
    %c0_4 = arith.constant 0 : index
    %c0_5 = arith.constant 0 : index
    %5 = vector.load %arg3[%c0_4, %c0_5] : memref<128x16xbf16, #tpu.memory_space<vmem>>, vector<128x16xbf16>
    %cst = arith.constant dense<0.000000e+00> : vector<128x16xf32>
    %6 = tpu.matmul %4, %5, %cst {dimension_numbers = #tpu.dot_dimension_numbers<[1], [0], [0], [1], [0, 0, 1, 1], [], []>} : vector<128x128xbf16>, vector<128x16xbf16>, vector<128x16xf32> -> vector<128x16xf32>
    %7 = arith.addf %3, %6 : vector<128x16xf32>
    %c0_6 = arith.constant 0 : index
    %c0_7 = arith.constant 0 : index
    %8 = vector.load %arg7[%c0_6, %c0_7] : memref<128x16xf32, #tpu.memory_space<vmem>>, vector<128x16xf32>
    tpu.vector_store %arg7[%c0_6, %c0_7], %7 {strides = array<i32>} : memref<128x16xf32, #tpu.memory_space<vmem>>, vector<128x16xf32>,
    %c1_i32 = arith.constant 1 : i32
    %9 = arith.cmpi eq, %arg1, %c1_i32 : i32
    %10 = arith.extui %9 : i1 to i32
    %c0_i32_8 = arith.constant 0 : i32
    %11 = arith.cmpi ne, %10, %c0_i32_8 : i32
    scf.if %11 {
      %c0_9 = arith.constant 0 : index
      %c0_10 = arith.constant 0 : index
      %12 = vector.load %arg7[%c0_9, %c0_10] : memref<128x16xf32, #tpu.memory_space<vmem>>, vector<128x16xf32>
      %c0_11 = arith.constant 0 : index
      %c0_12 = arith.constant 0 : index
      %13 = vector.load %arg4[%c0_11, %c0_12] : memref<1x16xf32, #tpu.memory_space<vmem>>, vector<1x16xf32>
      %14 = vector.broadcast %13 : vector<1x16xf32> to vector<128x16xf32>
      %15 = arith.mulf %12, %14 : vector<128x16xf32>
      %c0_13 = arith.constant 0 : index
      %c0_14 = arith.constant 0 : index
      %16 = vector.load %arg5[%c0_13, %c0_14] : memref<1x16xf32, #tpu.memory_space<vmem>>, vector<1x16xf32>
      %17 = vector.broadcast %16 : vector<1x16xf32> to vector<128x16xf32>
      %18 = arith.addf %15, %17 : vector<128x16xf32>
      %cst_15 = arith.constant 0.000000e+00 : f32
      %19 = vector.broadcast %cst_15 : f32 to vector<128x16xf32>
      %20 = arith.maximumf %18, %19 : vector<128x16xf32>
      %c0_16 = arith.constant 0 : index
      %c0_17 = arith.constant 0 : index
      %21 = vector.load %arg6[%c0_16, %c0_17] : memref<128x16xf32, #tpu.memory_space<vmem>>, vector<128x16xf32>
      tpu.vector_store %arg6[%c0_16, %c0_17], %20 {strides = array<i32>} : memref<128x16xf32, #tpu.memory_space<vmem>>, vector<128x16xf32>,
    } else {
    }
    return
  }
  func.func @transform_0(%arg0: i32, %arg1: i32) -> (i32, i32) {
    %c0_i32 = arith.constant 0 : i32
    return %arg0, %arg1 : i32, i32
  }
  func.func @transform_1(%arg0: i32, %arg1: i32) -> (i32, i32) {
    %c0_i32 = arith.constant 0 : i32
    %c0_i32_0 = arith.constant 0 : i32
    return %arg1, %c0_i32 : i32, i32
  }
  func.func @transform_2(%arg0: i32, %arg1: i32) -> (i32, i32) {
    %c0_i32 = arith.constant 0 : i32
    %c0_i32_0 = arith.constant 0 : i32
    %c0_i32_1 = arith.constant 0 : i32
    return %c0_i32, %c0_i32_0 : i32, i32
  }
  func.func @transform_3(%arg0: i32, %arg1: i32) -> (i32, i32) {
    %c0_i32 = arith.constant 0 : i32
    %c0_i32_0 = arith.constant 0 : i32
    %c0_i32_1 = arith.constant 0 : i32
    return %c0_i32, %c0_i32_0 : i32, i32
  }
  func.func @transform_4(%arg0: i32, %arg1: i32) -> (i32, i32) {
    %c0_i32 = arith.constant 0 : i32
    %c0_i32_0 = arith.constant 0 : i32
    return %arg0, %c0_i32 : i32, i32
  }
}

module attributes {stable_mosaic.version = 11 : i64} {
  func.func @_maxpool3x3s2_kernel(%arg0: i32, %arg1: memref<1x9x9x16xf32, #tpu.memory_space<vmem>>, %arg2: memref<1x9x9x16xf32, #tpu.memory_space<vmem>>, %arg3: memref<1x9x9x16xf32, #tpu.memory_space<vmem>>, %arg4: memref<1x9x9x16xf32, #tpu.memory_space<vmem>>, %arg5: memref<1x8x8x16xf32, #tpu.memory_space<vmem>>) attributes {dimension_semantics = [#tpu.dimension_semantics<parallel>], iteration_bounds = array<i64: 2>, scalar_prefetch = 0 : i64, scratch_operands = 0 : i64, tpu.core_type = #tpu.core_type<tc>, window_params = [{transform_indices = @transform_0, window_bounds = array<i64: 1, 9, 9, 16>}, {transform_indices = @transform_1, window_bounds = array<i64: 1, 9, 9, 16>}, {transform_indices = @transform_2, window_bounds = array<i64: 1, 9, 9, 16>}, {transform_indices = @transform_3, window_bounds = array<i64: 1, 9, 9, 16>}, {transform_indices = @transform_4, window_bounds = array<i64: 1, 8, 8, 16>}]} {
    %c0 = arith.constant 0 : index
    %c0_0 = arith.constant 0 : index
    %c0_1 = arith.constant 0 : index
    %c0_2 = arith.constant 0 : index
    %0 = vector.load %arg1[%c0, %c0_0, %c0_1, %c0_2] : memref<1x9x9x16xf32, #tpu.memory_space<vmem>>, vector<1x9x9x16xf32>
    %1 = vector.shape_cast %0 : vector<1x9x9x16xf32> to vector<9x9x16xf32>
    %c0_3 = arith.constant 0 : index
    %c0_4 = arith.constant 0 : index
    %c0_5 = arith.constant 0 : index
    %c0_6 = arith.constant 0 : index
    %2 = vector.load %arg2[%c0_3, %c0_4, %c0_5, %c0_6] : memref<1x9x9x16xf32, #tpu.memory_space<vmem>>, vector<1x9x9x16xf32>
    %3 = vector.shape_cast %2 : vector<1x9x9x16xf32> to vector<9x9x16xf32>
    %c0_7 = arith.constant 0 : index
    %c0_8 = arith.constant 0 : index
    %c0_9 = arith.constant 0 : index
    %c0_10 = arith.constant 0 : index
    %4 = vector.load %arg3[%c0_7, %c0_8, %c0_9, %c0_10] : memref<1x9x9x16xf32, #tpu.memory_space<vmem>>, vector<1x9x9x16xf32>
    %5 = vector.shape_cast %4 : vector<1x9x9x16xf32> to vector<9x9x16xf32>
    %c0_11 = arith.constant 0 : index
    %c0_12 = arith.constant 0 : index
    %c0_13 = arith.constant 0 : index
    %c0_14 = arith.constant 0 : index
    %6 = vector.load %arg4[%c0_11, %c0_12, %c0_13, %c0_14] : memref<1x9x9x16xf32, #tpu.memory_space<vmem>>, vector<1x9x9x16xf32>
    %7 = vector.shape_cast %6 : vector<1x9x9x16xf32> to vector<9x9x16xf32>
    %8 = vector.extract_strided_slice %7 {offsets = [0, 0, 0], sizes = [8, 8, 16], strides = [1, 1, 1]} : vector<9x9x16xf32> to vector<8x8x16xf32>
    %9 = vector.extract_strided_slice %1 {offsets = [0, 0, 0], sizes = [8, 8, 16], strides = [1, 1, 1]} : vector<9x9x16xf32> to vector<8x8x16xf32>
    %10 = arith.maximumf %8, %9 : vector<8x8x16xf32>
    %11 = vector.extract_strided_slice %1 {offsets = [1, 0, 0], sizes = [8, 8, 16], strides = [1, 1, 1]} : vector<9x9x16xf32> to vector<8x8x16xf32>
    %12 = arith.maximumf %10, %11 : vector<8x8x16xf32>
    %13 = vector.extract_strided_slice %1 {offsets = [0, 1, 0], sizes = [8, 8, 16], strides = [1, 1, 1]} : vector<9x9x16xf32> to vector<8x8x16xf32>
    %14 = arith.maximumf %12, %13 : vector<8x8x16xf32>
    %15 = vector.extract_strided_slice %1 {offsets = [1, 1, 0], sizes = [8, 8, 16], strides = [1, 1, 1]} : vector<9x9x16xf32> to vector<8x8x16xf32>
    %16 = arith.maximumf %14, %15 : vector<8x8x16xf32>
    %17 = vector.extract_strided_slice %3 {offsets = [0, 0, 0], sizes = [8, 8, 16], strides = [1, 1, 1]} : vector<9x9x16xf32> to vector<8x8x16xf32>
    %18 = arith.maximumf %16, %17 : vector<8x8x16xf32>
    %19 = vector.extract_strided_slice %3 {offsets = [1, 0, 0], sizes = [8, 8, 16], strides = [1, 1, 1]} : vector<9x9x16xf32> to vector<8x8x16xf32>
    %20 = arith.maximumf %18, %19 : vector<8x8x16xf32>
    %21 = vector.extract_strided_slice %5 {offsets = [0, 0, 0], sizes = [8, 8, 16], strides = [1, 1, 1]} : vector<9x9x16xf32> to vector<8x8x16xf32>
    %22 = arith.maximumf %20, %21 : vector<8x8x16xf32>
    %23 = vector.extract_strided_slice %5 {offsets = [0, 1, 0], sizes = [8, 8, 16], strides = [1, 1, 1]} : vector<9x9x16xf32> to vector<8x8x16xf32>
    %24 = arith.maximumf %22, %23 : vector<8x8x16xf32>
    %c0_15 = arith.constant 0 : index
    %c0_16 = arith.constant 0 : index
    %c0_17 = arith.constant 0 : index
    %c0_18 = arith.constant 0 : index
    %25 = vector.load %arg5[%c0_15, %c0_16, %c0_17, %c0_18] : memref<1x8x8x16xf32, #tpu.memory_space<vmem>>, vector<1x8x8x16xf32>
    %26 = vector.shape_cast %25 : vector<1x8x8x16xf32> to vector<8x8x16xf32>
    %27 = vector.shape_cast %24 : vector<8x8x16xf32> to vector<1x8x8x16xf32>
    tpu.vector_store %arg5[%c0_15, %c0_16, %c0_17, %c0_18], %27 {strides = array<i32>} : memref<1x8x8x16xf32, #tpu.memory_space<vmem>>, vector<1x8x8x16xf32>,
    return
  }
  func.func @transform_0(%arg0: i32) -> (i32, i32, i32, i32) {
    %c0_i32 = arith.constant 0 : i32
    %c0_i32_0 = arith.constant 0 : i32
    %c0_i32_1 = arith.constant 0 : i32
    %c0_i32_2 = arith.constant 0 : i32
    return %arg0, %c0_i32, %c0_i32_0, %c0_i32_1 : i32, i32, i32, i32
  }
  func.func @transform_1(%arg0: i32) -> (i32, i32, i32, i32) {
    %c0_i32 = arith.constant 0 : i32
    %c0_i32_0 = arith.constant 0 : i32
    %c0_i32_1 = arith.constant 0 : i32
    %c0_i32_2 = arith.constant 0 : i32
    return %arg0, %c0_i32, %c0_i32_0, %c0_i32_1 : i32, i32, i32, i32
  }
  func.func @transform_2(%arg0: i32) -> (i32, i32, i32, i32) {
    %c0_i32 = arith.constant 0 : i32
    %c0_i32_0 = arith.constant 0 : i32
    %c0_i32_1 = arith.constant 0 : i32
    %c0_i32_2 = arith.constant 0 : i32
    return %arg0, %c0_i32, %c0_i32_0, %c0_i32_1 : i32, i32, i32, i32
  }
  func.func @transform_3(%arg0: i32) -> (i32, i32, i32, i32) {
    %c0_i32 = arith.constant 0 : i32
    %c0_i32_0 = arith.constant 0 : i32
    %c0_i32_1 = arith.constant 0 : i32
    %c0_i32_2 = arith.constant 0 : i32
    return %arg0, %c0_i32, %c0_i32_0, %c0_i32_1 : i32, i32, i32, i32
  }
  func.func @transform_4(%arg0: i32) -> (i32, i32, i32, i32) {
    %c0_i32 = arith.constant 0 : i32
    %c0_i32_0 = arith.constant 0 : i32
    %c0_i32_1 = arith.constant 0 : i32
    %c0_i32_2 = arith.constant 0 : i32
    return %arg0, %c0_i32, %c0_i32_0, %c0_i32_1 : i32, i32, i32, i32
  }
}

module attributes {stable_mosaic.version = 11 : i64} {
  func.func @_mm_bn_kernel(%arg0: i32, %arg1: i32, %arg2: memref<128x16xbf16, #tpu.memory_space<vmem>>, %arg3: memref<16x16xbf16, #tpu.memory_space<vmem>>, %arg4: memref<1x16xf32, #tpu.memory_space<vmem>>, %arg5: memref<1x16xf32, #tpu.memory_space<vmem>>, %arg6: memref<128x16xf32, #tpu.memory_space<vmem>>, %arg7: memref<128x16xf32, #tpu.memory_space<vmem>>) attributes {dimension_semantics = [#tpu.dimension_semantics<parallel>, #tpu.dimension_semantics<arbitrary>], iteration_bounds = array<i64: 1, 1>, scalar_prefetch = 0 : i64, scratch_operands = 1 : i64, tpu.core_type = #tpu.core_type<tc>, window_params = [{transform_indices = @transform_0, window_bounds = array<i64: 128, 16>}, {transform_indices = @transform_1, window_bounds = array<i64: 16, 16>}, {pipeline_mode = #tpu.pipeline_mode<synchronous>, transform_indices = @transform_2, window_bounds = array<i64: 1, 16>}, {pipeline_mode = #tpu.pipeline_mode<synchronous>, transform_indices = @transform_3, window_bounds = array<i64: 1, 16>}, {transform_indices = @transform_4, window_bounds = array<i64: 128, 16>}]} {
    %c0_i32 = arith.constant 0 : i32
    %0 = arith.cmpi eq, %arg1, %c0_i32 : i32
    %1 = arith.extui %0 : i1 to i32
    %c0_i32_0 = arith.constant 0 : i32
    %2 = arith.cmpi ne, %1, %c0_i32_0 : i32
    scf.if %2 {
      %cst_10 = arith.constant 0.000000e+00 : f32
      %12 = vector.broadcast %cst_10 : f32 to vector<128x16xf32>
      %c0_11 = arith.constant 0 : index
      %c0_12 = arith.constant 0 : index
      %13 = vector.load %arg7[%c0_11, %c0_12] : memref<128x16xf32, #tpu.memory_space<vmem>>, vector<128x16xf32>
      tpu.vector_store %arg7[%c0_11, %c0_12], %12 {strides = array<i32>} : memref<128x16xf32, #tpu.memory_space<vmem>>, vector<128x16xf32>,
    } else {
    }
    %c0 = arith.constant 0 : index
    %c0_1 = arith.constant 0 : index
    %3 = vector.load %arg7[%c0, %c0_1] : memref<128x16xf32, #tpu.memory_space<vmem>>, vector<128x16xf32>
    %c0_2 = arith.constant 0 : index
    %c0_3 = arith.constant 0 : index
    %4 = vector.load %arg2[%c0_2, %c0_3] : memref<128x16xbf16, #tpu.memory_space<vmem>>, vector<128x16xbf16>
    %c0_4 = arith.constant 0 : index
    %c0_5 = arith.constant 0 : index
    %5 = vector.load %arg3[%c0_4, %c0_5] : memref<16x16xbf16, #tpu.memory_space<vmem>>, vector<16x16xbf16>
    %cst = arith.constant dense<0.000000e+00> : vector<128x16xf32>
    %6 = tpu.matmul %4, %5, %cst {dimension_numbers = #tpu.dot_dimension_numbers<[1], [0], [0], [1], [0, 0, 1, 1], [], []>} : vector<128x16xbf16>, vector<16x16xbf16>, vector<128x16xf32> -> vector<128x16xf32>
    %7 = arith.addf %3, %6 : vector<128x16xf32>
    %c0_6 = arith.constant 0 : index
    %c0_7 = arith.constant 0 : index
    %8 = vector.load %arg7[%c0_6, %c0_7] : memref<128x16xf32, #tpu.memory_space<vmem>>, vector<128x16xf32>
    tpu.vector_store %arg7[%c0_6, %c0_7], %7 {strides = array<i32>} : memref<128x16xf32, #tpu.memory_space<vmem>>, vector<128x16xf32>,
    %c0_i32_8 = arith.constant 0 : i32
    %9 = arith.cmpi eq, %arg1, %c0_i32_8 : i32
    %10 = arith.extui %9 : i1 to i32
    %c0_i32_9 = arith.constant 0 : i32
    %11 = arith.cmpi ne, %10, %c0_i32_9 : i32
    scf.if %11 {
      %c0_10 = arith.constant 0 : index
      %c0_11 = arith.constant 0 : index
      %12 = vector.load %arg7[%c0_10, %c0_11] : memref<128x16xf32, #tpu.memory_space<vmem>>, vector<128x16xf32>
      %c0_12 = arith.constant 0 : index
      %c0_13 = arith.constant 0 : index
      %13 = vector.load %arg4[%c0_12, %c0_13] : memref<1x16xf32, #tpu.memory_space<vmem>>, vector<1x16xf32>
      %14 = vector.broadcast %13 : vector<1x16xf32> to vector<128x16xf32>
      %15 = arith.mulf %12, %14 : vector<128x16xf32>
      %c0_14 = arith.constant 0 : index
      %c0_15 = arith.constant 0 : index
      %16 = vector.load %arg5[%c0_14, %c0_15] : memref<1x16xf32, #tpu.memory_space<vmem>>, vector<1x16xf32>
      %17 = vector.broadcast %16 : vector<1x16xf32> to vector<128x16xf32>
      %18 = arith.addf %15, %17 : vector<128x16xf32>
      %cst_16 = arith.constant 0.000000e+00 : f32
      %19 = vector.broadcast %cst_16 : f32 to vector<128x16xf32>
      %20 = arith.maximumf %18, %19 : vector<128x16xf32>
      %c0_17 = arith.constant 0 : index
      %c0_18 = arith.constant 0 : index
      %21 = vector.load %arg6[%c0_17, %c0_18] : memref<128x16xf32, #tpu.memory_space<vmem>>, vector<128x16xf32>
      tpu.vector_store %arg6[%c0_17, %c0_18], %20 {strides = array<i32>} : memref<128x16xf32, #tpu.memory_space<vmem>>, vector<128x16xf32>,
    } else {
    }
    return
  }
  func.func @transform_0(%arg0: i32, %arg1: i32) -> (i32, i32) {
    %c0_i32 = arith.constant 0 : i32
    return %arg0, %arg1 : i32, i32
  }
  func.func @transform_1(%arg0: i32, %arg1: i32) -> (i32, i32) {
    %c0_i32 = arith.constant 0 : i32
    %c0_i32_0 = arith.constant 0 : i32
    return %arg1, %c0_i32 : i32, i32
  }
  func.func @transform_2(%arg0: i32, %arg1: i32) -> (i32, i32) {
    %c0_i32 = arith.constant 0 : i32
    %c0_i32_0 = arith.constant 0 : i32
    %c0_i32_1 = arith.constant 0 : i32
    return %c0_i32, %c0_i32_0 : i32, i32
  }
  func.func @transform_3(%arg0: i32, %arg1: i32) -> (i32, i32) {
    %c0_i32 = arith.constant 0 : i32
    %c0_i32_0 = arith.constant 0 : i32
    %c0_i32_1 = arith.constant 0 : i32
    return %c0_i32, %c0_i32_0 : i32, i32
  }
  func.func @transform_4(%arg0: i32, %arg1: i32) -> (i32, i32) {
    %c0_i32 = arith.constant 0 : i32
    %c0_i32_0 = arith.constant 0 : i32
    return %arg0, %c0_i32 : i32, i32
  }
}

module attributes {stable_mosaic.version = 11 : i64} {
  func.func @_grouped_mm_bn_kernel(%arg0: i32, %arg1: i32, %arg2: memref<1x128x36xbf16, #tpu.memory_space<vmem>>, %arg3: memref<1x36x4xbf16, #tpu.memory_space<vmem>>, %arg4: memref<1x1x4xf32, #tpu.memory_space<vmem>>, %arg5: memref<1x1x4xf32, #tpu.memory_space<vmem>>, %arg6: memref<1x128x4xf32, #tpu.memory_space<vmem>>) attributes {dimension_semantics = [#tpu.dimension_semantics<parallel>, #tpu.dimension_semantics<parallel>], iteration_bounds = array<i64: 1, 4>, scalar_prefetch = 0 : i64, scratch_operands = 0 : i64, tpu.core_type = #tpu.core_type<tc>, window_params = [{transform_indices = @transform_0, window_bounds = array<i64: 1, 128, 36>}, {transform_indices = @transform_1, window_bounds = array<i64: 1, 36, 4>}, {transform_indices = @transform_2, window_bounds = array<i64: 1, 1, 4>}, {transform_indices = @transform_3, window_bounds = array<i64: 1, 1, 4>}, {transform_indices = @transform_4, window_bounds = array<i64: 1, 128, 4>}]} {
    %c0 = arith.constant 0 : index
    %c0_0 = arith.constant 0 : index
    %c0_1 = arith.constant 0 : index
    %0 = vector.load %arg2[%c0, %c0_0, %c0_1] : memref<1x128x36xbf16, #tpu.memory_space<vmem>>, vector<1x128x36xbf16>
    %1 = vector.shape_cast %0 : vector<1x128x36xbf16> to vector<128x36xbf16>
    %c0_2 = arith.constant 0 : index
    %c0_3 = arith.constant 0 : index
    %c0_4 = arith.constant 0 : index
    %2 = vector.load %arg3[%c0_2, %c0_3, %c0_4] : memref<1x36x4xbf16, #tpu.memory_space<vmem>>, vector<1x36x4xbf16>
    %3 = vector.shape_cast %2 : vector<1x36x4xbf16> to vector<36x4xbf16>
    %cst = arith.constant dense<0.000000e+00> : vector<128x4xf32>
    %4 = tpu.matmul %1, %3, %cst {dimension_numbers = #tpu.dot_dimension_numbers<[1], [0], [0], [1], [0, 0, 1, 1], [], []>} : vector<128x36xbf16>, vector<36x4xbf16>, vector<128x4xf32> -> vector<128x4xf32>
    %c0_5 = arith.constant 0 : index
    %c0_6 = arith.constant 0 : index
    %c0_7 = arith.constant 0 : index
    %5 = vector.load %arg4[%c0_5, %c0_6, %c0_7] : memref<1x1x4xf32, #tpu.memory_space<vmem>>, vector<1x1x4xf32>
    %6 = vector.shape_cast %5 : vector<1x1x4xf32> to vector<1x4xf32>
    %7 = vector.broadcast %6 : vector<1x4xf32> to vector<128x4xf32>
    %8 = arith.mulf %4, %7 : vector<128x4xf32>
    %c0_8 = arith.constant 0 : index
    %c0_9 = arith.constant 0 : index
    %c0_10 = arith.constant 0 : index
    %9 = vector.load %arg5[%c0_8, %c0_9, %c0_10] : memref<1x1x4xf32, #tpu.memory_space<vmem>>, vector<1x1x4xf32>
    %10 = vector.shape_cast %9 : vector<1x1x4xf32> to vector<1x4xf32>
    %11 = vector.broadcast %10 : vector<1x4xf32> to vector<128x4xf32>
    %12 = arith.addf %8, %11 : vector<128x4xf32>
    %cst_11 = arith.constant 0.000000e+00 : f32
    %13 = vector.broadcast %cst_11 : f32 to vector<128x4xf32>
    %14 = arith.maximumf %12, %13 : vector<128x4xf32>
    %c0_12 = arith.constant 0 : index
    %c0_13 = arith.constant 0 : index
    %c0_14 = arith.constant 0 : index
    %15 = vector.load %arg6[%c0_12, %c0_13, %c0_14] : memref<1x128x4xf32, #tpu.memory_space<vmem>>, vector<1x128x4xf32>
    %16 = vector.shape_cast %15 : vector<1x128x4xf32> to vector<128x4xf32>
    %17 = vector.shape_cast %14 : vector<128x4xf32> to vector<1x128x4xf32>
    tpu.vector_store %arg6[%c0_12, %c0_13, %c0_14], %17 {strides = array<i32>} : memref<1x128x4xf32, #tpu.memory_space<vmem>>, vector<1x128x4xf32>,
    return
  }
  func.func @transform_0(%arg0: i32, %arg1: i32) -> (i32, i32, i32) {
    %c0_i32 = arith.constant 0 : i32
    %c0_i32_0 = arith.constant 0 : i32
    return %arg1, %arg0, %c0_i32 : i32, i32, i32
  }
  func.func @transform_1(%arg0: i32, %arg1: i32) -> (i32, i32, i32) {
    %c0_i32 = arith.constant 0 : i32
    %c0_i32_0 = arith.constant 0 : i32
    %c0_i32_1 = arith.constant 0 : i32
    return %arg1, %c0_i32, %c0_i32_0 : i32, i32, i32
  }
  func.func @transform_2(%arg0: i32, %arg1: i32) -> (i32, i32, i32) {
    %c0_i32 = arith.constant 0 : i32
    %c0_i32_0 = arith.constant 0 : i32
    %c0_i32_1 = arith.constant 0 : i32
    return %arg1, %c0_i32, %c0_i32_0 : i32, i32, i32
  }
  func.func @transform_3(%arg0: i32, %arg1: i32) -> (i32, i32, i32) {
    %c0_i32 = arith.constant 0 : i32
    %c0_i32_0 = arith.constant 0 : i32
    %c0_i32_1 = arith.constant 0 : i32
    return %arg1, %c0_i32, %c0_i32_0 : i32, i32, i32
  }
  func.func @transform_4(%arg0: i32, %arg1: i32) -> (i32, i32, i32) {
    %c0_i32 = arith.constant 0 : i32
    %c0_i32_0 = arith.constant 0 : i32
    return %arg1, %arg0, %c0_i32 : i32, i32, i32
  }
}

module attributes {stable_mosaic.version = 11 : i64} {
  func.func @_mm_bn_kernel(%arg0: i32, %arg1: i32, %arg2: memref<128x16xbf16, #tpu.memory_space<vmem>>, %arg3: memref<16x32xbf16, #tpu.memory_space<vmem>>, %arg4: memref<1x32xf32, #tpu.memory_space<vmem>>, %arg5: memref<1x32xf32, #tpu.memory_space<vmem>>, %arg6: memref<128x32xf32, #tpu.memory_space<vmem>>, %arg7: memref<128x32xf32, #tpu.memory_space<vmem>>) attributes {dimension_semantics = [#tpu.dimension_semantics<parallel>, #tpu.dimension_semantics<arbitrary>], iteration_bounds = array<i64: 1, 1>, scalar_prefetch = 0 : i64, scratch_operands = 1 : i64, tpu.core_type = #tpu.core_type<tc>, window_params = [{transform_indices = @transform_0, window_bounds = array<i64: 128, 16>}, {transform_indices = @transform_1, window_bounds = array<i64: 16, 32>}, {pipeline_mode = #tpu.pipeline_mode<synchronous>, transform_indices = @transform_2, window_bounds = array<i64: 1, 32>}, {pipeline_mode = #tpu.pipeline_mode<synchronous>, transform_indices = @transform_3, window_bounds = array<i64: 1, 32>}, {transform_indices = @transform_4, window_bounds = array<i64: 128, 32>}]} {
    %c0_i32 = arith.constant 0 : i32
    %0 = arith.cmpi eq, %arg1, %c0_i32 : i32
    %1 = arith.extui %0 : i1 to i32
    %c0_i32_0 = arith.constant 0 : i32
    %2 = arith.cmpi ne, %1, %c0_i32_0 : i32
    scf.if %2 {
      %cst_10 = arith.constant 0.000000e+00 : f32
      %12 = vector.broadcast %cst_10 : f32 to vector<128x32xf32>
      %c0_11 = arith.constant 0 : index
      %c0_12 = arith.constant 0 : index
      %13 = vector.load %arg7[%c0_11, %c0_12] : memref<128x32xf32, #tpu.memory_space<vmem>>, vector<128x32xf32>
      tpu.vector_store %arg7[%c0_11, %c0_12], %12 {strides = array<i32>} : memref<128x32xf32, #tpu.memory_space<vmem>>, vector<128x32xf32>,
    } else {
    }
    %c0 = arith.constant 0 : index
    %c0_1 = arith.constant 0 : index
    %3 = vector.load %arg7[%c0, %c0_1] : memref<128x32xf32, #tpu.memory_space<vmem>>, vector<128x32xf32>
    %c0_2 = arith.constant 0 : index
    %c0_3 = arith.constant 0 : index
    %4 = vector.load %arg2[%c0_2, %c0_3] : memref<128x16xbf16, #tpu.memory_space<vmem>>, vector<128x16xbf16>
    %c0_4 = arith.constant 0 : index
    %c0_5 = arith.constant 0 : index
    %5 = vector.load %arg3[%c0_4, %c0_5] : memref<16x32xbf16, #tpu.memory_space<vmem>>, vector<16x32xbf16>
    %cst = arith.constant dense<0.000000e+00> : vector<128x32xf32>
    %6 = tpu.matmul %4, %5, %cst {dimension_numbers = #tpu.dot_dimension_numbers<[1], [0], [0], [1], [0, 0, 1, 1], [], []>} : vector<128x16xbf16>, vector<16x32xbf16>, vector<128x32xf32> -> vector<128x32xf32>
    %7 = arith.addf %3, %6 : vector<128x32xf32>
    %c0_6 = arith.constant 0 : index
    %c0_7 = arith.constant 0 : index
    %8 = vector.load %arg7[%c0_6, %c0_7] : memref<128x32xf32, #tpu.memory_space<vmem>>, vector<128x32xf32>
    tpu.vector_store %arg7[%c0_6, %c0_7], %7 {strides = array<i32>} : memref<128x32xf32, #tpu.memory_space<vmem>>, vector<128x32xf32>,
    %c0_i32_8 = arith.constant 0 : i32
    %9 = arith.cmpi eq, %arg1, %c0_i32_8 : i32
    %10 = arith.extui %9 : i1 to i32
    %c0_i32_9 = arith.constant 0 : i32
    %11 = arith.cmpi ne, %10, %c0_i32_9 : i32
    scf.if %11 {
      %c0_10 = arith.constant 0 : index
      %c0_11 = arith.constant 0 : index
      %12 = vector.load %arg7[%c0_10, %c0_11] : memref<128x32xf32, #tpu.memory_space<vmem>>, vector<128x32xf32>
      %c0_12 = arith.constant 0 : index
      %c0_13 = arith.constant 0 : index
      %13 = vector.load %arg4[%c0_12, %c0_13] : memref<1x32xf32, #tpu.memory_space<vmem>>, vector<1x32xf32>
      %14 = vector.broadcast %13 : vector<1x32xf32> to vector<128x32xf32>
      %15 = arith.mulf %12, %14 : vector<128x32xf32>
      %c0_14 = arith.constant 0 : index
      %c0_15 = arith.constant 0 : index
      %16 = vector.load %arg5[%c0_14, %c0_15] : memref<1x32xf32, #tpu.memory_space<vmem>>, vector<1x32xf32>
      %17 = vector.broadcast %16 : vector<1x32xf32> to vector<128x32xf32>
      %18 = arith.addf %15, %17 : vector<128x32xf32>
      %c0_16 = arith.constant 0 : index
      %c0_17 = arith.constant 0 : index
      %19 = vector.load %arg6[%c0_16, %c0_17] : memref<128x32xf32, #tpu.memory_space<vmem>>, vector<128x32xf32>
      tpu.vector_store %arg6[%c0_16, %c0_17], %18 {strides = array<i32>} : memref<128x32xf32, #tpu.memory_space<vmem>>, vector<128x32xf32>,
    } else {
    }
    return
  }
  func.func @transform_0(%arg0: i32, %arg1: i32) -> (i32, i32) {
    %c0_i32 = arith.constant 0 : i32
    return %arg0, %arg1 : i32, i32
  }
  func.func @transform_1(%arg0: i32, %arg1: i32) -> (i32, i32) {
    %c0_i32 = arith.constant 0 : i32
    %c0_i32_0 = arith.constant 0 : i32
    return %arg1, %c0_i32 : i32, i32
  }
  func.func @transform_2(%arg0: i32, %arg1: i32) -> (i32, i32) {
    %c0_i32 = arith.constant 0 : i32
    %c0_i32_0 = arith.constant 0 : i32
    %c0_i32_1 = arith.constant 0 : i32
    return %c0_i32, %c0_i32_0 : i32, i32
  }
  func.func @transform_3(%arg0: i32, %arg1: i32) -> (i32, i32) {
    %c0_i32 = arith.constant 0 : i32
    %c0_i32_0 = arith.constant 0 : i32
    %c0_i32_1 = arith.constant 0 : i32
    return %c0_i32, %c0_i32_0 : i32, i32
  }
  func.func @transform_4(%arg0: i32, %arg1: i32) -> (i32, i32) {
    %c0_i32 = arith.constant 0 : i32
    %c0_i32_0 = arith.constant 0 : i32
    return %arg0, %c0_i32 : i32, i32
  }
}

module attributes {stable_mosaic.version = 11 : i64} {
  func.func @_mm_bn_kernel(%arg0: i32, %arg1: i32, %arg2: memref<128x32xbf16, #tpu.memory_space<vmem>>, %arg3: memref<32x16xbf16, #tpu.memory_space<vmem>>, %arg4: memref<1x16xf32, #tpu.memory_space<vmem>>, %arg5: memref<1x16xf32, #tpu.memory_space<vmem>>, %arg6: memref<128x16xf32, #tpu.memory_space<vmem>>, %arg7: memref<128x16xf32, #tpu.memory_space<vmem>>) attributes {dimension_semantics = [#tpu.dimension_semantics<parallel>, #tpu.dimension_semantics<arbitrary>], iteration_bounds = array<i64: 1, 1>, scalar_prefetch = 0 : i64, scratch_operands = 1 : i64, tpu.core_type = #tpu.core_type<tc>, window_params = [{transform_indices = @transform_0, window_bounds = array<i64: 128, 32>}, {transform_indices = @transform_1, window_bounds = array<i64: 32, 16>}, {pipeline_mode = #tpu.pipeline_mode<synchronous>, transform_indices = @transform_2, window_bounds = array<i64: 1, 16>}, {pipeline_mode = #tpu.pipeline_mode<synchronous>, transform_indices = @transform_3, window_bounds = array<i64: 1, 16>}, {transform_indices = @transform_4, window_bounds = array<i64: 128, 16>}]} {
    %c0_i32 = arith.constant 0 : i32
    %0 = arith.cmpi eq, %arg1, %c0_i32 : i32
    %1 = arith.extui %0 : i1 to i32
    %c0_i32_0 = arith.constant 0 : i32
    %2 = arith.cmpi ne, %1, %c0_i32_0 : i32
    scf.if %2 {
      %cst_10 = arith.constant 0.000000e+00 : f32
      %12 = vector.broadcast %cst_10 : f32 to vector<128x16xf32>
      %c0_11 = arith.constant 0 : index
      %c0_12 = arith.constant 0 : index
      %13 = vector.load %arg7[%c0_11, %c0_12] : memref<128x16xf32, #tpu.memory_space<vmem>>, vector<128x16xf32>
      tpu.vector_store %arg7[%c0_11, %c0_12], %12 {strides = array<i32>} : memref<128x16xf32, #tpu.memory_space<vmem>>, vector<128x16xf32>,
    } else {
    }
    %c0 = arith.constant 0 : index
    %c0_1 = arith.constant 0 : index
    %3 = vector.load %arg7[%c0, %c0_1] : memref<128x16xf32, #tpu.memory_space<vmem>>, vector<128x16xf32>
    %c0_2 = arith.constant 0 : index
    %c0_3 = arith.constant 0 : index
    %4 = vector.load %arg2[%c0_2, %c0_3] : memref<128x32xbf16, #tpu.memory_space<vmem>>, vector<128x32xbf16>
    %c0_4 = arith.constant 0 : index
    %c0_5 = arith.constant 0 : index
    %5 = vector.load %arg3[%c0_4, %c0_5] : memref<32x16xbf16, #tpu.memory_space<vmem>>, vector<32x16xbf16>
    %cst = arith.constant dense<0.000000e+00> : vector<128x16xf32>
    %6 = tpu.matmul %4, %5, %cst {dimension_numbers = #tpu.dot_dimension_numbers<[1], [0], [0], [1], [0, 0, 1, 1], [], []>} : vector<128x32xbf16>, vector<32x16xbf16>, vector<128x16xf32> -> vector<128x16xf32>
    %7 = arith.addf %3, %6 : vector<128x16xf32>
    %c0_6 = arith.constant 0 : index
    %c0_7 = arith.constant 0 : index
    %8 = vector.load %arg7[%c0_6, %c0_7] : memref<128x16xf32, #tpu.memory_space<vmem>>, vector<128x16xf32>
    tpu.vector_store %arg7[%c0_6, %c0_7], %7 {strides = array<i32>} : memref<128x16xf32, #tpu.memory_space<vmem>>, vector<128x16xf32>,
    %c0_i32_8 = arith.constant 0 : i32
    %9 = arith.cmpi eq, %arg1, %c0_i32_8 : i32
    %10 = arith.extui %9 : i1 to i32
    %c0_i32_9 = arith.constant 0 : i32
    %11 = arith.cmpi ne, %10, %c0_i32_9 : i32
    scf.if %11 {
      %c0_10 = arith.constant 0 : index
      %c0_11 = arith.constant 0 : index
      %12 = vector.load %arg7[%c0_10, %c0_11] : memref<128x16xf32, #tpu.memory_space<vmem>>, vector<128x16xf32>
      %c0_12 = arith.constant 0 : index
      %c0_13 = arith.constant 0 : index
      %13 = vector.load %arg4[%c0_12, %c0_13] : memref<1x16xf32, #tpu.memory_space<vmem>>, vector<1x16xf32>
      %14 = vector.broadcast %13 : vector<1x16xf32> to vector<128x16xf32>
      %15 = arith.mulf %12, %14 : vector<128x16xf32>
      %c0_14 = arith.constant 0 : index
      %c0_15 = arith.constant 0 : index
      %16 = vector.load %arg5[%c0_14, %c0_15] : memref<1x16xf32, #tpu.memory_space<vmem>>, vector<1x16xf32>
      %17 = vector.broadcast %16 : vector<1x16xf32> to vector<128x16xf32>
      %18 = arith.addf %15, %17 : vector<128x16xf32>
      %cst_16 = arith.constant 0.000000e+00 : f32
      %19 = vector.broadcast %cst_16 : f32 to vector<128x16xf32>
      %20 = arith.maximumf %18, %19 : vector<128x16xf32>
      %c0_17 = arith.constant 0 : index
      %c0_18 = arith.constant 0 : index
      %21 = vector.load %arg6[%c0_17, %c0_18] : memref<128x16xf32, #tpu.memory_space<vmem>>, vector<128x16xf32>
      tpu.vector_store %arg6[%c0_17, %c0_18], %20 {strides = array<i32>} : memref<128x16xf32, #tpu.memory_space<vmem>>, vector<128x16xf32>,
    } else {
    }
    return
  }
  func.func @transform_0(%arg0: i32, %arg1: i32) -> (i32, i32) {
    %c0_i32 = arith.constant 0 : i32
    return %arg0, %arg1 : i32, i32
  }
  func.func @transform_1(%arg0: i32, %arg1: i32) -> (i32, i32) {
    %c0_i32 = arith.constant 0 : i32
    %c0_i32_0 = arith.constant 0 : i32
    return %arg1, %c0_i32 : i32, i32
  }
  func.func @transform_2(%arg0: i32, %arg1: i32) -> (i32, i32) {
    %c0_i32 = arith.constant 0 : i32
    %c0_i32_0 = arith.constant 0 : i32
    %c0_i32_1 = arith.constant 0 : i32
    return %c0_i32, %c0_i32_0 : i32, i32
  }
  func.func @transform_3(%arg0: i32, %arg1: i32) -> (i32, i32) {
    %c0_i32 = arith.constant 0 : i32
    %c0_i32_0 = arith.constant 0 : i32
    %c0_i32_1 = arith.constant 0 : i32
    return %c0_i32, %c0_i32_0 : i32, i32
  }
  func.func @transform_4(%arg0: i32, %arg1: i32) -> (i32, i32) {
    %c0_i32 = arith.constant 0 : i32
    %c0_i32_0 = arith.constant 0 : i32
    return %arg0, %c0_i32 : i32, i32
  }
}

module attributes {stable_mosaic.version = 11 : i64} {
  func.func @_mm_bn_kernel(%arg0: i32, %arg1: i32, %arg2: memref<128x16xbf16, #tpu.memory_space<vmem>>, %arg3: memref<16x32xbf16, #tpu.memory_space<vmem>>, %arg4: memref<1x32xf32, #tpu.memory_space<vmem>>, %arg5: memref<1x32xf32, #tpu.memory_space<vmem>>, %arg6: memref<128x32xf32, #tpu.memory_space<vmem>>, %arg7: memref<128x32xf32, #tpu.memory_space<vmem>>, %arg8: memref<128x32xf32, #tpu.memory_space<vmem>>) attributes {dimension_semantics = [#tpu.dimension_semantics<parallel>, #tpu.dimension_semantics<arbitrary>], iteration_bounds = array<i64: 1, 1>, scalar_prefetch = 0 : i64, scratch_operands = 1 : i64, tpu.core_type = #tpu.core_type<tc>, window_params = [{transform_indices = @transform_0, window_bounds = array<i64: 128, 16>}, {transform_indices = @transform_1, window_bounds = array<i64: 16, 32>}, {pipeline_mode = #tpu.pipeline_mode<synchronous>, transform_indices = @transform_2, window_bounds = array<i64: 1, 32>}, {pipeline_mode = #tpu.pipeline_mode<synchronous>, transform_indices = @transform_3, window_bounds = array<i64: 1, 32>}, {transform_indices = @transform_4, window_bounds = array<i64: 128, 32>}, {transform_indices = @transform_5, window_bounds = array<i64: 128, 32>}]} {
    %c0_i32 = arith.constant 0 : i32
    %0 = arith.cmpi eq, %arg1, %c0_i32 : i32
    %1 = arith.extui %0 : i1 to i32
    %c0_i32_0 = arith.constant 0 : i32
    %2 = arith.cmpi ne, %1, %c0_i32_0 : i32
    scf.if %2 {
      %cst_10 = arith.constant 0.000000e+00 : f32
      %12 = vector.broadcast %cst_10 : f32 to vector<128x32xf32>
      %c0_11 = arith.constant 0 : index
      %c0_12 = arith.constant 0 : index
      %13 = vector.load %arg8[%c0_11, %c0_12] : memref<128x32xf32, #tpu.memory_space<vmem>>, vector<128x32xf32>
      tpu.vector_store %arg8[%c0_11, %c0_12], %12 {strides = array<i32>} : memref<128x32xf32, #tpu.memory_space<vmem>>, vector<128x32xf32>,
    } else {
    }
    %c0 = arith.constant 0 : index
    %c0_1 = arith.constant 0 : index
    %3 = vector.load %arg8[%c0, %c0_1] : memref<128x32xf32, #tpu.memory_space<vmem>>, vector<128x32xf32>
    %c0_2 = arith.constant 0 : index
    %c0_3 = arith.constant 0 : index
    %4 = vector.load %arg2[%c0_2, %c0_3] : memref<128x16xbf16, #tpu.memory_space<vmem>>, vector<128x16xbf16>
    %c0_4 = arith.constant 0 : index
    %c0_5 = arith.constant 0 : index
    %5 = vector.load %arg3[%c0_4, %c0_5] : memref<16x32xbf16, #tpu.memory_space<vmem>>, vector<16x32xbf16>
    %cst = arith.constant dense<0.000000e+00> : vector<128x32xf32>
    %6 = tpu.matmul %4, %5, %cst {dimension_numbers = #tpu.dot_dimension_numbers<[1], [0], [0], [1], [0, 0, 1, 1], [], []>} : vector<128x16xbf16>, vector<16x32xbf16>, vector<128x32xf32> -> vector<128x32xf32>
    %7 = arith.addf %3, %6 : vector<128x32xf32>
    %c0_6 = arith.constant 0 : index
    %c0_7 = arith.constant 0 : index
    %8 = vector.load %arg8[%c0_6, %c0_7] : memref<128x32xf32, #tpu.memory_space<vmem>>, vector<128x32xf32>
    tpu.vector_store %arg8[%c0_6, %c0_7], %7 {strides = array<i32>} : memref<128x32xf32, #tpu.memory_space<vmem>>, vector<128x32xf32>,
    %c0_i32_8 = arith.constant 0 : i32
    %9 = arith.cmpi eq, %arg1, %c0_i32_8 : i32
    %10 = arith.extui %9 : i1 to i32
    %c0_i32_9 = arith.constant 0 : i32
    %11 = arith.cmpi ne, %10, %c0_i32_9 : i32
    scf.if %11 {
      %c0_10 = arith.constant 0 : index
      %c0_11 = arith.constant 0 : index
      %12 = vector.load %arg8[%c0_10, %c0_11] : memref<128x32xf32, #tpu.memory_space<vmem>>, vector<128x32xf32>
      %c0_12 = arith.constant 0 : index
      %c0_13 = arith.constant 0 : index
      %13 = vector.load %arg4[%c0_12, %c0_13] : memref<1x32xf32, #tpu.memory_space<vmem>>, vector<1x32xf32>
      %14 = vector.broadcast %13 : vector<1x32xf32> to vector<128x32xf32>
      %15 = arith.mulf %12, %14 : vector<128x32xf32>
      %c0_14 = arith.constant 0 : index
      %c0_15 = arith.constant 0 : index
      %16 = vector.load %arg5[%c0_14, %c0_15] : memref<1x32xf32, #tpu.memory_space<vmem>>, vector<1x32xf32>
      %17 = vector.broadcast %16 : vector<1x32xf32> to vector<128x32xf32>
      %18 = arith.addf %15, %17 : vector<128x32xf32>
      %c0_16 = arith.constant 0 : index
      %c0_17 = arith.constant 0 : index
      %19 = vector.load %arg6[%c0_16, %c0_17] : memref<128x32xf32, #tpu.memory_space<vmem>>, vector<128x32xf32>
      %20 = arith.addf %18, %19 : vector<128x32xf32>
      %cst_18 = arith.constant 0.000000e+00 : f32
      %21 = vector.broadcast %cst_18 : f32 to vector<128x32xf32>
      %22 = arith.maximumf %20, %21 : vector<128x32xf32>
      %c0_19 = arith.constant 0 : index
      %c0_20 = arith.constant 0 : index
      %23 = vector.load %arg7[%c0_19, %c0_20] : memref<128x32xf32, #tpu.memory_space<vmem>>, vector<128x32xf32>
      tpu.vector_store %arg7[%c0_19, %c0_20], %22 {strides = array<i32>} : memref<128x32xf32, #tpu.memory_space<vmem>>, vector<128x32xf32>,
    } else {
    }
    return
  }
  func.func @transform_0(%arg0: i32, %arg1: i32) -> (i32, i32) {
    %c0_i32 = arith.constant 0 : i32
    return %arg0, %arg1 : i32, i32
  }
  func.func @transform_1(%arg0: i32, %arg1: i32) -> (i32, i32) {
    %c0_i32 = arith.constant 0 : i32
    %c0_i32_0 = arith.constant 0 : i32
    return %arg1, %c0_i32 : i32, i32
  }
  func.func @transform_2(%arg0: i32, %arg1: i32) -> (i32, i32) {
    %c0_i32 = arith.constant 0 : i32
    %c0_i32_0 = arith.constant 0 : i32
    %c0_i32_1 = arith.constant 0 : i32
    return %c0_i32, %c0_i32_0 : i32, i32
  }
  func.func @transform_3(%arg0: i32, %arg1: i32) -> (i32, i32) {
    %c0_i32 = arith.constant 0 : i32
    %c0_i32_0 = arith.constant 0 : i32
    %c0_i32_1 = arith.constant 0 : i32
    return %c0_i32, %c0_i32_0 : i32, i32
  }
  func.func @transform_4(%arg0: i32, %arg1: i32) -> (i32, i32) {
    %c0_i32 = arith.constant 0 : i32
    %c0_i32_0 = arith.constant 0 : i32
    return %arg0, %c0_i32 : i32, i32
  }
  func.func @transform_5(%arg0: i32, %arg1: i32) -> (i32, i32) {
    %c0_i32 = arith.constant 0 : i32
    %c0_i32_0 = arith.constant 0 : i32
    return %arg0, %c0_i32 : i32, i32
  }
}

module attributes {stable_mosaic.version = 11 : i64} {
  func.func @_gap_fc_kernel(%arg0: memref<2x64x32xf32, #tpu.memory_space<vmem>>, %arg1: memref<32x6xf32, #tpu.memory_space<vmem>>, %arg2: memref<1x6xf32, #tpu.memory_space<vmem>>, %arg3: memref<2x6xf32, #tpu.memory_space<vmem>>) attributes {dimension_semantics = [], scalar_prefetch = 0 : i64, scratch_operands = 0 : i64, tpu.core_type = #tpu.core_type<tc>} {
    %c0 = arith.constant 0 : index
    %c0_0 = arith.constant 0 : index
    %c0_1 = arith.constant 0 : index
    %0 = vector.load %arg0[%c0, %c0_0, %c0_1] : memref<2x64x32xf32, #tpu.memory_space<vmem>>, vector<2x64x32xf32>
    %cst = arith.constant dense<0.000000e+00> : vector<2x32xf32>
    %1 = vector.multi_reduction <add>, %0, %cst [1] : vector<2x64x32xf32> to vector<2x32xf32>
    %cst_2 = arith.constant 6.400000e+01 : f32
    %2 = vector.broadcast %cst_2 : f32 to vector<2x32xf32>
    %3 = arith.divf %1, %2 : vector<2x32xf32>
    %c0_3 = arith.constant 0 : index
    %c0_4 = arith.constant 0 : index
    %4 = vector.load %arg1[%c0_3, %c0_4] : memref<32x6xf32, #tpu.memory_space<vmem>>, vector<32x6xf32>
    %cst_5 = arith.constant dense<0.000000e+00> : vector<2x6xf32>
    %5 = tpu.matmul %3, %4, %cst_5 {dimension_numbers = #tpu.dot_dimension_numbers<[1], [0], [0], [1], [0, 0, 1, 1], [], []>} : vector<2x32xf32>, vector<32x6xf32>, vector<2x6xf32> -> vector<2x6xf32>
    %c0_6 = arith.constant 0 : index
    %c0_7 = arith.constant 0 : index
    %6 = vector.load %arg2[%c0_6, %c0_7] : memref<1x6xf32, #tpu.memory_space<vmem>>, vector<1x6xf32>
    %7 = vector.broadcast %6 : vector<1x6xf32> to vector<2x6xf32>
    %8 = arith.addf %5, %7 : vector<2x6xf32>
    %c0_8 = arith.constant 0 : index
    %c0_9 = arith.constant 0 : index
    %9 = vector.load %arg3[%c0_8, %c0_9] : memref<2x6xf32, #tpu.memory_space<vmem>>, vector<2x6xf32>
    tpu.vector_store %arg3[%c0_8, %c0_9], %8 {strides = array<i32>} : memref<2x6xf32, #tpu.memory_space<vmem>>, vector<2x6xf32>,
    return
  }
}

</mosaic_0001>

<llo_original>
// kernel: _lambda_.10
$region0: #{_lambda_.10}
  #allocation0 [shape = 'u32[]', space=smem, size = 0x4, offset = 0x4, fixed_abs, tag = 'smem constant byte address 0x4 - core index']
  #allocation1 [shape = 'u32[144,128]{1,0:T(1,128)}', space=vmem, size = 0x12000, scoped, tag = 'internal scratch']
  #allocation2 [shape = 'f32[128,16]{1,0:T(8,128)}', space=vmem, size = 0x10000, scoped, tag = 'scratch operand']
  %s0 = inlined_call_operand.vmem [shape: bf16[512,256], index: 0, kind: input, shape index: {}]
  %s1 = inlined_call_operand.vmem [shape: bf16[256,16], index: 1, kind: input, shape index: {}]
  %s2 = inlined_call_operand.vmem [shape: f32[1,16], index: 2, kind: input, shape index: {}]
  %s3 = inlined_call_operand.vmem [shape: f32[1,16], index: 3, kind: input, shape index: {}]
  %s4 = inlined_call_operand.vmem [shape: f32[512,16], index: 4, kind: output, shape index: {}]
  %s5 = sld [smem:[#allocation0]]
  $region98: #{_lambda_.10} parent=0
    _
  %s7 = ssub.s32 1, %s5
  %s8 = scalar_select 0, %s7, %s5
  $region1: #{_lambda_.10} parent=0
    #allocation3 [shape = 'u8[65536]{0}', space=vmem, size = 0x10000, scoped, tag = 'input window, operand 0']
    loop: start=0, step=1, limit=10
    $region2: #{_lambda_.10} parent=1 // loop_pre_header
      _
    $region3: #{_lambda_.10} parent=1 // loop_header
      %s10 = sphi 0, %s14
      %p11 = scmp.ge.s32.totalorder %s10, 10
      %s17 = sphi 0, %s29
      %s18 = sphi 0, %s25
      %s19 = sphi 0, %s17
      %s20 = sphi 0, %s18
      %s21 = sphi 0, %s19
      %s22 = sphi 0, %s20
      %s34 = sphi 0, %s36
      %s37 = sphi 0, %s34
      %s38 = sphi 0, %s37
      %s54 = sphi 0, %s38
      %s60 = sphi 0, %s62
      %s63 = sphi 0, %s60
      %s64 = sphi 0, %s63
      %s80 = sphi 0, %s64
      %s84 = sphi 0, %s84
      %s86 = sphi 0, %s84
      %s87 = sphi 0, %s86
      %s101 = sphi 0, %s87
      %s105 = sphi 0, %s105
      %s107 = sphi 0, %s105
      %s108 = sphi 0, %s107
      %s122 = sphi 0, %s108
      %s128 = sphi 0, %s130
      %s131 = sphi 0, %s128
      %s132 = sphi 0, %s131
      %s148 = sphi 0, %s132
    $region4: #{_lambda_.10} parent=1 // loop_header_branch
      %13 = sbr.rel (%p11) target = $region8
    $region5: #{_lambda_.10} parent=1 // loop_body
      %s15 = ssub.s32 %s10, 1
      %s16 = ssub.s32 %s10, 2
      %s23 = sadd.s32 1, %s18
      %p24 = scmp.ge.s32.totalorder %s23, 2
      %s25 = scalar_select %p24, 0, %s23
      %s26 = sadd.s32 1, %s17
      %s27 = scalar_select %p24, %s26, %s17
      %p28 = scmp.ge.s32.totalorder %s27, 4
      %s29 = scalar_select %p28, 0, %s27
      %s30 = ssub.s32 %s17, %s29
      %s31 = ssub.s32 %s18, %s25
      %s32 = sor.u32 %s30, %s31
      %p33 = scmp.eq.s32.totalorder %s32, 0
      %s35 = sadd.s32 %s34, 1
      %s36 = scalar_select %p33, %s34, %s35
      %p39 = pneg %p33
      %p40 = scmp.eq.s32.totalorder %s10, 7
      %p41 = por %p39, %p40
      %p42 = scmp.ne.s32.totalorder %s34, %s37
      %p43 = scmp.eq.s32.totalorder %s10, 0
      %p44 = por %p42, %p43
      %p45 = scmp.ne.s32.totalorder %s34, %s37
      %p46 = scmp.eq.s32.totalorder %s15, 7
      %p47 = por %p45, %p46
      %p48 = scmp.ne.s32.totalorder %s37, %s38
      %p49 = scmp.eq.s32.totalorder %s15, 0
      %p50 = por %p48, %p49
      %p51 = scmp.ne.s32.totalorder %s37, %s38
      %p52 = scmp.eq.s32.totalorder %s16, 7
      %p53 = por %p51, %p52
      %p55 = scmp.ne.s32.totalorder %s38, %s54
      %p56 = scmp.eq.s32.totalorder %s16, 0
      %p57 = por %p55, %p56
      %s58 = ssub.s32 %s18, %s25
      %p59 = scmp.eq.s32.totalorder %s58, 0
      %s61 = sadd.s32 %s60, 1
      %s62 = scalar_select %p59, %s60, %s61
      %p65 = pneg %p59
      %p66 = scmp.eq.s32.totalorder %s10, 7
      %p67 = por %p65, %p66
      %p68 = scmp.ne.s32.totalorder %s60, %s63
      %p69 = scmp.eq.s32.totalorder %s10, 0
      %p70 = por %p68, %p69
      %p71 = scmp.ne.s32.totalorder %s60, %s63
      %p72 = scmp.eq.s32.totalorder %s15, 7
      %p73 = por %p71, %p72
      %p74 = scmp.ne.s32.totalorder %s63, %s64
      %p75 = scmp.eq.s32.totalorder %s15, 0
      %p76 = por %p74, %p75
      %p77 = scmp.ne.s32.totalorder %s63, %s64
      %p78 = scmp.eq.s32.totalorder %s16, 7
      %p79 = por %p77, %p78
      %p81 = scmp.ne.s32.totalorder %s64, %s80
      %p82 = scmp.eq.s32.totalorder %s16, 0
      %p83 = por %p81, %p82
      %s85 = sadd.s32 %s84, 1
      %p88 = scmp.eq.s32.totalorder %s10, 7
      %p89 = scmp.ne.s32.totalorder %s84, %s86
      %p90 = scmp.eq.s32.totalorder %s10, 0
      %p91 = por %p89, %p90
      %p92 = scmp.ne.s32.totalorder %s84, %s86
      %p93 = scmp.eq.s32.totalorder %s15, 7
      %p94 = por %p92, %p93
      %p95 = scmp.ne.s32.totalorder %s86, %s87
      %p96 = scmp.eq.s32.totalorder %s15, 0
      %p97 = por %p95, %p96
      %p98 = scmp.ne.s32.totalorder %s86, %s87
      %p99 = scmp.eq.s32.totalorder %s16, 7
      %p100 = por %p98, %p99
      %p102 = scmp.ne.s32.totalorder %s87, %s101
      %p103 = scmp.eq.s32.totalorder %s16, 0
      %p104 = por %p102, %p103
      %s106 = sadd.s32 %s105, 1
      %p109 = scmp.eq.s32.totalorder %s10, 7
      %p110 = scmp.ne.s32.totalorder %s105, %s107
      %p111 = scmp.eq.s32.totalorder %s10, 0
      %p112 = por %p110, %p111
      %p113 = scmp.ne.s32.totalorder %s105, %s107
      %p114 = scmp.eq.s32.totalorder %s15, 7
      %p115 = por %p113, %p114
      %p116 = scmp.ne.s32.totalorder %s107, %s108
      %p117 = scmp.eq.s32.totalorder %s15, 0
      %p118 = por %p116, %p117
      %p119 = scmp.ne.s32.totalorder %s107, %s108
      %p120 = scmp.eq.s32.totalorder %s16, 7
      %p121 = por %p119, %p120
      %p123 = scmp.ne.s32.totalorder %s108, %s122
      %p124 = scmp.eq.s32.totalorder %s16, 0
      %p125 = por %p123, %p124
      %s126 = ssub.s32 %s17, %s29
      %p127 = scmp.eq.s32.totalorder %s126, 0
      %s129 = sadd.s32 %s128, 1
      %s130 = scalar_select %p127, %s128, %s129
      %p133 = pneg %p127
      %p134 = scmp.eq.s32.totalorder %s10, 7
      %p135 = por %p133, %p134
      %p136 = scmp.ne.s32.totalorder %s128, %s131
      %p137 = scmp.eq.s32.totalorder %s10, 0
      %p138 = por %p136, %p137
      %p139 = scmp.ne.s32.totalorder %s128, %s131
      %p140 = scmp.eq.s32.totalorder %s15, 7
      %p141 = por %p139, %p140
      %p142 = scmp.ne.s32.totalorder %s131, %s132
      %p143 = scmp.eq.s32.totalorder %s15, 0
      %p144 = por %p142, %p143
      %p145 = scmp.ne.s32.totalorder %s131, %s132
      %p146 = scmp.eq.s32.totalorder %s16, 7
      %p147 = por %p145, %p146
      %p149 = scmp.ne.s32.totalorder %s132, %s148
      %p150 = scmp.eq.s32.totalorder %s16, 0
      %p151 = por %p149, %p150
      %p152 = scmp.le.s32.totalorder 1, %s10
      %p153 = scmp.lt.s32.totalorder %s10, 9
      %p154 = pnand %p152, %p153
      %p155 = pneg %p154
      // Predicated region
      $region9: #{_lambda_.10} parent=5 // pred_check
        _
      $region10: #{_lambda_.10} parent=5 // pred_check_branch
        %157 = sbr.rel (%p154) target = $region12
      $region11: #{_lambda_.10} parent=5 // pred_region
        %s158 = ssub.s32 %s10, 1
        // Predicated region
        $region13: #{_lambda_.10} parent=11 // pred_check
          %p159 = pneg %p97
        $region14: #{_lambda_.10} parent=11 // pred_check_branch
          %161 = sbr.rel (%p159) target = $region16
        $region15: #{_lambda_.10} parent=11 // pred_region
          _
        $region16: #{_lambda_.10} parent=11 // pred_fallthru
          _
        // Predicated region
        $region17: #{_lambda_.10} parent=11 // pred_check
          %p162 = pneg %p118
        $region18: #{_lambda_.10} parent=11 // pred_check_branch
          %164 = sbr.rel (%p162) target = $region20
        $region19: #{_lambda_.10} parent=11 // pred_region
          _
        $region20: #{_lambda_.10} parent=11 // pred_fallthru
          _
      $region12: #{_lambda_.10} parent=5 // pred_fallthru
        _
      %p165 = scmp.lt.s32.totalorder %s10, 8
      // Predicated region
      $region21: #{_lambda_.10} parent=5 // pred_check
        %p166 = pneg %p165
      $region22: #{_lambda_.10} parent=5 // pred_check_branch
        %168 = sbr.rel (%p166) target = $region24
      $region23: #{_lambda_.10} parent=5 // pred_region
        // Predicated region
        $region25: #{_lambda_.10} parent=23 // pred_check
          %p169 = pneg %p44
        $region26: #{_lambda_.10} parent=23 // pred_check_branch
          %171 = sbr.rel (%p169) target = $region28
        $region27: #{_lambda_.10} parent=23 // pred_region
          %s172 = sand.u32 %s34, 1
          %s173 = sand.u32 %s34, 1
          %s174 = smul.addr %s173, 64
          %s175 = scalar_lea.vmem [#allocation3], %s174
          %s176 = smul.u32 16, %s17
          %s177 = smul.addr %s176, 2
          %s178 = sadd.s32 %s18, %s177
          %s179 = smul.addr %s178, 4
          %s180 = scalar_lea.vmem %s0, %s179
          // Predicated region
          $region29: #{_lambda_.10} parent=27 // pred_check
            _
          $region30: #{_lambda_.10} parent=27 // pred_check_branch
            %182 = sbr.rel (0) target = $region32
          $region31: #{_lambda_.10} parent=27 // pred_region
            // Predicated region
            $region33: #{_lambda_.10} parent=31 // pred_check
              _
            $region34: #{_lambda_.10} parent=31 // pred_check_branch
              %184 = sbr.rel target = $region36
            $region35: #{_lambda_.10} parent=31 // pred_region
              // Predicated region
              $region48: #{_lambda_.10} parent=35 // pred_check
                _
              $region49: #{_lambda_.10} parent=35 // pred_check_branch
                %229 = sbr.rel (0) target = $region51
              $region50: #{_lambda_.10} parent=35 // pred_region
                loop: start=0, step=1, limit=1
                $region52: #{_lambda_.10} parent=50 // loop_pre_header
                  _
                $region53: #{_lambda_.10} parent=50 // loop_header
                  %s231 = sphi 0, %s235
                  %p232 = scmp.ge.s32.totalorder %s231, 1
                  %s236 = sphi %s180, %s180
                  %s237 = sphi %s175, %s175
                $region54: #{_lambda_.10} parent=50 // loop_header_branch
                  %234 = sbr.rel (%p232) target = $region58
                $region55: #{_lambda_.10} parent=50 // loop_body
                  _
                $region56: #{_lambda_.10} parent=50 // loop_footer
                  %s235 = sadd.s32 1, %s231
                $region57: #{_lambda_.10} parent=50 // loop_footer_branch
                  %230 = sbr.rel target = $region53
                $region58: #{_lambda_.10} parent=50 // loop_exit
                  _
                loop: start=0, step=1, limit=1
                $region59: #{_lambda_.10} parent=50 // loop_pre_header
                  _
                $region60: #{_lambda_.10} parent=50 // loop_header
                  %s240 = sphi 0, %s244
                  %p241 = scmp.ge.s32.totalorder %s240, 1
                  %s245 = sphi %s180, %s180
                  %s246 = sphi %s175, %s175
                $region61: #{_lambda_.10} parent=50 // loop_header_branch
                  %243 = sbr.rel (%p241) target = $region65
                $region62: #{_lambda_.10} parent=50 // loop_body
                  %v247 = vld [vmem:[%s245] sm:$0xf]
                  %248 = vst [vmem:[%s246] sm:$0xf] %v247
                  %v249 = vld [vmem:[%s245 + $0x8] sm:$0xf]
                  %250 = vst [vmem:[%s246 + $0x4] sm:$0xf] %v249
                  %v251 = vld [vmem:[%s245 + $0x10] sm:$0xf]
                  %252 = vst [vmem:[%s246 + $0x8] sm:$0xf] %v251
                  %v253 = vld [vmem:[%s245 + $0x18] sm:$0xf]
                  %254 = vst [vmem:[%s246 + $0xc] sm:$0xf] %v253
                  %v255 = vld [vmem:[%s245 + $0x20] sm:$0xf]
                  %256 = vst [vmem:[%s246 + $0x10] sm:$0xf] %v255
                  %v257 = vld [vmem:[%s245 + $0x28] sm:$0xf]
                  %258 = vst [vmem:[%s246 + $0x14] sm:$0xf] %v257
                  %v259 = vld [vmem:[%s245 + $0x30] sm:$0xf]
                  %260 = vst [vmem:[%s246 + $0x18] sm:$0xf] %v259
                  %v261 = vld [vmem:[%s245 + $0x38] sm:$0xf]
                  %262 = vst [vmem:[%s246 + $0x1c] sm:$0xf] %v261
                  %v263 = vld [vmem:[%s245 + $0x40] sm:$0xf]
                  %264 = vst [vmem:[%s246 + $0x20] sm:$0xf] %v263
                  %v265 = vld [vmem:[%s245 + $0x48] sm:$0xf]
                  %266 = vst [vmem:[%s246 + $0x24] sm:$0xf] %v265
                  %v267 = vld [vmem:[%s245 + $0x50] sm:$0xf]
                  %268 = vst [vmem:[%s246 + $0x28] sm:$0xf] %v267
                  %v269 = vld [vmem:[%s245 + $0x58] sm:$0xf]
                  %270 = vst [vmem:[%s246 + $0x2c] sm:$0xf] %v269
                  %v271 = vld [vmem:[%s245 + $0x60] sm:$0xf]
                  %272 = vst [vmem:[%s246 + $0x30] sm:$0xf] %v271
                  %v273 = vld [vmem:[%s245 + $0x68] sm:$0xf]
                  %274 = vst [vmem:[%s246 + $0x34] sm:$0xf] %v273
                  %v275 = vld [vmem:[%s245 + $0x70] sm:$0xf]
                  %276 = vst [vmem:[%s246 + $0x38] sm:$0xf] %v275
                  %v277 = vld [vmem:[%s245 + $0x78] sm:$0xf]
                  %278 = vst [vmem:[%s246 + $0x3c] sm:$0xf] %v277
                $region63: #{_lambda_.10} parent=50 // loop_footer
                  %s244 = sadd.s32 1, %s240
                $region64: #{_lambda_.10} parent=50 // loop_footer_branch
                  %239 = sbr.rel target = $region60
                $region65: #{_lambda_.10} parent=50 // loop_exit
                  _
              $region51: #{_lambda_.10} parent=35 // pred_fallthru
                _
            $region36: #{_lambda_.10} parent=31 // pred_fallthru
              _
            // Predicated region
            $region37: #{_lambda_.10} parent=31 // pred_check
              _
            $region38: #{_lambda_.10} parent=31 // pred_check_branch
              %186 = sbr.rel (0) target = $region40
            $region39: #{_lambda_.10} parent=31 // pred_region
              loop: start=0, step=1, limit=1
              $region41: #{_lambda_.10} parent=39 // loop_pre_header
                _
              $region42: #{_lambda_.10} parent=39 // loop_header
                %s189 = sphi 0, %s193
                %p190 = scmp.ge.s32.totalorder %s189, 1
                %s194 = sphi %s180, %s180
                %s195 = sphi %s175, %s175
              $region43: #{_lambda_.10} parent=39 // loop_header_branch
                %192 = sbr.rel (%p190) target = $region47
              $region44: #{_lambda_.10} parent=39 // loop_body
                %v196 = vld [vmem:[%s194] sm:$0xf]
                %197 = vst [vmem:[%s195] sm:$0xf] %v196
                %v198 = vld [vmem:[%s194 + $0x8] sm:$0xf]
                %199 = vst [vmem:[%s195 + $0x4] sm:$0xf] %v198
                %v200 = vld [vmem:[%s194 + $0x10] sm:$0xf]
                %201 = vst [vmem:[%s195 + $0x8] sm:$0xf] %v200
                %v202 = vld [vmem:[%s194 + $0x18] sm:$0xf]
                %203 = vst [vmem:[%s195 + $0xc] sm:$0xf] %v202
                %v204 = vld [vmem:[%s194 + $0x20] sm:$0xf]
                %205 = vst [vmem:[%s195 + $0x10] sm:$0xf] %v204
                %v206 = vld [vmem:[%s194 + $0x28] sm:$0xf]
                %207 = vst [vmem:[%s195 + $0x14] sm:$0xf] %v206
                %v208 = vld [vmem:[%s194 + $0x30] sm:$0xf]
                %209 = vst [vmem:[%s195 + $0x18] sm:$0xf] %v208
                %v210 = vld [vmem:[%s194 + $0x38] sm:$0xf]
                %211 = vst [vmem:[%s195 + $0x1c] sm:$0xf] %v210
                %v212 = vld [vmem:[%s194 + $0x40] sm:$0xf]
                %213 = vst [vmem:[%s195 + $0x20] sm:$0xf] %v212
                %v214 = vld [vmem:[%s194 + $0x48] sm:$0xf]
                %215 = vst [vmem:[%s195 + $0x24] sm:$0xf] %v214
                %v216 = vld [vmem:[%s194 + $0x50] sm:$0xf]
                %217 = vst [vmem:[%s195 + $0x28] sm:$0xf] %v216
                %v218 = vld [vmem:[%s194 + $0x58] sm:$0xf]
                %219 = vst [vmem:[%s195 + $0x2c] sm:$0xf] %v218
                %v220 = vld [vmem:[%s194 + $0x60] sm:$0xf]
                %221 = vst [vmem:[%s195 + $0x30] sm:$0xf] %v220
                %v222 = vld [vmem:[%s194 + $0x68] sm:$0xf]
                %223 = vst [vmem:[%s195 + $0x34] sm:$0xf] %v222
                %v224 = vld [vmem:[%s194 + $0x70] sm:$0xf]
                %225 = vst [vmem:[%s195 + $0x38] sm:$0xf] %v224
                %v226 = vld [vmem:[%s194 + $0x78] sm:$0xf]
                %227 = vst [vmem:[%s195 + $0x3c] sm:$0xf] %v226
              $region45: #{_lambda_.10} parent=39 // loop_footer
                %s193 = sadd.s32 1, %s189
              $region46: #{_lambda_.10} parent=39 // loop_footer_branch
                %188 = sbr.rel target = $region42
              $region47: #{_lambda_.10} parent=39 // loop_exit
                _
            $region40: #{_lambda_.10} parent=31 // pred_fallthru
              _
          $region32: #{_lambda_.10} parent=27 // pred_fallthru
            _
          %279 = vnop
        $region28: #{_lambda_.10} parent=23 // pred_fallthru
          _
        // Predicated region
        $region66: #{_lambda_.10} parent=23 // pred_check
          %p280 = pneg %p70
        $region67: #{_lambda_.10} parent=23 // pred_check_branch
          %282 = sbr.rel (%p280) target = $region69
        $region68: #{_lambda_.10} parent=23 // pred_region
          %s283 = smul.u32 16, %s18
          %p284 = scmp.lt.s32.totalorder %s283, 31
          %s285 = scalar_select %p284, %s283, 31
          %s286 = smul.addr %s285, 4
          %s287 = scalar_lea.vmem %s1, %s286
          %s288 = smul.u32 16, %s18
        $region69: #{_lambda_.10} parent=23 // pred_fallthru
          _
      $region24: #{_lambda_.10} parent=5 // pred_fallthru
        _
      %p289 = scmp.le.s32.totalorder 1, %s10
      %p290 = scmp.lt.s32.totalorder %s10, 9
      %p291 = pnand %p289, %p290
      %p292 = pneg %p291
      // Predicated region
      $region70: #{_lambda_.10} parent=5 // pred_check
        _
      $region71: #{_lambda_.10} parent=5 // pred_check_branch
        %294 = sbr.rel (%p291) target = $region73
      $region72: #{_lambda_.10} parent=5 // pred_region
        %s295 = ssub.s32 %s10, 1
        %s296 = sand.u32 %s37, 1
        %s297 = sand.u32 %s37, 1
        %s298 = smul.addr %s297, 64
        %s299 = scalar_lea.vmem [#allocation3], %s298
        // Predicated region
        $region74: #{_lambda_.10} parent=72 // pred_check
          %p300 = pneg %p50
        $region75: #{_lambda_.10} parent=72 // pred_check_branch
          %302 = sbr.rel (%p300) target = $region77
        $region76: #{_lambda_.10} parent=72 // pred_region
          _
        $region77: #{_lambda_.10} parent=72 // pred_fallthru
          _
        %s303 = sand.u32 %s37, 1
        %s304 = sand.u32 %s37, 1
        %s305 = smul.addr %s304, 64
        %s306 = scalar_lea.vmem [#allocation3], %s305
        %p307 = pneg %p50
        %p308 = pneg %p47
        %s309 = smul.u32 16, %s20
        %p310 = scmp.lt.s32.totalorder %s309, 31
        %s311 = scalar_select %p310, %s309, 31
        %s312 = smul.addr %s311, 4
        %s313 = scalar_lea.vmem %s1, %s312
        %p314 = pneg %p76
        %p315 = pneg %p73
        %p316 = pneg %p97
        %p317 = pneg %p94
        %p318 = pneg %p118
        %p319 = pneg %p115
        %p320 = pneg %p144
        %p321 = pneg %p141
        %s322 = smul.u32 16, %s19
        %p323 = scmp.lt.s32.totalorder %s322, 63
        %s324 = scalar_select %p323, %s322, 63
        %s325 = smul.addr %s324, 8
        %s326 = scalar_lea.vmem %s4, %s325
        %s327 = smul.u32 16, %s19
        %s328 = smul.u32 16, %s20
        %p329 = scmp.lt.s32.totalorder %s328, 31
        %s330 = scalar_select %p329, %s328, 31
        %s331 = smul.addr %s330, 4
        %s332 = scalar_lea.vmem %s1, %s331
        %s333 = smul.u32 16, %s20
        %s334 = smul.u32 16, %s19
        %p335 = scmp.lt.s32.totalorder %s334, 63
        %s336 = scalar_select %p335, %s334, 63
        %s337 = smul.addr %s336, 8
        %s338 = scalar_lea.vmem %s4, %s337
        %s339 = smul.u32 16, %s19
        %p341 = scmp.eq.s32.totalorder %s20, 0
        // Predicated region
        $region78: #{_lambda_.10} parent=72 // pred_check
          %p342 = pneg %p341
        $region79: #{_lambda_.10} parent=72 // pred_check_branch
          %344 = sbr.rel (%p342) target = $region81
        $region80: #{_lambda_.10} parent=72 // pred_region
          %vm345 = vcmask 130048
          %346 = vst.msk [vmem:[#allocation2] sm:$0xff] %vm345, 0.0
          %347 = vst.msk [vmem:[#allocation2 + $0x8] sm:$0xff] %vm345, 0.0
          %348 = vst.msk [vmem:[#allocation2 + $0x10] sm:$0xff] %vm345, 0.0
          %349 = vst.msk [vmem:[#allocation2 + $0x18] sm:$0xff] %vm345, 0.0
          %350 = vst.msk [vmem:[#allocation2 + $0x20] sm:$0xff] %vm345, 0.0
          %351 = vst.msk [vmem:[#allocation2 + $0x28] sm:$0xff] %vm345, 0.0
          %352 = vst.msk [vmem:[#allocation2 + $0x30] sm:$0xff] %vm345, 0.0
          %353 = vst.msk [vmem:[#allocation2 + $0x38] sm:$0xff] %vm345, 0.0
          %354 = vst.msk [vmem:[#allocation2 + $0x40] sm:$0xff] %vm345, 0.0
          %355 = vst.msk [vmem:[#allocation2 + $0x48] sm:$0xff] %vm345, 0.0
          %356 = vst.msk [vmem:[#allocation2 + $0x50] sm:$0xff] %vm345, 0.0
          %357 = vst.msk [vmem:[#allocation2 + $0x58] sm:$0xff] %vm345, 0.0
          %358 = vst.msk [vmem:[#allocation2 + $0x60] sm:$0xff] %vm345, 0.0
          %359 = vst.msk [vmem:[#allocation2 + $0x68] sm:$0xff] %vm345, 0.0
          %360 = vst.msk [vmem:[#allocation2 + $0x70] sm:$0xff] %vm345, 0.0
          %361 = vst.msk [vmem:[#allocation2 + $0x78] sm:$0xff] %vm345, 0.0
        $region81: #{_lambda_.10} parent=72 // pred_fallthru
          _
        %v362 = vld [vmem:[#allocation2] sm:$0xff]
        %v363 = vld [vmem:[#allocation2 + $0x8] sm:$0xff]
        %v364 = vld [vmem:[#allocation2 + $0x10] sm:$0xff]
        %v365 = vld [vmem:[#allocation2 + $0x18] sm:$0xff]
        %v366 = vld [vmem:[#allocation2 + $0x20] sm:$0xff]
        %v367 = vld [vmem:[#allocation2 + $0x28] sm:$0xff]
        %v368 = vld [vmem:[#allocation2 + $0x30] sm:$0xff]
        %v369 = vld [vmem:[#allocation2 + $0x38] sm:$0xff]
        %v370 = vld [vmem:[#allocation2 + $0x40] sm:$0xff]
        %v371 = vld [vmem:[#allocation2 + $0x48] sm:$0xff]
        %v372 = vld [vmem:[#allocation2 + $0x50] sm:$0xff]
        %v373 = vld [vmem:[#allocation2 + $0x58] sm:$0xff]
        %v374 = vld [vmem:[#allocation2 + $0x60] sm:$0xff]
        %v375 = vld [vmem:[#allocation2 + $0x68] sm:$0xff]
        %v376 = vld [vmem:[#allocation2 + $0x70] sm:$0xff]
        %v377 = vld [vmem:[#allocation2 + $0x78] sm:$0xff]
        %v378 = vld [vmem:[%s299] sm:$0xf]
        %v379 = vld [vmem:[%s299 + $0x4] sm:$0xf]
        %v380 = vld [vmem:[%s299 + $0x8] sm:$0xf]
        %v381 = vld [vmem:[%s299 + $0xc] sm:$0xf]
        %v382 = vld [vmem:[%s299 + $0x10] sm:$0xf]
        %v383 = vld [vmem:[%s299 + $0x14] sm:$0xf]
        %v384 = vld [vmem:[%s299 + $0x18] sm:$0xf]
        %v385 = vld [vmem:[%s299 + $0x1c] sm:$0xf]
        %v386 = vld [vmem:[%s299 + $0x20] sm:$0xf]
        %v387 = vld [vmem:[%s299 + $0x24] sm:$0xf]
        %v388 = vld [vmem:[%s299 + $0x28] sm:$0xf]
        %v389 = vld [vmem:[%s299 + $0x2c] sm:$0xf]
        %v390 = vld [vmem:[%s299 + $0x30] sm:$0xf]
        %v391 = vld [vmem:[%s299 + $0x34] sm:$0xf]
        %v392 = vld [vmem:[%s299 + $0x38] sm:$0xf]
        %v393 = vld [vmem:[%s299 + $0x3c] sm:$0xf]
        %v394 = vld [vmem:[%s332] sm:$0xf]
        %v395 = vld [vmem:[%s332 + $0x4] sm:$0xf]
        %v396 = vld [vmem:[%s332 + $0x8] sm:$0xf]
        %v397 = vld [vmem:[%s332 + $0xc] sm:$0xf]
        %v398 = vld [vmem:[%s332 + $0x10] sm:$0xf]
        %v399 = vld [vmem:[%s332 + $0x14] sm:$0xf]
        %v400 = vld [vmem:[%s332 + $0x18] sm:$0xf]
        %v401 = vld [vmem:[%s332 + $0x1c] sm:$0xf]
        %v402 = vld [vmem:[%s332 + $0x20] sm:$0xf]
        %v403 = vld [vmem:[%s332 + $0x24] sm:$0xf]
        %v404 = vld [vmem:[%s332 + $0x28] sm:$0xf]
        %v405 = vld [vmem:[%s332 + $0x2c] sm:$0xf]
        %v406 = vld [vmem:[%s332 + $0x30] sm:$0xf]
        %v407 = vld [vmem:[%s332 + $0x34] sm:$0xf]
        %v408 = vld [vmem:[%s332 + $0x38] sm:$0xf]
        %v409 = vld [vmem:[%s332 + $0x3c] sm:$0xf]
        %v426 = vunpack.c.l.b16 %v378
        %v427 = vunpack.c.l.b16 %v379
        %v428 = vunpack.c.l.b16 %v380
        %v429 = vunpack.c.l.b16 %v381
        %v430 = vunpack.c.l.b16 %v382
        %v431 = vunpack.c.l.b16 %v383
        %v432 = vunpack.c.l.b16 %v384
        %v433 = vunpack.c.l.b16 %v385
        %v434 = vunpack.c.l.b16 %v386
        %v435 = vunpack.c.l.b16 %v387
        %v436 = vunpack.c.l.b16 %v388
        %v437 = vunpack.c.l.b16 %v389
        %v438 = vunpack.c.l.b16 %v390
        %v439 = vunpack.c.l.b16 %v391
        %v440 = vunpack.c.l.b16 %v392
        %v441 = vunpack.c.l.b16 %v393
        %v442 = vpack.c.b16 %v427, %v426
        %v443 = vpack.c.b16 %v429, %v428
        %v444 = vpack.c.b16 %v431, %v430
        %v445 = vpack.c.b16 %v433, %v432
        %v446 = vpack.c.b16 %v435, %v434
        %v447 = vpack.c.b16 %v437, %v436
        %v448 = vpack.c.b16 %v439, %v438
        %v449 = vpack.c.b16 %v441, %v440
        %v474 = vunpack.c.l.b16 %v394
        %v475 = vunpack.c.l.b16 %v395
        %v476 = vunpack.c.l.b16 %v396
        %v477 = vunpack.c.l.b16 %v397
        %v478 = vunpack.c.l.b16 %v398
        %v479 = vunpack.c.l.b16 %v399
        %v480 = vunpack.c.l.b16 %v400
        %v481 = vunpack.c.l.b16 %v401
        %v482 = vunpack.c.l.b16 %v402
        %v483 = vunpack.c.l.b16 %v403
        %v484 = vunpack.c.l.b16 %v404
        %v485 = vunpack.c.l.b16 %v405
        %v486 = vunpack.c.l.b16 %v406
        %v487 = vunpack.c.l.b16 %v407
        %v488 = vunpack.c.l.b16 %v408
        %v489 = vunpack.c.l.b16 %v409
        %v490 = vpack.c.b16 %v475, %v474
        %v491 = vpack.c.b16 %v477, %v476
        %v492 = vpack.c.b16 %v479, %v478
        %v493 = vpack.c.b16 %v481, %v480
        %v494 = vpack.c.b16 %v483, %v482
        %v495 = vpack.c.b16 %v485, %v484
        %v496 = vpack.c.b16 %v487, %v486
        %v497 = vpack.c.b16 %v489, %v488
        %506 = vmatprep.subr.bf16.mxu0 0
        %507 = vmatpush1.bf16.msra.mxu0 %v490
        %508 = vmatprep.subr.bf16.mxu0 0
        %509 = vmatpush1.bf16.msra.mxu0 %v491
        %510 = vmatprep.subr.bf16.mxu0 0
        %511 = vmatpush1.bf16.msra.mxu0 %v492
        %512 = vmatprep.subr.bf16.mxu0 0
        %513 = vmatpush1.bf16.msra.mxu0 %v493
        %514 = vmatprep.subr.bf16.mxu0 0
        %515 = vmatpush1.bf16.msra.mxu0 %v494
        %516 = vmatprep.subr.bf16.mxu0 0
        %517 = vmatpush1.bf16.msra.mxu0 %v495
        %518 = vmatprep.subr.bf16.mxu0 0
        %519 = vmatpush1.bf16.msra.mxu0 %v496
        %520 = vmatprep.subr.bf16.mxu0 0
        %521 = vmatpush1.bf16.msra.mxu0 %v497
        %522 = vmatprep.subr.bf16.mxu0 0
        %523 = vmatpush1.bf16.msra.mxu0 0
        %524 = vmatprep.subr.bf16.mxu0 0
        %525 = vmatpush1.bf16.msra.mxu0 0
        %526 = vmatprep.subr.bf16.mxu0 0
        %527 = vmatpush1.bf16.msra.mxu0 0
        %528 = vmatprep.subr.bf16.mxu0 0
        %529 = vmatpush1.bf16.msra.mxu0 0
        %530 = vmatprep.subr.bf16.mxu0 0
        %531 = vmatpush1.bf16.msra.mxu0 0
        %532 = vmatprep.subr.bf16.mxu0 0
        %533 = vmatpush1.bf16.msra.mxu0 0
        %534 = vmatprep.subr.bf16.mxu0 0
        %535 = vmatpush1.bf16.msra.mxu0 0
        %536 = vmatprep.subr.bf16.mxu0 0
        %537 = vmatpush1.bf16.msra.mxu0 0
        %538 = vmatprep.mubr.bf16.mxu0 0
        %539 = vmatmul.mubr.bf16.gmra.mrb[0].mxu0 %v442
        %v540 = vpop.f32.mrb[0].mxu0
        %v541 = vadd.f32 0.0, %v540
        %v542 = vpop.f32.mrb[0].mxu0
        %v543 = vpop.f32.mrb[0].mxu0
        %v544 = vadd.f32 0.0, %v543
        %v545 = vpop.f32.mrb[0].mxu0
        %546 = vmatprep.mubr.bf16.mxu0 0
        %547 = vmatmul.mubr.bf16.gmra.mrb[0].mxu0 %v443
        %v548 = vpop.f32.mrb[0].mxu0
        %v549 = vadd.f32 0.0, %v548
        %v550 = vpop.f32.mrb[0].mxu0
        %v551 = vpop.f32.mrb[0].mxu0
        %v552 = vadd.f32 0.0, %v551
        %v553 = vpop.f32.mrb[0].mxu0
        %554 = vmatprep.mubr.bf16.mxu0 0
        %555 = vmatmul.mubr.bf16.gmra.mrb[0].mxu0 %v444
        %v556 = vpop.f32.mrb[0].mxu0
        %v557 = vadd.f32 0.0, %v556
        %v558 = vpop.f32.mrb[0].mxu0
        %v559 = vpop.f32.mrb[0].mxu0
        %v560 = vadd.f32 0.0, %v559
        %v561 = vpop.f32.mrb[0].mxu0
        %562 = vmatprep.mubr.bf16.mxu0 0
        %563 = vmatmul.mubr.bf16.gmra.mrb[0].mxu0 %v445
        %v564 = vpop.f32.mrb[0].mxu0
        %v565 = vadd.f32 0.0, %v564
        %v566 = vpop.f32.mrb[0].mxu0
        %v567 = vpop.f32.mrb[0].mxu0
        %v568 = vadd.f32 0.0, %v567
        %v569 = vpop.f32.mrb[0].mxu0
        %570 = vmatprep.mubr.bf16.mxu0 0
        %571 = vmatmul.mubr.bf16.gmra.mrb[0].mxu0 %v446
        %v572 = vpop.f32.mrb[0].mxu0
        %v573 = vadd.f32 0.0, %v572
        %v574 = vpop.f32.mrb[0].mxu0
        %v575 = vpop.f32.mrb[0].mxu0
        %v576 = vadd.f32 0.0, %v575
        %v577 = vpop.f32.mrb[0].mxu0
        %578 = vmatprep.mubr.bf16.mxu0 0
        %579 = vmatmul.mubr.bf16.gmra.mrb[0].mxu0 %v447
        %v580 = vpop.f32.mrb[0].mxu0
        %v581 = vadd.f32 0.0, %v580
        %v582 = vpop.f32.mrb[0].mxu0
        %v583 = vpop.f32.mrb[0].mxu0
        %v584 = vadd.f32 0.0, %v583
        %v585 = vpop.f32.mrb[0].mxu0
        %586 = vmatprep.mubr.bf16.mxu0 0
        %587 = vmatmul.mubr.bf16.gmra.mrb[0].mxu0 %v448
        %v588 = vpop.f32.mrb[0].mxu0
        %v589 = vadd.f32 0.0, %v588
        %v590 = vpop.f32.mrb[0].mxu0
        %v591 = vpop.f32.mrb[0].mxu0
        %v592 = vadd.f32 0.0, %v591
        %v593 = vpop.f32.mrb[0].mxu0
        %594 = vmatprep.mubr.bf16.mxu0 0
        %595 = vmatmul.mubr.bf16.gmra.mrb[0].mxu0 %v449
        %v596 = vpop.f32.mrb[0].mxu0
        %v597 = vadd.f32 0.0, %v596
        %v598 = vpop.f32.mrb[0].mxu0
        %v599 = vpop.f32.mrb[0].mxu0
        %v600 = vadd.f32 0.0, %v599
        %v601 = vpop.f32.mrb[0].mxu0
        %602 = vdwg.mxu0
        %v603 = vadd.f32 %v362, %v541
        %v604 = vadd.f32 %v363, %v544
        %v605 = vadd.f32 %v364, %v549
        %v606 = vadd.f32 %v365, %v552
        %v607 = vadd.f32 %v366, %v557
        %v608 = vadd.f32 %v367, %v560
        %v609 = vadd.f32 %v368, %v565
        %v610 = vadd.f32 %v369, %v568
        %v611 = vadd.f32 %v370, %v573
        %v612 = vadd.f32 %v371, %v576
        %v613 = vadd.f32 %v372, %v581
        %v614 = vadd.f32 %v373, %v584
        %v615 = vadd.f32 %v374, %v589
        %v616 = vadd.f32 %v375, %v592
        %v617 = vadd.f32 %v376, %v597
        %v618 = vadd.f32 %v377, %v600
        %vm619 = vcmask 130048
        %620 = vst.msk [vmem:[#allocation2] sm:$0xff] %vm619, %v603
        %621 = vst.msk [vmem:[#allocation2 + $0x8] sm:$0xff] %vm619, %v604
        %622 = vst.msk [vmem:[#allocation2 + $0x10] sm:$0xff] %vm619, %v605
        %623 = vst.msk [vmem:[#allocation2 + $0x18] sm:$0xff] %vm619, %v606
        %624 = vst.msk [vmem:[#allocation2 + $0x20] sm:$0xff] %vm619, %v607
        %625 = vst.msk [vmem:[#allocation2 + $0x28] sm:$0xff] %vm619, %v608
        %626 = vst.msk [vmem:[#allocation2 + $0x30] sm:$0xff] %vm619, %v609
        %627 = vst.msk [vmem:[#allocation2 + $0x38] sm:$0xff] %vm619, %v610
        %628 = vst.msk [vmem:[#allocation2 + $0x40] sm:$0xff] %vm619, %v611
        %629 = vst.msk [vmem:[#allocation2 + $0x48] sm:$0xff] %vm619, %v612
        %630 = vst.msk [vmem:[#allocation2 + $0x50] sm:$0xff] %vm619, %v613
        %631 = vst.msk [vmem:[#allocation2 + $0x58] sm:$0xff] %vm619, %v614
        %632 = vst.msk [vmem:[#allocation2 + $0x60] sm:$0xff] %vm619, %v615
        %633 = vst.msk [vmem:[#allocation2 + $0x68] sm:$0xff] %vm619, %v616
        %634 = vst.msk [vmem:[#allocation2 + $0x70] sm:$0xff] %vm619, %v617
        %635 = vst.msk [vmem:[#allocation2 + $0x78] sm:$0xff] %vm619, %v618
        %p636 = scmp.eq.s32.totalorder %s20, 1
        // Predicated region
        $region82: #{_lambda_.10} parent=72 // pred_check
          %p637 = pneg %p636
        $region83: #{_lambda_.10} parent=72 // pred_check_branch
          %639 = sbr.rel (%p637) target = $region85
        $region84: #{_lambda_.10} parent=72 // pred_region
          %v640 = vld [vmem:[#allocation2] sm:$0xff]
          %v641 = vld [vmem:[#allocation2 + $0x8] sm:$0xff]
          %v642 = vld [vmem:[#allocation2 + $0x10] sm:$0xff]
          %v643 = vld [vmem:[#allocation2 + $0x18] sm:$0xff]
          %v644 = vld [vmem:[#allocation2 + $0x20] sm:$0xff]
          %v645 = vld [vmem:[#allocation2 + $0x28] sm:$0xff]
          %v646 = vld [vmem:[#allocation2 + $0x30] sm:$0xff]
          %v647 = vld [vmem:[#allocation2 + $0x38] sm:$0xff]
          %v648 = vld [vmem:[#allocation2 + $0x40] sm:$0xff]
          %v649 = vld [vmem:[#allocation2 + $0x48] sm:$0xff]
          %v650 = vld [vmem:[#allocation2 + $0x50] sm:$0xff]
          %v651 = vld [vmem:[#allocation2 + $0x58] sm:$0xff]
          %v652 = vld [vmem:[#allocation2 + $0x60] sm:$0xff]
          %v653 = vld [vmem:[#allocation2 + $0x68] sm:$0xff]
          %v654 = vld [vmem:[#allocation2 + $0x70] sm:$0xff]
          %v655 = vld [vmem:[#allocation2 + $0x78] sm:$0xff]
          %v656 = vld [vmem:[%s2] sm:$0x1]
          %v658 = vlaneseq
          %v659 = vshrl.u32 %v658, 7
          %v660 = vsub.s32 0, %v659
          %v661 = vrot.slane %v656, %v660
          %v663 = vmul.f32 %v640, %v661
          %v664 = vmul.f32 %v641, %v661
          %v665 = vmul.f32 %v642, %v661
          %v666 = vmul.f32 %v643, %v661
          %v667 = vmul.f32 %v644, %v661
          %v668 = vmul.f32 %v645, %v661
          %v669 = vmul.f32 %v646, %v661
          %v670 = vmul.f32 %v647, %v661
          %v671 = vmul.f32 %v648, %v661
          %v672 = vmul.f32 %v649, %v661
          %v673 = vmul.f32 %v650, %v661
          %v674 = vmul.f32 %v651, %v661
          %v675 = vmul.f32 %v652, %v661
          %v676 = vmul.f32 %v653, %v661
          %v677 = vmul.f32 %v654, %v661
          %v678 = vmul.f32 %v655, %v661
          %v679 = vld [vmem:[%s3] sm:$0x1]
          %v681 = vlaneseq
          %v682 = vshrl.u32 %v681, 7
          %v683 = vsub.s32 0, %v682
          %v684 = vrot.slane %v679, %v683
          %v686 = vadd.f32 %v663, %v684
          %v687 = vadd.f32 %v664, %v684
          %v688 = vadd.f32 %v665, %v684
          %v689 = vadd.f32 %v666, %v684
          %v690 = vadd.f32 %v667, %v684
          %v691 = vadd.f32 %v668, %v684
          %v692 = vadd.f32 %v669, %v684
          %v693 = vadd.f32 %v670, %v684
          %v694 = vadd.f32 %v671, %v684
          %v695 = vadd.f32 %v672, %v684
          %v696 = vadd.f32 %v673, %v684
          %v697 = vadd.f32 %v674, %v684
          %v698 = vadd.f32 %v675, %v684
          %v699 = vadd.f32 %v676, %v684
          %v700 = vadd.f32 %v677, %v684
          %v701 = vadd.f32 %v678, %v684
          %v702 = vmax.f32 %v686, 0.0
          %v703 = vmax.f32 %v687, 0.0
          %v704 = vmax.f32 %v688, 0.0
          %v705 = vmax.f32 %v689, 0.0
          %v706 = vmax.f32 %v690, 0.0
          %v707 = vmax.f32 %v691, 0.0
          %v708 = vmax.f32 %v692, 0.0
          %v709 = vmax.f32 %v693, 0.0
          %v710 = vmax.f32 %v694, 0.0
          %v711 = vmax.f32 %v695, 0.0
          %v712 = vmax.f32 %v696, 0.0
          %v713 = vmax.f32 %v697, 0.0
          %v714 = vmax.f32 %v698, 0.0
          %v715 = vmax.f32 %v699, 0.0
          %v716 = vmax.f32 %v700, 0.0
          %v717 = vmax.f32 %v701, 0.0
          %718 = vst.msk [vmem:[%s338] sm:$0xff] %vm619, %v702
          %719 = vst.msk [vmem:[%s338 + $0x8] sm:$0xff] %vm619, %v703
          %720 = vst.msk [vmem:[%s338 + $0x10] sm:$0xff] %vm619, %v704
          %721 = vst.msk [vmem:[%s338 + $0x18] sm:$0xff] %vm619, %v705
          %722 = vst.msk [vmem:[%s338 + $0x20] sm:$0xff] %vm619, %v706
          %723 = vst.msk [vmem:[%s338 + $0x28] sm:$0xff] %vm619, %v707
          %724 = vst.msk [vmem:[%s338 + $0x30] sm:$0xff] %vm619, %v708
          %725 = vst.msk [vmem:[%s338 + $0x38] sm:$0xff] %vm619, %v709
          %726 = vst.msk [vmem:[%s338 + $0x40] sm:$0xff] %vm619, %v710
          %727 = vst.msk [vmem:[%s338 + $0x48] sm:$0xff] %vm619, %v711
          %728 = vst.msk [vmem:[%s338 + $0x50] sm:$0xff] %vm619, %v712
          %729 = vst.msk [vmem:[%s338 + $0x58] sm:$0xff] %vm619, %v713
          %730 = vst.msk [vmem:[%s338 + $0x60] sm:$0xff] %vm619, %v714
          %731 = vst.msk [vmem:[%s338 + $0x68] sm:$0xff] %vm619, %v715
          %732 = vst.msk [vmem:[%s338 + $0x70] sm:$0xff] %vm619, %v716
          %733 = vst.msk [vmem:[%s338 + $0x78] sm:$0xff] %vm619, %v717
        $region85: #{_lambda_.10} parent=72 // pred_fallthru
          _
        %s734 = smul.u32 16, %s19
        %p735 = scmp.lt.s32.totalorder %s734, 63
        %s736 = scalar_select %p735, %s734, 63
        %s737 = smul.addr %s736, 8
        %s738 = scalar_lea.vmem %s4, %s737
        // Predicated region
        $region86: #{_lambda_.10} parent=72 // pred_check
          %p739 = pneg %p141
        $region87: #{_lambda_.10} parent=72 // pred_check_branch
          %741 = sbr.rel (%p739) target = $region89
        $region88: #{_lambda_.10} parent=72 // pred_region
          %s742 = smul.u32 16, %s19
        $region89: #{_lambda_.10} parent=72 // pred_fallthru
          _
      $region73: #{_lambda_.10} parent=5 // pred_fallthru
        _
      %p743 = scmp.le.s32.totalorder 2, %s10
      // Predicated region
      $region90: #{_lambda_.10} parent=5 // pred_check
        %p744 = pneg %p743
      $region91: #{_lambda_.10} parent=5 // pred_check_branch
        %746 = sbr.rel (%p744) target = $region93
      $region92: #{_lambda_.10} parent=5 // pred_region
        %s747 = ssub.s32 %s10, 2
        // Predicated region
        $region94: #{_lambda_.10} parent=92 // pred_check
          %p748 = pneg %p147
        $region95: #{_lambda_.10} parent=92 // pred_check_branch
          %750 = sbr.rel (%p748) target = $region97
        $region96: #{_lambda_.10} parent=92 // pred_region
          %s751 = smul.u32 16, %s21
          %p752 = scmp.lt.s32.totalorder %s751, 63
          %s753 = scalar_select %p752, %s751, 63
          %s754 = smul.addr %s753, 8
          %s755 = scalar_lea.vmem %s4, %s754
        $region97: #{_lambda_.10} parent=92 // pred_fallthru
          _
      $region93: #{_lambda_.10} parent=5 // pred_fallthru
        _
    $region6: #{_lambda_.10} parent=1 // loop_footer
      %s14 = sadd.s32 1, %s10
    $region7: #{_lambda_.10} parent=1 // loop_footer_branch
      %9 = sbr.rel target = $region3
    $region8: #{_lambda_.10} parent=1 // loop_exit
      _

// kernel: _lambda_.11
$region0: #{_lambda_.11}
  #allocation0 [shape = 'u32[]', space=smem, size = 0x4, offset = 0x4, fixed_abs, tag = 'smem constant byte address 0x4 - core index']
  #allocation1 [shape = 'u32[144,128]{1,0:T(1,128)}', space=vmem, size = 0x12000, scoped, tag = 'internal scratch']
  %s0 = inlined_call_operand.vmem [shape: f32[2,9,9,16], index: 0, kind: input, shape index: {}]
  %s1 = inlined_call_operand.vmem [shape: f32[2,9,9,16], index: 1, kind: input, shape index: {}]
  %s2 = inlined_call_operand.vmem [shape: f32[2,9,9,16], index: 2, kind: input, shape index: {}]
  %s3 = inlined_call_operand.vmem [shape: f32[2,9,9,16], index: 3, kind: input, shape index: {}]
  %s4 = inlined_call_operand.vmem [shape: f32[2,8,8,16], index: 4, kind: output, shape index: {}]
  %s5 = sld [smem:[#allocation0]]
  $region49: #{_lambda_.11} parent=0
    _
  %s7 = ssub.s32 1, %s5
  %s8 = scalar_select 0, %s7, %s5
  loop: start=0, step=1, limit=4
  $region2: #{_lambda_.11} parent=0 // loop_pre_header
    _
  $region3: #{_lambda_.11} parent=0 // loop_header
    %s10 = sphi 0, %s14
    %p11 = scmp.ge.s32.totalorder %s10, 4
    %s20 = sphi 0, %s22
    %s23 = sphi 0, %s20
    %s24 = sphi 0, %s23
    %s40 = sphi 0, %s24
    %s46 = sphi 0, %s48
    %s49 = sphi 0, %s46
    %s50 = sphi 0, %s49
    %s66 = sphi 0, %s50
    %s72 = sphi 0, %s74
    %s75 = sphi 0, %s72
    %s76 = sphi 0, %s75
    %s92 = sphi 0, %s76
    %s98 = sphi 0, %s100
    %s101 = sphi 0, %s98
    %s102 = sphi 0, %s101
    %s118 = sphi 0, %s102
    %s124 = sphi 0, %s126
    %s127 = sphi 0, %s124
    %s128 = sphi 0, %s127
    %s144 = sphi 0, %s128
  $region4: #{_lambda_.11} parent=0 // loop_header_branch
    %13 = sbr.rel (%p11) target = $region8
  $region5: #{_lambda_.11} parent=0 // loop_body
    %s15 = ssub.s32 %s10, 1
    %s16 = ssub.s32 %s10, 2
    %s17 = sadd.s32 %s10, 1
    %s18 = ssub.s32 %s10, %s17
    %p19 = scmp.eq.s32.totalorder %s18, 0
    %s21 = sadd.s32 %s20, 1
    %s22 = scalar_select %p19, %s20, %s21
    %p25 = pneg %p19
    %p26 = scmp.eq.s32.totalorder %s10, 1
    %p27 = por %p25, %p26
    %p28 = scmp.ne.s32.totalorder %s20, %s23
    %p29 = scmp.eq.s32.totalorder %s10, 0
    %p30 = por %p28, %p29
    %p31 = scmp.ne.s32.totalorder %s20, %s23
    %p32 = scmp.eq.s32.totalorder %s15, 1
    %p33 = por %p31, %p32
    %p34 = scmp.ne.s32.totalorder %s23, %s24
    %p35 = scmp.eq.s32.totalorder %s15, 0
    %p36 = por %p34, %p35
    %p37 = scmp.ne.s32.totalorder %s23, %s24
    %p38 = scmp.eq.s32.totalorder %s16, 1
    %p39 = por %p37, %p38
    %p41 = scmp.ne.s32.totalorder %s24, %s40
    %p42 = scmp.eq.s32.totalorder %s16, 0
    %p43 = por %p41, %p42
    %s44 = ssub.s32 %s10, %s17
    %p45 = scmp.eq.s32.totalorder %s44, 0
    %s47 = sadd.s32 %s46, 1
    %s48 = scalar_select %p45, %s46, %s47
    %p51 = pneg %p45
    %p52 = scmp.eq.s32.totalorder %s10, 1
    %p53 = por %p51, %p52
    %p54 = scmp.ne.s32.totalorder %s46, %s49
    %p55 = scmp.eq.s32.totalorder %s10, 0
    %p56 = por %p54, %p55
    %p57 = scmp.ne.s32.totalorder %s46, %s49
    %p58 = scmp.eq.s32.totalorder %s15, 1
    %p59 = por %p57, %p58
    %p60 = scmp.ne.s32.totalorder %s49, %s50
    %p61 = scmp.eq.s32.totalorder %s15, 0
    %p62 = por %p60, %p61
    %p63 = scmp.ne.s32.totalorder %s49, %s50
    %p64 = scmp.eq.s32.totalorder %s16, 1
    %p65 = por %p63, %p64
    %p67 = scmp.ne.s32.totalorder %s50, %s66
    %p68 = scmp.eq.s32.totalorder %s16, 0
    %p69 = por %p67, %p68
    %s70 = ssub.s32 %s10, %s17
    %p71 = scmp.eq.s32.totalorder %s70, 0
    %s73 = sadd.s32 %s72, 1
    %s74 = scalar_select %p71, %s72, %s73
    %p77 = pneg %p71
    %p78 = scmp.eq.s32.totalorder %s10, 1
    %p79 = por %p77, %p78
    %p80 = scmp.ne.s32.totalorder %s72, %s75
    %p81 = scmp.eq.s32.totalorder %s10, 0
    %p82 = por %p80, %p81
    %p83 = scmp.ne.s32.totalorder %s72, %s75
    %p84 = scmp.eq.s32.totalorder %s15, 1
    %p85 = por %p83, %p84
    %p86 = scmp.ne.s32.totalorder %s75, %s76
    %p87 = scmp.eq.s32.totalorder %s15, 0
    %p88 = por %p86, %p87
    %p89 = scmp.ne.s32.totalorder %s75, %s76
    %p90 = scmp.eq.s32.totalorder %s16, 1
    %p91 = por %p89, %p90
    %p93 = scmp.ne.s32.totalorder %s76, %s92
    %p94 = scmp.eq.s32.totalorder %s16, 0
    %p95 = por %p93, %p94
    %s96 = ssub.s32 %s10, %s17
    %p97 = scmp.eq.s32.totalorder %s96, 0
    %s99 = sadd.s32 %s98, 1
    %s100 = scalar_select %p97, %s98, %s99
    %p103 = pneg %p97
    %p104 = scmp.eq.s32.totalorder %s10, 1
    %p105 = por %p103, %p104
    %p106 = scmp.ne.s32.totalorder %s98, %s101
    %p107 = scmp.eq.s32.totalorder %s10, 0
    %p108 = por %p106, %p107
    %p109 = scmp.ne.s32.totalorder %s98, %s101
    %p110 = scmp.eq.s32.totalorder %s15, 1
    %p111 = por %p109, %p110
    %p112 = scmp.ne.s32.totalorder %s101, %s102
    %p113 = scmp.eq.s32.totalorder %s15, 0
    %p114 = por %p112, %p113
    %p115 = scmp.ne.s32.totalorder %s101, %s102
    %p116 = scmp.eq.s32.totalorder %s16, 1
    %p117 = por %p115, %p116
    %p119 = scmp.ne.s32.totalorder %s102, %s118
    %p120 = scmp.eq.s32.totalorder %s16, 0
    %p121 = por %p119, %p120
    %s122 = ssub.s32 %s10, %s17
    %p123 = scmp.eq.s32.totalorder %s122, 0
    %s125 = sadd.s32 %s124, 1
    %s126 = scalar_select %p123, %s124, %s125
    %p129 = pneg %p123
    %p130 = scmp.eq.s32.totalorder %s10, 1
    %p131 = por %p129, %p130
    %p132 = scmp.ne.s32.totalorder %s124, %s127
    %p133 = scmp.eq.s32.totalorder %s10, 0
    %p134 = por %p132, %p133
    %p135 = scmp.ne.s32.totalorder %s124, %s127
    %p136 = scmp.eq.s32.totalorder %s15, 1
    %p137 = por %p135, %p136
    %p138 = scmp.ne.s32.totalorder %s127, %s128
    %p139 = scmp.eq.s32.totalorder %s15, 0
    %p140 = por %p138, %p139
    %p141 = scmp.ne.s32.totalorder %s127, %s128
    %p142 = scmp.eq.s32.totalorder %s16, 1
    %p143 = por %p141, %p142
    %p145 = scmp.ne.s32.totalorder %s128, %s144
    %p146 = scmp.eq.s32.totalorder %s16, 0
    %p147 = por %p145, %p146
    %p148 = scmp.le.s32.totalorder 1, %s10
    %p149 = scmp.lt.s32.totalorder %s10, 3
    %p150 = pnand %p148, %p149
    %p151 = pneg %p150
    // Predicated region
    $region9: #{_lambda_.11} parent=5 // pred_check
      _
    $region10: #{_lambda_.11} parent=5 // pred_check_branch
      %153 = sbr.rel (%p150) target = $region12
    $region11: #{_lambda_.11} parent=5 // pred_region
      %s154 = ssub.s32 %s10, 1
    $region12: #{_lambda_.11} parent=5 // pred_fallthru
      _
    %p155 = scmp.lt.s32.totalorder %s10, 2
    // Predicated region
    $region13: #{_lambda_.11} parent=5 // pred_check
      %p156 = pneg %p155
    $region14: #{_lambda_.11} parent=5 // pred_check_branch
      %158 = sbr.rel (%p156) target = $region16
    $region15: #{_lambda_.11} parent=5 // pred_region
      // Predicated region
      $region17: #{_lambda_.11} parent=15 // pred_check
        %p159 = pneg %p30
      $region18: #{_lambda_.11} parent=15 // pred_check_branch
        %161 = sbr.rel (%p159) target = $region20
      $region19: #{_lambda_.11} parent=15 // pred_region
        %p162 = scmp.lt.s32.totalorder %s10, 1
        %s163 = scalar_select %p162, %s10, 1
        %s164 = smul.addr %s163, 18
        %s165 = smul.addr %s164, 8
        %s166 = scalar_lea.vmem %s0, %s165
      $region20: #{_lambda_.11} parent=15 // pred_fallthru
        _
      // Predicated region
      $region21: #{_lambda_.11} parent=15 // pred_check
        %p167 = pneg %p56
      $region22: #{_lambda_.11} parent=15 // pred_check_branch
        %169 = sbr.rel (%p167) target = $region24
      $region23: #{_lambda_.11} parent=15 // pred_region
        %p170 = scmp.lt.s32.totalorder %s10, 1
        %s171 = scalar_select %p170, %s10, 1
        %s172 = smul.addr %s171, 18
        %s173 = smul.addr %s172, 8
        %s174 = scalar_lea.vmem %s1, %s173
      $region24: #{_lambda_.11} parent=15 // pred_fallthru
        _
      // Predicated region
      $region25: #{_lambda_.11} parent=15 // pred_check
        %p175 = pneg %p82
      $region26: #{_lambda_.11} parent=15 // pred_check_branch
        %177 = sbr.rel (%p175) target = $region28
      $region27: #{_lambda_.11} parent=15 // pred_region
        %p178 = scmp.lt.s32.totalorder %s10, 1
        %s179 = scalar_select %p178, %s10, 1
        %s180 = smul.addr %s179, 18
        %s181 = smul.addr %s180, 8
        %s182 = scalar_lea.vmem %s2, %s181
      $region28: #{_lambda_.11} parent=15 // pred_fallthru
        _
      // Predicated region
      $region29: #{_lambda_.11} parent=15 // pred_check
        %p183 = pneg %p108
      $region30: #{_lambda_.11} parent=15 // pred_check_branch
        %185 = sbr.rel (%p183) target = $region32
      $region31: #{_lambda_.11} parent=15 // pred_region
        %p186 = scmp.lt.s32.totalorder %s10, 1
        %s187 = scalar_select %p186, %s10, 1
        %s188 = smul.addr %s187, 18
        %s189 = smul.addr %s188, 8
        %s190 = scalar_lea.vmem %s3, %s189
      $region32: #{_lambda_.11} parent=15 // pred_fallthru
        _
    $region16: #{_lambda_.11} parent=5 // pred_fallthru
      _
    %p191 = scmp.le.s32.totalorder 1, %s10
    %p192 = scmp.lt.s32.totalorder %s10, 3
    %p193 = pnand %p191, %p192
    %p194 = pneg %p193
    // Predicated region
    $region33: #{_lambda_.11} parent=5 // pred_check
      _
    $region34: #{_lambda_.11} parent=5 // pred_check_branch
      %196 = sbr.rel (%p193) target = $region36
    $region35: #{_lambda_.11} parent=5 // pred_region
      %s197 = ssub.s32 %s10, 1
      %p198 = scmp.lt.s32.totalorder %s15, 1
      %s199 = scalar_select %p198, %s15, 1
      %s200 = smul.addr %s199, 18
      %s201 = smul.addr %s200, 8
      %s202 = scalar_lea.vmem %s0, %s201
      %p203 = pneg %p36
      %p204 = pneg %p33
      %p205 = scmp.lt.s32.totalorder %s15, 1
      %s206 = scalar_select %p205, %s15, 1
      %s207 = smul.addr %s206, 18
      %s208 = smul.addr %s207, 8
      %s209 = scalar_lea.vmem %s1, %s208
      %p210 = pneg %p62
      %p211 = pneg %p59
      %p212 = scmp.lt.s32.totalorder %s15, 1
      %s213 = scalar_select %p212, %s15, 1
      %s214 = smul.addr %s213, 18
      %s215 = smul.addr %s214, 8
      %s216 = scalar_lea.vmem %s2, %s215
      %p217 = pneg %p88
      %p218 = pneg %p85
      %p219 = scmp.lt.s32.totalorder %s15, 1
      %s220 = scalar_select %p219, %s15, 1
      %s221 = smul.addr %s220, 18
      %s222 = smul.addr %s221, 8
      %s223 = scalar_lea.vmem %s3, %s222
      %p224 = pneg %p114
      %p225 = pneg %p111
      %p226 = pneg %p140
      %p227 = pneg %p137
      %p228 = scmp.lt.s32.totalorder %s15, 1
      %s229 = scalar_select %p228, %s15, 1
      %s230 = smul.addr %s229, 8
      %s231 = smul.addr %s230, 8
      %s232 = scalar_lea.vmem %s4, %s231
      %p233 = scmp.lt.s32.totalorder %s15, 1
      %s234 = scalar_select %p233, %s15, 1
      %s235 = smul.addr %s234, 18
      %s236 = smul.addr %s235, 8
      %s237 = scalar_lea.vmem %s0, %s236
      %p238 = scmp.lt.s32.totalorder %s15, 1
      %s239 = scalar_select %p238, %s15, 1
      %s240 = smul.addr %s239, 18
      %s241 = smul.addr %s240, 8
      %s242 = scalar_lea.vmem %s1, %s241
      %p243 = scmp.lt.s32.totalorder %s15, 1
      %s244 = scalar_select %p243, %s15, 1
      %s245 = smul.addr %s244, 18
      %s246 = smul.addr %s245, 8
      %s247 = scalar_lea.vmem %s2, %s246
      %p248 = scmp.lt.s32.totalorder %s15, 1
      %s249 = scalar_select %p248, %s15, 1
      %s250 = smul.addr %s249, 18
      %s251 = smul.addr %s250, 8
      %s252 = scalar_lea.vmem %s3, %s251
      %p253 = scmp.lt.s32.totalorder %s15, 1
      %s254 = scalar_select %p253, %s15, 1
      %s255 = smul.addr %s254, 8
      %s256 = smul.addr %s255, 8
      %s257 = scalar_lea.vmem %s4, %s256
      %v258 = vld [vmem:[%s237] sm:$0xff]
      %v259 = vld [vmem:[%s237 + $0x8] sm:$0x1]
      %v260 = vld [vmem:[%s237 + $0x10] sm:$0xff]
      %v261 = vld [vmem:[%s237 + $0x18] sm:$0x1]
      %v262 = vld [vmem:[%s237 + $0x20] sm:$0xff]
      %v263 = vld [vmem:[%s237 + $0x28] sm:$0x1]
      %v264 = vld [vmem:[%s237 + $0x30] sm:$0xff]
      %v265 = vld [vmem:[%s237 + $0x38] sm:$0x1]
      %v266 = vld [vmem:[%s237 + $0x40] sm:$0xff]
      %v267 = vld [vmem:[%s237 + $0x48] sm:$0x1]
      %v268 = vld [vmem:[%s237 + $0x50] sm:$0xff]
      %v269 = vld [vmem:[%s237 + $0x58] sm:$0x1]
      %v270 = vld [vmem:[%s237 + $0x60] sm:$0xff]
      %v271 = vld [vmem:[%s237 + $0x68] sm:$0x1]
      %v272 = vld [vmem:[%s237 + $0x70] sm:$0xff]
      %v273 = vld [vmem:[%s237 + $0x78] sm:$0x1]
      %v274 = vld [vmem:[%s237 + $0x80] sm:$0xff]
      %v275 = vld [vmem:[%s237 + $0x88] sm:$0x1]
      %v276 = vld [vmem:[%s242] sm:$0xff]
      %v277 = vld [vmem:[%s242 + $0x10] sm:$0xff]
      %v278 = vld [vmem:[%s242 + $0x20] sm:$0xff]
      %v279 = vld [vmem:[%s242 + $0x30] sm:$0xff]
      %v280 = vld [vmem:[%s242 + $0x40] sm:$0xff]
      %v281 = vld [vmem:[%s242 + $0x50] sm:$0xff]
      %v282 = vld [vmem:[%s242 + $0x60] sm:$0xff]
      %v283 = vld [vmem:[%s242 + $0x70] sm:$0xff]
      %v284 = vld [vmem:[%s242 + $0x80] sm:$0xff]
      %v285 = vld [vmem:[%s247] sm:$0xff]
      %v286 = vld [vmem:[%s247 + $0x8] sm:$0x1]
      %v287 = vld [vmem:[%s247 + $0x10] sm:$0xff]
      %v288 = vld [vmem:[%s247 + $0x18] sm:$0x1]
      %v289 = vld [vmem:[%s247 + $0x20] sm:$0xff]
      %v290 = vld [vmem:[%s247 + $0x28] sm:$0x1]
      %v291 = vld [vmem:[%s247 + $0x30] sm:$0xff]
      %v292 = vld [vmem:[%s247 + $0x38] sm:$0x1]
      %v293 = vld [vmem:[%s247 + $0x40] sm:$0xff]
      %v294 = vld [vmem:[%s247 + $0x48] sm:$0x1]
      %v295 = vld [vmem:[%s247 + $0x50] sm:$0xff]
      %v296 = vld [vmem:[%s247 + $0x58] sm:$0x1]
      %v297 = vld [vmem:[%s247 + $0x60] sm:$0xff]
      %v298 = vld [vmem:[%s247 + $0x68] sm:$0x1]
      %v299 = vld [vmem:[%s247 + $0x70] sm:$0xff]
      %v300 = vld [vmem:[%s247 + $0x78] sm:$0x1]
      %v301 = vld [vmem:[%s252] sm:$0xff]
      %v302 = vld [vmem:[%s252 + $0x10] sm:$0xff]
      %v303 = vld [vmem:[%s252 + $0x20] sm:$0xff]
      %v304 = vld [vmem:[%s252 + $0x30] sm:$0xff]
      %v305 = vld [vmem:[%s252 + $0x40] sm:$0xff]
      %v306 = vld [vmem:[%s252 + $0x50] sm:$0xff]
      %v307 = vld [vmem:[%s252 + $0x60] sm:$0xff]
      %v308 = vld [vmem:[%s252 + $0x70] sm:$0xff]
      %v309 = vmax.f32 %v301, %v258
      %v310 = vmax.f32 %v302, %v260
      %v311 = vmax.f32 %v303, %v262
      %v312 = vmax.f32 %v304, %v264
      %v313 = vmax.f32 %v305, %v266
      %v314 = vmax.f32 %v306, %v268
      %v315 = vmax.f32 %v307, %v270
      %v316 = vmax.f32 %v308, %v272
      %v317 = vmax.f32 %v309, %v260
      %v318 = vmax.f32 %v310, %v262
      %v319 = vmax.f32 %v311, %v264
      %v320 = vmax.f32 %v312, %v266
      %v321 = vmax.f32 %v313, %v268
      %v322 = vmax.f32 %v314, %v270
      %v323 = vmax.f32 %v315, %v272
      %v324 = vmax.f32 %v316, %v274
      %vm341 = vcmask 1046528
      %v342 = vrot.slane %v258, 1
      %v343 = vrot.slane %v259, 1
      %v344 = vsel %vm341, %v342, %v343
      %v345 = vrot.slane %v260, 1
      %v346 = vrot.slane %v261, 1
      %v347 = vsel %vm341, %v345, %v346
      %v348 = vrot.slane %v262, 1
      %v349 = vrot.slane %v263, 1
      %v350 = vsel %vm341, %v348, %v349
      %v351 = vrot.slane %v264, 1
      %v352 = vrot.slane %v265, 1
      %v353 = vsel %vm341, %v351, %v352
      %v354 = vrot.slane %v266, 1
      %v355 = vrot.slane %v267, 1
      %v356 = vsel %vm341, %v354, %v355
      %v357 = vrot.slane %v268, 1
      %v358 = vrot.slane %v269, 1
      %v359 = vsel %vm341, %v357, %v358
      %v360 = vrot.slane %v270, 1
      %v361 = vrot.slane %v271, 1
      %v362 = vsel %vm341, %v360, %v361
      %v363 = vrot.slane %v272, 1
      %v364 = vrot.slane %v273, 1
      %v365 = vsel %vm341, %v363, %v364
      %v374 = vmax.f32 %v317, %v344
      %v375 = vmax.f32 %v318, %v347
      %v376 = vmax.f32 %v319, %v350
      %v377 = vmax.f32 %v320, %v353
      %v378 = vmax.f32 %v321, %v356
      %v379 = vmax.f32 %v322, %v359
      %v380 = vmax.f32 %v323, %v362
      %v381 = vmax.f32 %v324, %v365
      %v384 = vrot.slane %v274, 1
      %v385 = vrot.slane %v275, 1
      %v386 = vsel %vm341, %v384, %v385
      %v388 = vmax.f32 %v374, %v347
      %v389 = vmax.f32 %v375, %v350
      %v390 = vmax.f32 %v376, %v353
      %v391 = vmax.f32 %v377, %v356
      %v392 = vmax.f32 %v378, %v359
      %v393 = vmax.f32 %v379, %v362
      %v394 = vmax.f32 %v380, %v365
      %v395 = vmax.f32 %v381, %v386
      %v396 = vmax.f32 %v388, %v276
      %v397 = vmax.f32 %v389, %v277
      %v398 = vmax.f32 %v390, %v278
      %v399 = vmax.f32 %v391, %v279
      %v400 = vmax.f32 %v392, %v280
      %v401 = vmax.f32 %v393, %v281
      %v402 = vmax.f32 %v394, %v282
      %v403 = vmax.f32 %v395, %v283
      %v404 = vmax.f32 %v396, %v277
      %v405 = vmax.f32 %v397, %v278
      %v406 = vmax.f32 %v398, %v279
      %v407 = vmax.f32 %v399, %v280
      %v408 = vmax.f32 %v400, %v281
      %v409 = vmax.f32 %v401, %v282
      %v410 = vmax.f32 %v402, %v283
      %v411 = vmax.f32 %v403, %v284
      %v412 = vmax.f32 %v404, %v285
      %v413 = vmax.f32 %v405, %v287
      %v414 = vmax.f32 %v406, %v289
      %v415 = vmax.f32 %v407, %v291
      %v416 = vmax.f32 %v408, %v293
      %v417 = vmax.f32 %v409, %v295
      %v418 = vmax.f32 %v410, %v297
      %v419 = vmax.f32 %v411, %v299
      %v436 = vrot.slane %v285, 1
      %v437 = vrot.slane %v286, 1
      %v438 = vsel %vm341, %v436, %v437
      %v439 = vrot.slane %v287, 1
      %v440 = vrot.slane %v288, 1
      %v441 = vsel %vm341, %v439, %v440
      %v442 = vrot.slane %v289, 1
      %v443 = vrot.slane %v290, 1
      %v444 = vsel %vm341, %v442, %v443
      %v445 = vrot.slane %v291, 1
      %v446 = vrot.slane %v292, 1
      %v447 = vsel %vm341, %v445, %v446
      %v448 = vrot.slane %v293, 1
      %v449 = vrot.slane %v294, 1
      %v450 = vsel %vm341, %v448, %v449
      %v451 = vrot.slane %v295, 1
      %v452 = vrot.slane %v296, 1
      %v453 = vsel %vm341, %v451, %v452
      %v454 = vrot.slane %v297, 1
      %v455 = vrot.slane %v298, 1
      %v456 = vsel %vm341, %v454, %v455
      %v457 = vrot.slane %v299, 1
      %v458 = vrot.slane %v300, 1
      %v459 = vsel %vm341, %v457, %v458
      %v468 = vmax.f32 %v412, %v438
      %v469 = vmax.f32 %v413, %v441
      %v470 = vmax.f32 %v414, %v444
      %v471 = vmax.f32 %v415, %v447
      %v472 = vmax.f32 %v416, %v450
      %v473 = vmax.f32 %v417, %v453
      %v474 = vmax.f32 %v418, %v456
      %v475 = vmax.f32 %v419, %v459
      %vm476 = vcmask 130048
      %477 = vst.msk [vmem:[%s257] sm:$0xff] %vm476, %v468
      %478 = vst.msk [vmem:[%s257 + $0x8] sm:$0xff] %vm476, %v469
      %479 = vst.msk [vmem:[%s257 + $0x10] sm:$0xff] %vm476, %v470
      %480 = vst.msk [vmem:[%s257 + $0x18] sm:$0xff] %vm476, %v471
      %481 = vst.msk [vmem:[%s257 + $0x20] sm:$0xff] %vm476, %v472
      %482 = vst.msk [vmem:[%s257 + $0x28] sm:$0xff] %vm476, %v473
      %483 = vst.msk [vmem:[%s257 + $0x30] sm:$0xff] %vm476, %v474
      %484 = vst.msk [vmem:[%s257 + $0x38] sm:$0xff] %vm476, %v475
      %p485 = scmp.lt.s32.totalorder %s15, 1
      %s486 = scalar_select %p485, %s15, 1
      %s487 = smul.addr %s486, 8
      %s488 = smul.addr %s487, 8
      %s489 = scalar_lea.vmem %s4, %s488
      // Predicated region
      $region37: #{_lambda_.11} parent=35 // pred_check
        %p490 = pneg %p137
      $region38: #{_lambda_.11} parent=35 // pred_check_branch
        %492 = sbr.rel (%p490) target = $region40
      $region39: #{_lambda_.11} parent=35 // pred_region
        _
      $region40: #{_lambda_.11} parent=35 // pred_fallthru
        _
    $region36: #{_lambda_.11} parent=5 // pred_fallthru
      _
    %p493 = scmp.le.s32.totalorder 2, %s10
    // Predicated region
    $region41: #{_lambda_.11} parent=5 // pred_check
      %p494 = pneg %p493
    $region42: #{_lambda_.11} parent=5 // pred_check_branch
      %496 = sbr.rel (%p494) target = $region44
    $region43: #{_lambda_.11} parent=5 // pred_region
      %s497 = ssub.s32 %s10, 2
      // Predicated region
      $region45: #{_lambda_.11} parent=43 // pred_check
        %p498 = pneg %p143
      $region46: #{_lambda_.11} parent=43 // pred_check_branch
        %500 = sbr.rel (%p498) target = $region48
      $region47: #{_lambda_.11} parent=43 // pred_region
        %p501 = scmp.lt.s32.totalorder %s16, 1
        %s502 = scalar_select %p501, %s16, 1
        %s503 = smul.addr %s502, 8
        %s504 = smul.addr %s503, 8
        %s505 = scalar_lea.vmem %s4, %s504
      $region48: #{_lambda_.11} parent=43 // pred_fallthru
        _
    $region44: #{_lambda_.11} parent=5 // pred_fallthru
      _
  $region6: #{_lambda_.11} parent=0 // loop_footer
    %s14 = sadd.s32 1, %s10
  $region7: #{_lambda_.11} parent=0 // loop_footer_branch
    %9 = sbr.rel target = $region3
  $region8: #{_lambda_.11} parent=0 // loop_exit
    _

// kernel: _lambda_.12
$region0: #{_lambda_.12}
  #allocation0 [shape = 'u32[]', space=smem, size = 0x4, offset = 0x4, fixed_abs, tag = 'smem constant byte address 0x4 - core index']
  #allocation1 [shape = 'u32[144,128]{1,0:T(1,128)}', space=vmem, size = 0x12000, scoped, tag = 'internal scratch']
  #allocation2 [shape = 'f32[128,16]{1,0:T(8,128)}', space=vmem, size = 0x10000, scoped, tag = 'scratch operand']
  %s0 = inlined_call_operand.vmem [shape: bf16[128,16], index: 0, kind: input, shape index: {}]
  %s1 = inlined_call_operand.vmem [shape: bf16[16,16], index: 1, kind: input, shape index: {}]
  %s2 = inlined_call_operand.vmem [shape: f32[1,16], index: 2, kind: input, shape index: {}]
  %s3 = inlined_call_operand.vmem [shape: f32[1,16], index: 3, kind: input, shape index: {}]
  %s4 = inlined_call_operand.vmem [shape: f32[128,16], index: 4, kind: output, shape index: {}]
  %s5 = sld [smem:[#allocation0]]
  $region34: #{_lambda_.12} parent=0
    _
  %s7 = ssub.s32 1, %s5
  %s8 = scalar_select 0, %s7, %s5
  // Predicated region
  $region2: #{_lambda_.12} parent=0 // pred_check
    _
  $region3: #{_lambda_.12} parent=0 // pred_check_branch
    %10 = sbr.rel (0) target = $region5
  $region4: #{_lambda_.12} parent=0 // pred_region
    _
  $region5: #{_lambda_.12} parent=0 // pred_fallthru
    _
  // Predicated region
  $region6: #{_lambda_.12} parent=0 // pred_check
    _
  $region7: #{_lambda_.12} parent=0 // pred_check_branch
    %12 = sbr.rel (0) target = $region9
  $region8: #{_lambda_.12} parent=0 // pred_region
    _
  $region9: #{_lambda_.12} parent=0 // pred_fallthru
    _
  // Predicated region
  $region10: #{_lambda_.12} parent=0 // pred_check
    _
  $region11: #{_lambda_.12} parent=0 // pred_check_branch
    %14 = sbr.rel (0) target = $region13
  $region12: #{_lambda_.12} parent=0 // pred_region
    _
  $region13: #{_lambda_.12} parent=0 // pred_fallthru
    _
  // Predicated region
  $region14: #{_lambda_.12} parent=0 // pred_check
    _
  $region15: #{_lambda_.12} parent=0 // pred_check_branch
    %16 = sbr.rel (0) target = $region17
  $region16: #{_lambda_.12} parent=0 // pred_region
    _
  $region17: #{_lambda_.12} parent=0 // pred_fallthru
    _
  %p18 = scmp.eq.s32.totalorder 0, 0
  // Predicated region
  $region18: #{_lambda_.12} parent=0 // pred_check
    %p19 = pneg %p18
  $region19: #{_lambda_.12} parent=0 // pred_check_branch
    %21 = sbr.rel (%p19) target = $region21
  $region20: #{_lambda_.12} parent=0 // pred_region
    %vm22 = vcmask 130048
    %23 = vst.msk [vmem:[#allocation2] sm:$0xff] %vm22, 0.0
    %24 = vst.msk [vmem:[#allocation2 + $0x8] sm:$0xff] %vm22, 0.0
    %25 = vst.msk [vmem:[#allocation2 + $0x10] sm:$0xff] %vm22, 0.0
    %26 = vst.msk [vmem:[#allocation2 + $0x18] sm:$0xff] %vm22, 0.0
    %27 = vst.msk [vmem:[#allocation2 + $0x20] sm:$0xff] %vm22, 0.0
    %28 = vst.msk [vmem:[#allocation2 + $0x28] sm:$0xff] %vm22, 0.0
    %29 = vst.msk [vmem:[#allocation2 + $0x30] sm:$0xff] %vm22, 0.0
    %30 = vst.msk [vmem:[#allocation2 + $0x38] sm:$0xff] %vm22, 0.0
    %31 = vst.msk [vmem:[#allocation2 + $0x40] sm:$0xff] %vm22, 0.0
    %32 = vst.msk [vmem:[#allocation2 + $0x48] sm:$0xff] %vm22, 0.0
    %33 = vst.msk [vmem:[#allocation2 + $0x50] sm:$0xff] %vm22, 0.0
    %34 = vst.msk [vmem:[#allocation2 + $0x58] sm:$0xff] %vm22, 0.0
    %35 = vst.msk [vmem:[#allocation2 + $0x60] sm:$0xff] %vm22, 0.0
    %36 = vst.msk [vmem:[#allocation2 + $0x68] sm:$0xff] %vm22, 0.0
    %37 = vst.msk [vmem:[#allocation2 + $0x70] sm:$0xff] %vm22, 0.0
    %38 = vst.msk [vmem:[#allocation2 + $0x78] sm:$0xff] %vm22, 0.0
  $region21: #{_lambda_.12} parent=0 // pred_fallthru
    _
  %v39 = vld [vmem:[#allocation2] sm:$0xff]
  %v40 = vld [vmem:[#allocation2 + $0x8] sm:$0xff]
  %v41 = vld [vmem:[#allocation2 + $0x10] sm:$0xff]
  %v42 = vld [vmem:[#allocation2 + $0x18] sm:$0xff]
  %v43 = vld [vmem:[#allocation2 + $0x20] sm:$0xff]
  %v44 = vld [vmem:[#allocation2 + $0x28] sm:$0xff]
  %v45 = vld [vmem:[#allocation2 + $0x30] sm:$0xff]
  %v46 = vld [vmem:[#allocation2 + $0x38] sm:$0xff]
  %v47 = vld [vmem:[#allocation2 + $0x40] sm:$0xff]
  %v48 = vld [vmem:[#allocation2 + $0x48] sm:$0xff]
  %v49 = vld [vmem:[#allocation2 + $0x50] sm:$0xff]
  %v50 = vld [vmem:[#allocation2 + $0x58] sm:$0xff]
  %v51 = vld [vmem:[#allocation2 + $0x60] sm:$0xff]
  %v52 = vld [vmem:[#allocation2 + $0x68] sm:$0xff]
  %v53 = vld [vmem:[#allocation2 + $0x70] sm:$0xff]
  %v54 = vld [vmem:[#allocation2 + $0x78] sm:$0xff]
  %v55 = vld [vmem:[%s0] sm:$0xf]
  %v56 = vld [vmem:[%s0 + $0x4] sm:$0xf]
  %v57 = vld [vmem:[%s0 + $0x8] sm:$0xf]
  %v58 = vld [vmem:[%s0 + $0xc] sm:$0xf]
  %v59 = vld [vmem:[%s0 + $0x10] sm:$0xf]
  %v60 = vld [vmem:[%s0 + $0x14] sm:$0xf]
  %v61 = vld [vmem:[%s0 + $0x18] sm:$0xf]
  %v62 = vld [vmem:[%s0 + $0x1c] sm:$0xf]
  %v63 = vld [vmem:[%s0 + $0x20] sm:$0xf]
  %v64 = vld [vmem:[%s0 + $0x24] sm:$0xf]
  %v65 = vld [vmem:[%s0 + $0x28] sm:$0xf]
  %v66 = vld [vmem:[%s0 + $0x2c] sm:$0xf]
  %v67 = vld [vmem:[%s0 + $0x30] sm:$0xf]
  %v68 = vld [vmem:[%s0 + $0x34] sm:$0xf]
  %v69 = vld [vmem:[%s0 + $0x38] sm:$0xf]
  %v70 = vld [vmem:[%s0 + $0x3c] sm:$0xf]
  %v71 = vld [vmem:[%s1] sm:$0xf]
  %v72 = vld [vmem:[%s1 + $0x4] sm:$0xf]
  %v89 = vunpack.c.l.b16 %v55
  %v90 = vunpack.c.l.b16 %v56
  %v91 = vunpack.c.l.b16 %v57
  %v92 = vunpack.c.l.b16 %v58
  %v93 = vunpack.c.l.b16 %v59
  %v94 = vunpack.c.l.b16 %v60
  %v95 = vunpack.c.l.b16 %v61
  %v96 = vunpack.c.l.b16 %v62
  %v97 = vunpack.c.l.b16 %v63
  %v98 = vunpack.c.l.b16 %v64
  %v99 = vunpack.c.l.b16 %v65
  %v100 = vunpack.c.l.b16 %v66
  %v101 = vunpack.c.l.b16 %v67
  %v102 = vunpack.c.l.b16 %v68
  %v103 = vunpack.c.l.b16 %v69
  %v104 = vunpack.c.l.b16 %v70
  %v105 = vpack.c.b16 %v90, %v89
  %v106 = vpack.c.b16 %v92, %v91
  %v107 = vpack.c.b16 %v94, %v93
  %v108 = vpack.c.b16 %v96, %v95
  %v109 = vpack.c.b16 %v98, %v97
  %v110 = vpack.c.b16 %v100, %v99
  %v111 = vpack.c.b16 %v102, %v101
  %v112 = vpack.c.b16 %v104, %v103
  %v115 = vunpack.c.l.b16 %v71
  %v116 = vunpack.c.l.b16 %v72
  %v117 = vpack.c.b16 %v116, %v115
  %vm119 = vcmask 130048
  %v121 = vsel %vm119, %v105, 0
  %v124 = vsel %vm119, %v106, 0
  %v127 = vsel %vm119, %v107, 0
  %v130 = vsel %vm119, %v108, 0
  %v133 = vsel %vm119, %v109, 0
  %v136 = vsel %vm119, %v110, 0
  %v139 = vsel %vm119, %v111, 0
  %v142 = vsel %vm119, %v112, 0
  %144 = vmatprep.subr.bf16.mxu0 0
  %145 = vmatpush1.bf16.msra.mxu0 %v117
  %146 = vmatprep.subr.bf16.mxu0 0
  %147 = vmatpush1.bf16.msra.mxu0 0
  %148 = vmatprep.subr.bf16.mxu0 0
  %149 = vmatpush1.bf16.msra.mxu0 0
  %150 = vmatprep.subr.bf16.mxu0 0
  %151 = vmatpush1.bf16.msra.mxu0 0
  %152 = vmatprep.subr.bf16.mxu0 0
  %153 = vmatpush1.bf16.msra.mxu0 0
  %154 = vmatprep.subr.bf16.mxu0 0
  %155 = vmatpush1.bf16.msra.mxu0 0
  %156 = vmatprep.subr.bf16.mxu0 0
  %157 = vmatpush1.bf16.msra.mxu0 0
  %158 = vmatprep.subr.bf16.mxu0 0
  %159 = vmatpush1.bf16.msra.mxu0 0
  %160 = vmatprep.subr.bf16.mxu0 0
  %161 = vmatpush1.bf16.msra.mxu0 0
  %162 = vmatprep.subr.bf16.mxu0 0
  %163 = vmatpush1.bf16.msra.mxu0 0
  %164 = vmatprep.subr.bf16.mxu0 0
  %165 = vmatpush1.bf16.msra.mxu0 0
  %166 = vmatprep.subr.bf16.mxu0 0
  %167 = vmatpush1.bf16.msra.mxu0 0
  %168 = vmatprep.subr.bf16.mxu0 0
  %169 = vmatpush1.bf16.msra.mxu0 0
  %170 = vmatprep.subr.bf16.mxu0 0
  %171 = vmatpush1.bf16.msra.mxu0 0
  %172 = vmatprep.subr.bf16.mxu0 0
  %173 = vmatpush1.bf16.msra.mxu0 0
  %174 = vmatprep.subr.bf16.mxu0 0
  %175 = vmatpush1.bf16.msra.mxu0 0
  %176 = vmatprep.mubr.bf16.mxu0 0
  %177 = vmatmul.mubr.bf16.gmra.mrb[0].mxu0 %v121
  %v178 = vpop.f32.mrb[0].mxu0
  %v179 = vadd.f32 0.0, %v178
  %v180 = vpop.f32.mrb[0].mxu0
  %v181 = vpop.f32.mrb[0].mxu0
  %v182 = vadd.f32 0.0, %v181
  %v183 = vpop.f32.mrb[0].mxu0
  %184 = vmatprep.mubr.bf16.mxu0 0
  %185 = vmatmul.mubr.bf16.gmra.mrb[0].mxu0 %v124
  %v186 = vpop.f32.mrb[0].mxu0
  %v187 = vadd.f32 0.0, %v186
  %v188 = vpop.f32.mrb[0].mxu0
  %v189 = vpop.f32.mrb[0].mxu0
  %v190 = vadd.f32 0.0, %v189
  %v191 = vpop.f32.mrb[0].mxu0
  %192 = vmatprep.mubr.bf16.mxu0 0
  %193 = vmatmul.mubr.bf16.gmra.mrb[0].mxu0 %v127
  %v194 = vpop.f32.mrb[0].mxu0
  %v195 = vadd.f32 0.0, %v194
  %v196 = vpop.f32.mrb[0].mxu0
  %v197 = vpop.f32.mrb[0].mxu0
  %v198 = vadd.f32 0.0, %v197
  %v199 = vpop.f32.mrb[0].mxu0
  %200 = vmatprep.mubr.bf16.mxu0 0
  %201 = vmatmul.mubr.bf16.gmra.mrb[0].mxu0 %v130
  %v202 = vpop.f32.mrb[0].mxu0
  %v203 = vadd.f32 0.0, %v202
  %v204 = vpop.f32.mrb[0].mxu0
  %v205 = vpop.f32.mrb[0].mxu0
  %v206 = vadd.f32 0.0, %v205
  %v207 = vpop.f32.mrb[0].mxu0
  %208 = vmatprep.mubr.bf16.mxu0 0
  %209 = vmatmul.mubr.bf16.gmra.mrb[0].mxu0 %v133
  %v210 = vpop.f32.mrb[0].mxu0
  %v211 = vadd.f32 0.0, %v210
  %v212 = vpop.f32.mrb[0].mxu0
  %v213 = vpop.f32.mrb[0].mxu0
  %v214 = vadd.f32 0.0, %v213
  %v215 = vpop.f32.mrb[0].mxu0
  %216 = vmatprep.mubr.bf16.mxu0 0
  %217 = vmatmul.mubr.bf16.gmra.mrb[0].mxu0 %v136
  %v218 = vpop.f32.mrb[0].mxu0
  %v219 = vadd.f32 0.0, %v218
  %v220 = vpop.f32.mrb[0].mxu0
  %v221 = vpop.f32.mrb[0].mxu0
  %v222 = vadd.f32 0.0, %v221
  %v223 = vpop.f32.mrb[0].mxu0
  %224 = vmatprep.mubr.bf16.mxu0 0
  %225 = vmatmul.mubr.bf16.gmra.mrb[0].mxu0 %v139
  %v226 = vpop.f32.mrb[0].mxu0
  %v227 = vadd.f32 0.0, %v226
  %v228 = vpop.f32.mrb[0].mxu0
  %v229 = vpop.f32.mrb[0].mxu0
  %v230 = vadd.f32 0.0, %v229
  %v231 = vpop.f32.mrb[0].mxu0
  %232 = vmatprep.mubr.bf16.mxu0 0
  %233 = vmatmul.mubr.bf16.gmra.mrb[0].mxu0 %v142
  %v234 = vpop.f32.mrb[0].mxu0
  %v235 = vadd.f32 0.0, %v234
  %v236 = vpop.f32.mrb[0].mxu0
  %v237 = vpop.f32.mrb[0].mxu0
  %v238 = vadd.f32 0.0, %v237
  %v239 = vpop.f32.mrb[0].mxu0
  %240 = vdwg.mxu0
  %v241 = vadd.f32 %v39, %v179
  %v242 = vadd.f32 %v40, %v182
  %v243 = vadd.f32 %v41, %v187
  %v244 = vadd.f32 %v42, %v190
  %v245 = vadd.f32 %v43, %v195
  %v246 = vadd.f32 %v44, %v198
  %v247 = vadd.f32 %v45, %v203
  %v248 = vadd.f32 %v46, %v206
  %v249 = vadd.f32 %v47, %v211
  %v250 = vadd.f32 %v48, %v214
  %v251 = vadd.f32 %v49, %v219
  %v252 = vadd.f32 %v50, %v222
  %v253 = vadd.f32 %v51, %v227
  %v254 = vadd.f32 %v52, %v230
  %v255 = vadd.f32 %v53, %v235
  %v256 = vadd.f32 %v54, %v238
  %257 = vst.msk [vmem:[#allocation2] sm:$0xff] %vm119, %v241
  %258 = vst.msk [vmem:[#allocation2 + $0x8] sm:$0xff] %vm119, %v242
  %259 = vst.msk [vmem:[#allocation2 + $0x10] sm:$0xff] %vm119, %v243
  %260 = vst.msk [vmem:[#allocation2 + $0x18] sm:$0xff] %vm119, %v244
  %261 = vst.msk [vmem:[#allocation2 + $0x20] sm:$0xff] %vm119, %v245
  %262 = vst.msk [vmem:[#allocation2 + $0x28] sm:$0xff] %vm119, %v246
  %263 = vst.msk [vmem:[#allocation2 + $0x30] sm:$0xff] %vm119, %v247
  %264 = vst.msk [vmem:[#allocation2 + $0x38] sm:$0xff] %vm119, %v248
  %265 = vst.msk [vmem:[#allocation2 + $0x40] sm:$0xff] %vm119, %v249
  %266 = vst.msk [vmem:[#allocation2 + $0x48] sm:$0xff] %vm119, %v250
  %267 = vst.msk [vmem:[#allocation2 + $0x50] sm:$0xff] %vm119, %v251
  %268 = vst.msk [vmem:[#allocation2 + $0x58] sm:$0xff] %vm119, %v252
  %269 = vst.msk [vmem:[#allocation2 + $0x60] sm:$0xff] %vm119, %v253
  %270 = vst.msk [vmem:[#allocation2 + $0x68] sm:$0xff] %vm119, %v254
  %271 = vst.msk [vmem:[#allocation2 + $0x70] sm:$0xff] %vm119, %v255
  %272 = vst.msk [vmem:[#allocation2 + $0x78] sm:$0xff] %vm119, %v256
  // Predicated region
  $region22: #{_lambda_.12} parent=0 // pred_check
    %p273 = pneg %p18
  $region23: #{_lambda_.12} parent=0 // pred_check_branch
    %275 = sbr.rel (%p273) target = $region25
  $region24: #{_lambda_.12} parent=0 // pred_region
    %v276 = vld [vmem:[#allocation2] sm:$0xff]
    %v277 = vld [vmem:[#allocation2 + $0x8] sm:$0xff]
    %v278 = vld [vmem:[#allocation2 + $0x10] sm:$0xff]
    %v279 = vld [vmem:[#allocation2 + $0x18] sm:$0xff]
    %v280 = vld [vmem:[#allocation2 + $0x20] sm:$0xff]
    %v281 = vld [vmem:[#allocation2 + $0x28] sm:$0xff]
    %v282 = vld [vmem:[#allocation2 + $0x30] sm:$0xff]
    %v283 = vld [vmem:[#allocation2 + $0x38] sm:$0xff]
    %v284 = vld [vmem:[#allocation2 + $0x40] sm:$0xff]
    %v285 = vld [vmem:[#allocation2 + $0x48] sm:$0xff]
    %v286 = vld [vmem:[#allocation2 + $0x50] sm:$0xff]
    %v287 = vld [vmem:[#allocation2 + $0x58] sm:$0xff]
    %v288 = vld [vmem:[#allocation2 + $0x60] sm:$0xff]
    %v289 = vld [vmem:[#allocation2 + $0x68] sm:$0xff]
    %v290 = vld [vmem:[#allocation2 + $0x70] sm:$0xff]
    %v291 = vld [vmem:[#allocation2 + $0x78] sm:$0xff]
    %v292 = vld [vmem:[%s2] sm:$0x1]
    %v294 = vlaneseq
    %v295 = vshrl.u32 %v294, 7
    %v296 = vsub.s32 0, %v295
    %v297 = vrot.slane %v292, %v296
    %v299 = vmul.f32 %v276, %v297
    %v300 = vmul.f32 %v277, %v297
    %v301 = vmul.f32 %v278, %v297
    %v302 = vmul.f32 %v279, %v297
    %v303 = vmul.f32 %v280, %v297
    %v304 = vmul.f32 %v281, %v297
    %v305 = vmul.f32 %v282, %v297
    %v306 = vmul.f32 %v283, %v297
    %v307 = vmul.f32 %v284, %v297
    %v308 = vmul.f32 %v285, %v297
    %v309 = vmul.f32 %v286, %v297
    %v310 = vmul.f32 %v287, %v297
    %v311 = vmul.f32 %v288, %v297
    %v312 = vmul.f32 %v289, %v297
    %v313 = vmul.f32 %v290, %v297
    %v314 = vmul.f32 %v291, %v297
    %v315 = vld [vmem:[%s3] sm:$0x1]
    %v317 = vlaneseq
    %v318 = vshrl.u32 %v317, 7
    %v319 = vsub.s32 0, %v318
    %v320 = vrot.slane %v315, %v319
    %v322 = vadd.f32 %v299, %v320
    %v323 = vadd.f32 %v300, %v320
    %v324 = vadd.f32 %v301, %v320
    %v325 = vadd.f32 %v302, %v320
    %v326 = vadd.f32 %v303, %v320
    %v327 = vadd.f32 %v304, %v320
    %v328 = vadd.f32 %v305, %v320
    %v329 = vadd.f32 %v306, %v320
    %v330 = vadd.f32 %v307, %v320
    %v331 = vadd.f32 %v308, %v320
    %v332 = vadd.f32 %v309, %v320
    %v333 = vadd.f32 %v310, %v320
    %v334 = vadd.f32 %v311, %v320
    %v335 = vadd.f32 %v312, %v320
    %v336 = vadd.f32 %v313, %v320
    %v337 = vadd.f32 %v314, %v320
    %v338 = vmax.f32 %v322, 0.0
    %v339 = vmax.f32 %v323, 0.0
    %v340 = vmax.f32 %v324, 0.0
    %v341 = vmax.f32 %v325, 0.0
    %v342 = vmax.f32 %v326, 0.0
    %v343 = vmax.f32 %v327, 0.0
    %v344 = vmax.f32 %v328, 0.0
    %v345 = vmax.f32 %v329, 0.0
    %v346 = vmax.f32 %v330, 0.0
    %v347 = vmax.f32 %v331, 0.0
    %v348 = vmax.f32 %v332, 0.0
    %v349 = vmax.f32 %v333, 0.0
    %v350 = vmax.f32 %v334, 0.0
    %v351 = vmax.f32 %v335, 0.0
    %v352 = vmax.f32 %v336, 0.0
    %v353 = vmax.f32 %v337, 0.0
    %354 = vst.msk [vmem:[%s4] sm:$0xff] %vm119, %v338
    %355 = vst.msk [vmem:[%s4 + $0x8] sm:$0xff] %vm119, %v339
    %356 = vst.msk [vmem:[%s4 + $0x10] sm:$0xff] %vm119, %v340
    %357 = vst.msk [vmem:[%s4 + $0x18] sm:$0xff] %vm119, %v341
    %358 = vst.msk [vmem:[%s4 + $0x20] sm:$0xff] %vm119, %v342
    %359 = vst.msk [vmem:[%s4 + $0x28] sm:$0xff] %vm119, %v343
    %360 = vst.msk [vmem:[%s4 + $0x30] sm:$0xff] %vm119, %v344
    %361 = vst.msk [vmem:[%s4 + $0x38] sm:$0xff] %vm119, %v345
    %362 = vst.msk [vmem:[%s4 + $0x40] sm:$0xff] %vm119, %v346
    %363 = vst.msk [vmem:[%s4 + $0x48] sm:$0xff] %vm119, %v347
    %364 = vst.msk [vmem:[%s4 + $0x50] sm:$0xff] %vm119, %v348
    %365 = vst.msk [vmem:[%s4 + $0x58] sm:$0xff] %vm119, %v349
    %366 = vst.msk [vmem:[%s4 + $0x60] sm:$0xff] %vm119, %v350
    %367 = vst.msk [vmem:[%s4 + $0x68] sm:$0xff] %vm119, %v351
    %368 = vst.msk [vmem:[%s4 + $0x70] sm:$0xff] %vm119, %v352
    %369 = vst.msk [vmem:[%s4 + $0x78] sm:$0xff] %vm119, %v353
  $region25: #{_lambda_.12} parent=0 // pred_fallthru
    _
  // Predicated region
  $region26: #{_lambda_.12} parent=0 // pred_check
    _
  $region27: #{_lambda_.12} parent=0 // pred_check_branch
    %371 = sbr.rel (0) target = $region29
  $region28: #{_lambda_.12} parent=0 // pred_region
    _
  $region29: #{_lambda_.12} parent=0 // pred_fallthru
    _
  // Predicated region
  $region30: #{_lambda_.12} parent=0 // pred_check
    _
  $region31: #{_lambda_.12} parent=0 // pred_check_branch
    %373 = sbr.rel (0) target = $region33
  $region32: #{_lambda_.12} parent=0 // pred_region
    _
  $region33: #{_lambda_.12} parent=0 // pred_fallthru
    _

// kernel: _lambda_.13
$region0: #{_lambda_.13}
  #allocation0 [shape = 'u32[]', space=smem, size = 0x4, offset = 0x4, fixed_abs, tag = 'smem constant byte address 0x4 - core index']
  #allocation1 [shape = 'u32[144,128]{1,0:T(1,128)}', space=vmem, size = 0x12000, scoped, tag = 'internal scratch']
  %s0 = inlined_call_operand.vmem [shape: bf16[4,128,36], index: 0, kind: input, shape index: {}]
  %s1 = inlined_call_operand.vmem [shape: bf16[4,36,4], index: 1, kind: input, shape index: {}]
  %s2 = inlined_call_operand.vmem [shape: f32[4,1,4], index: 2, kind: input, shape index: {}]
  %s3 = inlined_call_operand.vmem [shape: f32[4,1,4], index: 3, kind: input, shape index: {}]
  %s4 = inlined_call_operand.vmem [shape: f32[4,128,4], index: 4, kind: output, shape index: {}]
  %s5 = sld [smem:[#allocation0]]
  $region49: #{_lambda_.13} parent=0
    _
  %s7 = ssub.s32 1, %s5
  %s8 = scalar_select 0, %s7, %s5
  loop: start=0, step=1, limit=6
  $region2: #{_lambda_.13} parent=0 // loop_pre_header
    _
  $region3: #{_lambda_.13} parent=0 // loop_header
    %s10 = sphi 0, %s14
    %p11 = scmp.ge.s32.totalorder %s10, 6
    %s17 = sphi 0, %s29
    %s18 = sphi 0, %s25
    %s19 = sphi 0, %s17
    %s20 = sphi 0, %s18
    %s21 = sphi 0, %s19
    %s22 = sphi 0, %s20
    %s34 = sphi 0, %s36
    %s37 = sphi 0, %s34
    %s38 = sphi 0, %s37
    %s54 = sphi 0, %s38
    %s60 = sphi 0, %s62
    %s63 = sphi 0, %s60
    %s64 = sphi 0, %s63
    %s80 = sphi 0, %s64
    %s86 = sphi 0, %s88
    %s89 = sphi 0, %s86
    %s90 = sphi 0, %s89
    %s106 = sphi 0, %s90
    %s112 = sphi 0, %s114
    %s115 = sphi 0, %s112
    %s116 = sphi 0, %s115
    %s132 = sphi 0, %s116
    %s140 = sphi 0, %s142
    %s143 = sphi 0, %s140
    %s144 = sphi 0, %s143
    %s160 = sphi 0, %s144
  $region4: #{_lambda_.13} parent=0 // loop_header_branch
    %13 = sbr.rel (%p11) target = $region8
  $region5: #{_lambda_.13} parent=0 // loop_body
    %s15 = ssub.s32 %s10, 1
    %s16 = ssub.s32 %s10, 2
    %s23 = sadd.s32 1, %s18
    %p24 = scmp.ge.s32.totalorder %s23, 4
    %s25 = scalar_select %p24, 0, %s23
    %s26 = sadd.s32 1, %s17
    %s27 = scalar_select %p24, %s26, %s17
    %p28 = scmp.ge.s32.totalorder %s27, 1
    %s29 = scalar_select %p28, 0, %s27
    %s30 = ssub.s32 %s18, %s25
    %s31 = ssub.s32 %s17, %s29
    %s32 = sor.u32 %s30, %s31
    %p33 = scmp.eq.s32.totalorder %s32, 0
    %s35 = sadd.s32 %s34, 1
    %s36 = scalar_select %p33, %s34, %s35
    %p39 = pneg %p33
    %p40 = scmp.eq.s32.totalorder %s10, 3
    %p41 = por %p39, %p40
    %p42 = scmp.ne.s32.totalorder %s34, %s37
    %p43 = scmp.eq.s32.totalorder %s10, 0
    %p44 = por %p42, %p43
    %p45 = scmp.ne.s32.totalorder %s34, %s37
    %p46 = scmp.eq.s32.totalorder %s15, 3
    %p47 = por %p45, %p46
    %p48 = scmp.ne.s32.totalorder %s37, %s38
    %p49 = scmp.eq.s32.totalorder %s15, 0
    %p50 = por %p48, %p49
    %p51 = scmp.ne.s32.totalorder %s37, %s38
    %p52 = scmp.eq.s32.totalorder %s16, 3
    %p53 = por %p51, %p52
    %p55 = scmp.ne.s32.totalorder %s38, %s54
    %p56 = scmp.eq.s32.totalorder %s16, 0
    %p57 = por %p55, %p56
    %s58 = ssub.s32 %s18, %s25
    %p59 = scmp.eq.s32.totalorder %s58, 0
    %s61 = sadd.s32 %s60, 1
    %s62 = scalar_select %p59, %s60, %s61
    %p65 = pneg %p59
    %p66 = scmp.eq.s32.totalorder %s10, 3
    %p67 = por %p65, %p66
    %p68 = scmp.ne.s32.totalorder %s60, %s63
    %p69 = scmp.eq.s32.totalorder %s10, 0
    %p70 = por %p68, %p69
    %p71 = scmp.ne.s32.totalorder %s60, %s63
    %p72 = scmp.eq.s32.totalorder %s15, 3
    %p73 = por %p71, %p72
    %p74 = scmp.ne.s32.totalorder %s63, %s64
    %p75 = scmp.eq.s32.totalorder %s15, 0
    %p76 = por %p74, %p75
    %p77 = scmp.ne.s32.totalorder %s63, %s64
    %p78 = scmp.eq.s32.totalorder %s16, 3
    %p79 = por %p77, %p78
    %p81 = scmp.ne.s32.totalorder %s64, %s80
    %p82 = scmp.eq.s32.totalorder %s16, 0
    %p83 = por %p81, %p82
    %s84 = ssub.s32 %s18, %s25
    %p85 = scmp.eq.s32.totalorder %s84, 0
    %s87 = sadd.s32 %s86, 1
    %s88 = scalar_select %p85, %s86, %s87
    %p91 = pneg %p85
    %p92 = scmp.eq.s32.totalorder %s10, 3
    %p93 = por %p91, %p92
    %p94 = scmp.ne.s32.totalorder %s86, %s89
    %p95 = scmp.eq.s32.totalorder %s10, 0
    %p96 = por %p94, %p95
    %p97 = scmp.ne.s32.totalorder %s86, %s89
    %p98 = scmp.eq.s32.totalorder %s15, 3
    %p99 = por %p97, %p98
    %p100 = scmp.ne.s32.totalorder %s89, %s90
    %p101 = scmp.eq.s32.totalorder %s15, 0
    %p102 = por %p100, %p101
    %p103 = scmp.ne.s32.totalorder %s89, %s90
    %p104 = scmp.eq.s32.totalorder %s16, 3
    %p105 = por %p103, %p104
    %p107 = scmp.ne.s32.totalorder %s90, %s106
    %p108 = scmp.eq.s32.totalorder %s16, 0
    %p109 = por %p107, %p108
    %s110 = ssub.s32 %s18, %s25
    %p111 = scmp.eq.s32.totalorder %s110, 0
    %s113 = sadd.s32 %s112, 1
    %s114 = scalar_select %p111, %s112, %s113
    %p117 = pneg %p111
    %p118 = scmp.eq.s32.totalorder %s10, 3
    %p119 = por %p117, %p118
    %p120 = scmp.ne.s32.totalorder %s112, %s115
    %p121 = scmp.eq.s32.totalorder %s10, 0
    %p122 = por %p120, %p121
    %p123 = scmp.ne.s32.totalorder %s112, %s115
    %p124 = scmp.eq.s32.totalorder %s15, 3
    %p125 = por %p123, %p124
    %p126 = scmp.ne.s32.totalorder %s115, %s116
    %p127 = scmp.eq.s32.totalorder %s15, 0
    %p128 = por %p126, %p127
    %p129 = scmp.ne.s32.totalorder %s115, %s116
    %p130 = scmp.eq.s32.totalorder %s16, 3
    %p131 = por %p129, %p130
    %p133 = scmp.ne.s32.totalorder %s116, %s132
    %p134 = scmp.eq.s32.totalorder %s16, 0
    %p135 = por %p133, %p134
    %s136 = ssub.s32 %s18, %s25
    %s137 = ssub.s32 %s17, %s29
    %s138 = sor.u32 %s136, %s137
    %p139 = scmp.eq.s32.totalorder %s138, 0
    %s141 = sadd.s32 %s140, 1
    %s142 = scalar_select %p139, %s140, %s141
    %p145 = pneg %p139
    %p146 = scmp.eq.s32.totalorder %s10, 3
    %p147 = por %p145, %p146
    %p148 = scmp.ne.s32.totalorder %s140, %s143
    %p149 = scmp.eq.s32.totalorder %s10, 0
    %p150 = por %p148, %p149
    %p151 = scmp.ne.s32.totalorder %s140, %s143
    %p152 = scmp.eq.s32.totalorder %s15, 3
    %p153 = por %p151, %p152
    %p154 = scmp.ne.s32.totalorder %s143, %s144
    %p155 = scmp.eq.s32.totalorder %s15, 0
    %p156 = por %p154, %p155
    %p157 = scmp.ne.s32.totalorder %s143, %s144
    %p158 = scmp.eq.s32.totalorder %s16, 3
    %p159 = por %p157, %p158
    %p161 = scmp.ne.s32.totalorder %s144, %s160
    %p162 = scmp.eq.s32.totalorder %s16, 0
    %p163 = por %p161, %p162
    %p164 = scmp.le.s32.totalorder 1, %s10
    %p165 = scmp.lt.s32.totalorder %s10, 5
    %p166 = pnand %p164, %p165
    %p167 = pneg %p166
    // Predicated region
    $region9: #{_lambda_.13} parent=5 // pred_check
      _
    $region10: #{_lambda_.13} parent=5 // pred_check_branch
      %169 = sbr.rel (%p166) target = $region12
    $region11: #{_lambda_.13} parent=5 // pred_region
      %s170 = ssub.s32 %s10, 1
    $region12: #{_lambda_.13} parent=5 // pred_fallthru
      _
    %p171 = scmp.lt.s32.totalorder %s10, 4
    // Predicated region
    $region13: #{_lambda_.13} parent=5 // pred_check
      %p172 = pneg %p171
    $region14: #{_lambda_.13} parent=5 // pred_check_branch
      %174 = sbr.rel (%p172) target = $region16
    $region15: #{_lambda_.13} parent=5 // pred_region
      // Predicated region
      $region17: #{_lambda_.13} parent=15 // pred_check
        %p175 = pneg %p44
      $region18: #{_lambda_.13} parent=15 // pred_check_branch
        %177 = sbr.rel (%p175) target = $region20
      $region19: #{_lambda_.13} parent=15 // pred_region
        %s178 = smul.u32 16, %s17
        %p179 = scmp.lt.s32.totalorder %s18, 3
        %s180 = scalar_select %p179, %s18, 3
        %p181 = scmp.lt.s32.totalorder %s178, 15
        %s182 = scalar_select %p181, %s178, 15
        %s183 = smul.addr %s180, 16
        %s184 = sadd.s32 %s182, %s183
        %s185 = smul.addr %s184, 4
        %s186 = scalar_lea.vmem %s0, %s185
        %s187 = smul.u32 16, %s17
      $region20: #{_lambda_.13} parent=15 // pred_fallthru
        _
      // Predicated region
      $region21: #{_lambda_.13} parent=15 // pred_check
        %p188 = pneg %p70
      $region22: #{_lambda_.13} parent=15 // pred_check_branch
        %190 = sbr.rel (%p188) target = $region24
      $region23: #{_lambda_.13} parent=15 // pred_region
        %p191 = scmp.lt.s32.totalorder %s18, 3
        %s192 = scalar_select %p191, %s18, 3
        %s193 = smul.addr %s192, 5
        %s194 = smul.addr %s193, 4
        %s195 = scalar_lea.vmem %s1, %s194
      $region24: #{_lambda_.13} parent=15 // pred_fallthru
        _
      // Predicated region
      $region25: #{_lambda_.13} parent=15 // pred_check
        %p196 = pneg %p96
      $region26: #{_lambda_.13} parent=15 // pred_check_branch
        %198 = sbr.rel (%p196) target = $region28
      $region27: #{_lambda_.13} parent=15 // pred_region
        %p199 = scmp.lt.s32.totalorder %s18, 3
        %s200 = scalar_select %p199, %s18, 3
        %s201 = scalar_lea.vmem %s2, %s200
      $region28: #{_lambda_.13} parent=15 // pred_fallthru
        _
      // Predicated region
      $region29: #{_lambda_.13} parent=15 // pred_check
        %p202 = pneg %p122
      $region30: #{_lambda_.13} parent=15 // pred_check_branch
        %204 = sbr.rel (%p202) target = $region32
      $region31: #{_lambda_.13} parent=15 // pred_region
        %p205 = scmp.lt.s32.totalorder %s18, 3
        %s206 = scalar_select %p205, %s18, 3
        %s207 = scalar_lea.vmem %s3, %s206
      $region32: #{_lambda_.13} parent=15 // pred_fallthru
        _
    $region16: #{_lambda_.13} parent=5 // pred_fallthru
      _
    %p208 = scmp.le.s32.totalorder 1, %s10
    %p209 = scmp.lt.s32.totalorder %s10, 5
    %p210 = pnand %p208, %p209
    %p211 = pneg %p210
    // Predicated region
    $region33: #{_lambda_.13} parent=5 // pred_check
      _
    $region34: #{_lambda_.13} parent=5 // pred_check_branch
      %213 = sbr.rel (%p210) target = $region36
    $region35: #{_lambda_.13} parent=5 // pred_region
      %s214 = ssub.s32 %s10, 1
      %s215 = smul.u32 16, %s19
      %p216 = scmp.lt.s32.totalorder %s20, 3
      %s217 = scalar_select %p216, %s20, 3
      %p218 = scmp.lt.s32.totalorder %s215, 15
      %s219 = scalar_select %p218, %s215, 15
      %s220 = smul.addr %s217, 16
      %s221 = sadd.s32 %s219, %s220
      %s222 = smul.addr %s221, 4
      %s223 = scalar_lea.vmem %s0, %s222
      %p224 = pneg %p50
      %p225 = pneg %p47
      %p226 = scmp.lt.s32.totalorder %s20, 3
      %s227 = scalar_select %p226, %s20, 3
      %s228 = smul.addr %s227, 5
      %s229 = smul.addr %s228, 4
      %s230 = scalar_lea.vmem %s1, %s229
      %p231 = pneg %p76
      %p232 = pneg %p73
      %p233 = scmp.lt.s32.totalorder %s20, 3
      %s234 = scalar_select %p233, %s20, 3
      %s235 = scalar_lea.vmem %s2, %s234
      %p236 = pneg %p102
      %p237 = pneg %p99
      %p238 = scmp.lt.s32.totalorder %s20, 3
      %s239 = scalar_select %p238, %s20, 3
      %s240 = scalar_lea.vmem %s3, %s239
      %p241 = pneg %p128
      %p242 = pneg %p125
      %p243 = pneg %p156
      %p244 = pneg %p153
      %s245 = smul.u32 16, %s19
      %p246 = scmp.lt.s32.totalorder %s20, 3
      %s247 = scalar_select %p246, %s20, 3
      %p248 = scmp.lt.s32.totalorder %s245, 15
      %s249 = scalar_select %p248, %s245, 15
      %s250 = smul.addr %s247, 16
      %s251 = sadd.s32 %s249, %s250
      %s252 = smul.addr %s251, 8
      %s253 = scalar_lea.vmem %s4, %s252
      %s254 = smul.u32 16, %s19
      %p255 = scmp.lt.s32.totalorder %s20, 3
      %s256 = scalar_select %p255, %s20, 3
      %p257 = scmp.lt.s32.totalorder %s254, 15
      %s258 = scalar_select %p257, %s254, 15
      %s259 = smul.addr %s256, 16
      %s260 = sadd.s32 %s258, %s259
      %s261 = smul.addr %s260, 4
      %s262 = scalar_lea.vmem %s0, %s261
      %s263 = smul.u32 16, %s19
      %p264 = scmp.lt.s32.totalorder %s20, 3
      %s265 = scalar_select %p264, %s20, 3
      %s266 = smul.addr %s265, 5
      %s267 = smul.addr %s266, 4
      %s268 = scalar_lea.vmem %s1, %s267
      %p269 = scmp.lt.s32.totalorder %s20, 3
      %s270 = scalar_select %p269, %s20, 3
      %s271 = scalar_lea.vmem %s2, %s270
      %p272 = scmp.lt.s32.totalorder %s20, 3
      %s273 = scalar_select %p272, %s20, 3
      %s274 = scalar_lea.vmem %s3, %s273
      %s275 = smul.u32 16, %s19
      %p276 = scmp.lt.s32.totalorder %s20, 3
      %s277 = scalar_select %p276, %s20, 3
      %p278 = scmp.lt.s32.totalorder %s275, 15
      %s279 = scalar_select %p278, %s275, 15
      %s280 = smul.addr %s277, 16
      %s281 = sadd.s32 %s279, %s280
      %s282 = smul.addr %s281, 8
      %s283 = scalar_lea.vmem %s4, %s282
      %s284 = smul.u32 16, %s19
      %v286 = vld [vmem:[%s262] sm:$0xf]
      %v287 = vld [vmem:[%s262 + $0x4] sm:$0xf]
      %v288 = vld [vmem:[%s262 + $0x8] sm:$0xf]
      %v289 = vld [vmem:[%s262 + $0xc] sm:$0xf]
      %v290 = vld [vmem:[%s262 + $0x10] sm:$0xf]
      %v291 = vld [vmem:[%s262 + $0x14] sm:$0xf]
      %v292 = vld [vmem:[%s262 + $0x18] sm:$0xf]
      %v293 = vld [vmem:[%s262 + $0x1c] sm:$0xf]
      %v294 = vld [vmem:[%s262 + $0x20] sm:$0xf]
      %v295 = vld [vmem:[%s262 + $0x24] sm:$0xf]
      %v296 = vld [vmem:[%s262 + $0x28] sm:$0xf]
      %v297 = vld [vmem:[%s262 + $0x2c] sm:$0xf]
      %v298 = vld [vmem:[%s262 + $0x30] sm:$0xf]
      %v299 = vld [vmem:[%s262 + $0x34] sm:$0xf]
      %v300 = vld [vmem:[%s262 + $0x38] sm:$0xf]
      %v301 = vld [vmem:[%s262 + $0x3c] sm:$0xf]
      %v302 = vld [vmem:[%s268] sm:$0xf]
      %v303 = vld [vmem:[%s268 + $0x4] sm:$0xf]
      %v304 = vld [vmem:[%s268 + $0x8] sm:$0xf]
      %v305 = vld [vmem:[%s268 + $0xc] sm:$0xf]
      %v306 = vld [vmem:[%s268 + $0x10] sm:$0x3]
      %v323 = vunpack.c.l.b16 %v286
      %v324 = vunpack.c.l.b16 %v287
      %v325 = vunpack.c.l.b16 %v288
      %v326 = vunpack.c.l.b16 %v289
      %v327 = vunpack.c.l.b16 %v290
      %v328 = vunpack.c.l.b16 %v291
      %v329 = vunpack.c.l.b16 %v292
      %v330 = vunpack.c.l.b16 %v293
      %v331 = vunpack.c.l.b16 %v294
      %v332 = vunpack.c.l.b16 %v295
      %v333 = vunpack.c.l.b16 %v296
      %v334 = vunpack.c.l.b16 %v297
      %v335 = vunpack.c.l.b16 %v298
      %v336 = vunpack.c.l.b16 %v299
      %v337 = vunpack.c.l.b16 %v300
      %v338 = vunpack.c.l.b16 %v301
      %v339 = vpack.c.b16 %v324, %v323
      %v340 = vpack.c.b16 %v326, %v325
      %v341 = vpack.c.b16 %v328, %v327
      %v342 = vpack.c.b16 %v330, %v329
      %v343 = vpack.c.b16 %v332, %v331
      %v344 = vpack.c.b16 %v334, %v333
      %v345 = vpack.c.b16 %v336, %v335
      %v346 = vpack.c.b16 %v338, %v337
      %v352 = vunpack.c.l.b16 %v302
      %v353 = vunpack.c.l.b16 %v303
      %v354 = vunpack.c.l.b16 %v304
      %v355 = vunpack.c.l.b16 %v305
      %v356 = vunpack.c.l.b16 %v306
      %v357 = vpack.c.b16 %v353, %v352
      %v358 = vpack.c.b16 %v355, %v354
      %v359 = vpack.c.b16 %v356, %v356
      %vm362 = vcmask 293888
      %v364 = vsel %vm362, %v339, 0
      %v367 = vsel %vm362, %v340, 0
      %v370 = vsel %vm362, %v341, 0
      %v373 = vsel %vm362, %v342, 0
      %v376 = vsel %vm362, %v343, 0
      %v379 = vsel %vm362, %v344, 0
      %v382 = vsel %vm362, %v345, 0
      %v385 = vsel %vm362, %v346, 0
      %vm387 = vcmask 1041408
      %v389 = vsel %vm387, %v359, 0
      %391 = vmatprep.subr.bf16.mxu0 0
      %392 = vmatpush1.bf16.msra.mxu0 %v357
      %393 = vmatprep.subr.bf16.mxu0 0
      %394 = vmatpush1.bf16.msra.mxu0 %v358
      %395 = vmatprep.subr.bf16.mxu0 0
      %396 = vmatpush1.bf16.msra.mxu0 %v389
      %397 = vmatprep.subr.bf16.mxu0 0
      %398 = vmatpush1.bf16.msra.mxu0 0
      %399 = vmatprep.subr.bf16.mxu0 0
      %400 = vmatpush1.bf16.msra.mxu0 0
      %401 = vmatprep.subr.bf16.mxu0 0
      %402 = vmatpush1.bf16.msra.mxu0 0
      %403 = vmatprep.subr.bf16.mxu0 0
      %404 = vmatpush1.bf16.msra.mxu0 0
      %405 = vmatprep.subr.bf16.mxu0 0
      %406 = vmatpush1.bf16.msra.mxu0 0
      %407 = vmatprep.subr.bf16.mxu0 0
      %408 = vmatpush1.bf16.msra.mxu0 0
      %409 = vmatprep.subr.bf16.mxu0 0
      %410 = vmatpush1.bf16.msra.mxu0 0
      %411 = vmatprep.subr.bf16.mxu0 0
      %412 = vmatpush1.bf16.msra.mxu0 0
      %413 = vmatprep.subr.bf16.mxu0 0
      %414 = vmatpush1.bf16.msra.mxu0 0
      %415 = vmatprep.subr.bf16.mxu0 0
      %416 = vmatpush1.bf16.msra.mxu0 0
      %417 = vmatprep.subr.bf16.mxu0 0
      %418 = vmatpush1.bf16.msra.mxu0 0
      %419 = vmatprep.subr.bf16.mxu0 0
      %420 = vmatpush1.bf16.msra.mxu0 0
      %421 = vmatprep.subr.bf16.mxu0 0
      %422 = vmatpush1.bf16.msra.mxu0 0
      %423 = vmatprep.mubr.bf16.mxu0 0
      %424 = vmatmul.mubr.bf16.gmra.mrb[0].mxu0 %v364
      %v425 = vpop.f32.mrb[0].mxu0
      %v426 = vadd.f32 0.0, %v425
      %v427 = vpop.f32.mrb[0].mxu0
      %v428 = vpop.f32.mrb[0].mxu0
      %v429 = vadd.f32 0.0, %v428
      %v430 = vpop.f32.mrb[0].mxu0
      %431 = vmatprep.mubr.bf16.mxu0 0
      %432 = vmatmul.mubr.bf16.gmra.mrb[0].mxu0 %v367
      %v433 = vpop.f32.mrb[0].mxu0
      %v434 = vadd.f32 0.0, %v433
      %v435 = vpop.f32.mrb[0].mxu0
      %v436 = vpop.f32.mrb[0].mxu0
      %v437 = vadd.f32 0.0, %v436
      %v438 = vpop.f32.mrb[0].mxu0
      %439 = vmatprep.mubr.bf16.mxu0 0
      %440 = vmatmul.mubr.bf16.gmra.mrb[0].mxu0 %v370
      %v441 = vpop.f32.mrb[0].mxu0
      %v442 = vadd.f32 0.0, %v441
      %v443 = vpop.f32.mrb[0].mxu0
      %v444 = vpop.f32.mrb[0].mxu0
      %v445 = vadd.f32 0.0, %v444
      %v446 = vpop.f32.mrb[0].mxu0
      %447 = vmatprep.mubr.bf16.mxu0 0
      %448 = vmatmul.mubr.bf16.gmra.mrb[0].mxu0 %v373
      %v449 = vpop.f32.mrb[0].mxu0
      %v450 = vadd.f32 0.0, %v449
      %v451 = vpop.f32.mrb[0].mxu0
      %v452 = vpop.f32.mrb[0].mxu0
      %v453 = vadd.f32 0.0, %v452
      %v454 = vpop.f32.mrb[0].mxu0
      %455 = vmatprep.mubr.bf16.mxu0 0
      %456 = vmatmul.mubr.bf16.gmra.mrb[0].mxu0 %v376
      %v457 = vpop.f32.mrb[0].mxu0
      %v458 = vadd.f32 0.0, %v457
      %v459 = vpop.f32.mrb[0].mxu0
      %v460 = vpop.f32.mrb[0].mxu0
      %v461 = vadd.f32 0.0, %v460
      %v462 = vpop.f32.mrb[0].mxu0
      %463 = vmatprep.mubr.bf16.mxu0 0
      %464 = vmatmul.mubr.bf16.gmra.mrb[0].mxu0 %v379
      %v465 = vpop.f32.mrb[0].mxu0
      %v466 = vadd.f32 0.0, %v465
      %v467 = vpop.f32.mrb[0].mxu0
      %v468 = vpop.f32.mrb[0].mxu0
      %v469 = vadd.f32 0.0, %v468
      %v470 = vpop.f32.mrb[0].mxu0
      %471 = vmatprep.mubr.bf16.mxu0 0
      %472 = vmatmul.mubr.bf16.gmra.mrb[0].mxu0 %v382
      %v473 = vpop.f32.mrb[0].mxu0
      %v474 = vadd.f32 0.0, %v473
      %v475 = vpop.f32.mrb[0].mxu0
      %v476 = vpop.f32.mrb[0].mxu0
      %v477 = vadd.f32 0.0, %v476
      %v478 = vpop.f32.mrb[0].mxu0
      %479 = vmatprep.mubr.bf16.mxu0 0
      %480 = vmatmul.mubr.bf16.gmra.mrb[0].mxu0 %v385
      %v481 = vpop.f32.mrb[0].mxu0
      %v482 = vadd.f32 0.0, %v481
      %v483 = vpop.f32.mrb[0].mxu0
      %v484 = vpop.f32.mrb[0].mxu0
      %v485 = vadd.f32 0.0, %v484
      %v486 = vpop.f32.mrb[0].mxu0
      %487 = vdwg.mxu0
      %v488 = vld [vmem:[%s271] sm:$0x1]
      %v490 = vlaneseq
      %v491 = vshrl.u32 %v490, 7
      %v492 = vsub.s32 0, %v491
      %v493 = vrot.slane %v488, %v492
      %v495 = vmul.f32 %v426, %v493
      %v496 = vmul.f32 %v429, %v493
      %v497 = vmul.f32 %v434, %v493
      %v498 = vmul.f32 %v437, %v493
      %v499 = vmul.f32 %v442, %v493
      %v500 = vmul.f32 %v445, %v493
      %v501 = vmul.f32 %v450, %v493
      %v502 = vmul.f32 %v453, %v493
      %v503 = vmul.f32 %v458, %v493
      %v504 = vmul.f32 %v461, %v493
      %v505 = vmul.f32 %v466, %v493
      %v506 = vmul.f32 %v469, %v493
      %v507 = vmul.f32 %v474, %v493
      %v508 = vmul.f32 %v477, %v493
      %v509 = vmul.f32 %v482, %v493
      %v510 = vmul.f32 %v485, %v493
      %v511 = vld [vmem:[%s274] sm:$0x1]
      %v513 = vlaneseq
      %v514 = vshrl.u32 %v513, 7
      %v515 = vsub.s32 0, %v514
      %v516 = vrot.slane %v511, %v515
      %v518 = vadd.f32 %v495, %v516
      %v519 = vadd.f32 %v496, %v516
      %v520 = vadd.f32 %v497, %v516
      %v521 = vadd.f32 %v498, %v516
      %v522 = vadd.f32 %v499, %v516
      %v523 = vadd.f32 %v500, %v516
      %v524 = vadd.f32 %v501, %v516
      %v525 = vadd.f32 %v502, %v516
      %v526 = vadd.f32 %v503, %v516
      %v527 = vadd.f32 %v504, %v516
      %v528 = vadd.f32 %v505, %v516
      %v529 = vadd.f32 %v506, %v516
      %v530 = vadd.f32 %v507, %v516
      %v531 = vadd.f32 %v508, %v516
      %v532 = vadd.f32 %v509, %v516
      %v533 = vadd.f32 %v510, %v516
      %v534 = vmax.f32 %v518, 0.0
      %v535 = vmax.f32 %v519, 0.0
      %v536 = vmax.f32 %v520, 0.0
      %v537 = vmax.f32 %v521, 0.0
      %v538 = vmax.f32 %v522, 0.0
      %v539 = vmax.f32 %v523, 0.0
      %v540 = vmax.f32 %v524, 0.0
      %v541 = vmax.f32 %v525, 0.0
      %v542 = vmax.f32 %v526, 0.0
      %v543 = vmax.f32 %v527, 0.0
      %v544 = vmax.f32 %v528, 0.0
      %v545 = vmax.f32 %v529, 0.0
      %v546 = vmax.f32 %v530, 0.0
      %v547 = vmax.f32 %v531, 0.0
      %v548 = vmax.f32 %v532, 0.0
      %v549 = vmax.f32 %v533, 0.0
      %vm550 = vcmask 31744
      %551 = vst.msk [vmem:[%s283] sm:$0xff] %vm550, %v534
      %552 = vst.msk [vmem:[%s283 + $0x8] sm:$0xff] %vm550, %v535
      %553 = vst.msk [vmem:[%s283 + $0x10] sm:$0xff] %vm550, %v536
      %554 = vst.msk [vmem:[%s283 + $0x18] sm:$0xff] %vm550, %v537
      %555 = vst.msk [vmem:[%s283 + $0x20] sm:$0xff] %vm550, %v538
      %556 = vst.msk [vmem:[%s283 + $0x28] sm:$0xff] %vm550, %v539
      %557 = vst.msk [vmem:[%s283 + $0x30] sm:$0xff] %vm550, %v540
      %558 = vst.msk [vmem:[%s283 + $0x38] sm:$0xff] %vm550, %v541
      %559 = vst.msk [vmem:[%s283 + $0x40] sm:$0xff] %vm550, %v542
      %560 = vst.msk [vmem:[%s283 + $0x48] sm:$0xff] %vm550, %v543
      %561 = vst.msk [vmem:[%s283 + $0x50] sm:$0xff] %vm550, %v544
      %562 = vst.msk [vmem:[%s283 + $0x58] sm:$0xff] %vm550, %v545
      %563 = vst.msk [vmem:[%s283 + $0x60] sm:$0xff] %vm550, %v546
      %564 = vst.msk [vmem:[%s283 + $0x68] sm:$0xff] %vm550, %v547
      %565 = vst.msk [vmem:[%s283 + $0x70] sm:$0xff] %vm550, %v548
      %566 = vst.msk [vmem:[%s283 + $0x78] sm:$0xff] %vm550, %v549
      %s567 = smul.u32 16, %s19
      %p568 = scmp.lt.s32.totalorder %s20, 3
      %s569 = scalar_select %p568, %s20, 3
      %p570 = scmp.lt.s32.totalorder %s567, 15
      %s571 = scalar_select %p570, %s567, 15
      %s572 = smul.addr %s569, 16
      %s573 = sadd.s32 %s571, %s572
      %s574 = smul.addr %s573, 8
      %s575 = scalar_lea.vmem %s4, %s574
      // Predicated region
      $region37: #{_lambda_.13} parent=35 // pred_check
        %p576 = pneg %p153
      $region38: #{_lambda_.13} parent=35 // pred_check_branch
        %578 = sbr.rel (%p576) target = $region40
      $region39: #{_lambda_.13} parent=35 // pred_region
        %s579 = smul.u32 16, %s19
      $region40: #{_lambda_.13} parent=35 // pred_fallthru
        _
    $region36: #{_lambda_.13} parent=5 // pred_fallthru
      _
    %p580 = scmp.le.s32.totalorder 2, %s10
    // Predicated region
    $region41: #{_lambda_.13} parent=5 // pred_check
      %p581 = pneg %p580
    $region42: #{_lambda_.13} parent=5 // pred_check_branch
      %583 = sbr.rel (%p581) target = $region44
    $region43: #{_lambda_.13} parent=5 // pred_region
      %s584 = ssub.s32 %s10, 2
      // Predicated region
      $region45: #{_lambda_.13} parent=43 // pred_check
        %p585 = pneg %p159
      $region46: #{_lambda_.13} parent=43 // pred_check_branch
        %587 = sbr.rel (%p585) target = $region48
      $region47: #{_lambda_.13} parent=43 // pred_region
        %s588 = smul.u32 16, %s21
        %p589 = scmp.lt.s32.totalorder %s22, 3
        %s590 = scalar_select %p589, %s22, 3
        %p591 = scmp.lt.s32.totalorder %s588, 15
        %s592 = scalar_select %p591, %s588, 15
        %s593 = smul.addr %s590, 16
        %s594 = sadd.s32 %s592, %s593
        %s595 = smul.addr %s594, 8
        %s596 = scalar_lea.vmem %s4, %s595
      $region48: #{_lambda_.13} parent=43 // pred_fallthru
        _
    $region44: #{_lambda_.13} parent=5 // pred_fallthru
      _
  $region6: #{_lambda_.13} parent=0 // loop_footer
    %s14 = sadd.s32 1, %s10
  $region7: #{_lambda_.13} parent=0 // loop_footer_branch
    %9 = sbr.rel target = $region3
  $region8: #{_lambda_.13} parent=0 // loop_exit
    _

// kernel: _lambda_.14
$region0: #{_lambda_.14}
  #allocation0 [shape = 'u32[]', space=smem, size = 0x4, offset = 0x4, fixed_abs, tag = 'smem constant byte address 0x4 - core index']
  #allocation1 [shape = 'u32[144,128]{1,0:T(1,128)}', space=vmem, size = 0x12000, scoped, tag = 'internal scratch']
  #allocation2 [shape = 'f32[128,32]{1,0:T(8,128)}', space=vmem, size = 0x10000, scoped, tag = 'scratch operand']
  %s0 = inlined_call_operand.vmem [shape: bf16[128,16], index: 0, kind: input, shape index: {}]
  %s1 = inlined_call_operand.vmem [shape: bf16[16,32], index: 1, kind: input, shape index: {}]
  %s2 = inlined_call_operand.vmem [shape: f32[1,32], index: 2, kind: input, shape index: {}]
  %s3 = inlined_call_operand.vmem [shape: f32[1,32], index: 3, kind: input, shape index: {}]
  %s4 = inlined_call_operand.vmem [shape: f32[128,32], index: 4, kind: output, shape index: {}]
  %s5 = sld [smem:[#allocation0]]
  $region34: #{_lambda_.14} parent=0
    _
  %s7 = ssub.s32 1, %s5
  %s8 = scalar_select 0, %s7, %s5
  // Predicated region
  $region2: #{_lambda_.14} parent=0 // pred_check
    _
  $region3: #{_lambda_.14} parent=0 // pred_check_branch
    %10 = sbr.rel (0) target = $region5
  $region4: #{_lambda_.14} parent=0 // pred_region
    _
  $region5: #{_lambda_.14} parent=0 // pred_fallthru
    _
  // Predicated region
  $region6: #{_lambda_.14} parent=0 // pred_check
    _
  $region7: #{_lambda_.14} parent=0 // pred_check_branch
    %12 = sbr.rel (0) target = $region9
  $region8: #{_lambda_.14} parent=0 // pred_region
    _
  $region9: #{_lambda_.14} parent=0 // pred_fallthru
    _
  // Predicated region
  $region10: #{_lambda_.14} parent=0 // pred_check
    _
  $region11: #{_lambda_.14} parent=0 // pred_check_branch
    %14 = sbr.rel (0) target = $region13
  $region12: #{_lambda_.14} parent=0 // pred_region
    _
  $region13: #{_lambda_.14} parent=0 // pred_fallthru
    _
  // Predicated region
  $region14: #{_lambda_.14} parent=0 // pred_check
    _
  $region15: #{_lambda_.14} parent=0 // pred_check_branch
    %16 = sbr.rel (0) target = $region17
  $region16: #{_lambda_.14} parent=0 // pred_region
    _
  $region17: #{_lambda_.14} parent=0 // pred_fallthru
    _
  %p18 = scmp.eq.s32.totalorder 0, 0
  // Predicated region
  $region18: #{_lambda_.14} parent=0 // pred_check
    %p19 = pneg %p18
  $region19: #{_lambda_.14} parent=0 // pred_check_branch
    %21 = sbr.rel (%p19) target = $region21
  $region20: #{_lambda_.14} parent=0 // pred_region
    %vm22 = vcmask 261120
    %23 = vst.msk [vmem:[#allocation2] sm:$0xff] %vm22, 0.0
    %24 = vst.msk [vmem:[#allocation2 + $0x8] sm:$0xff] %vm22, 0.0
    %25 = vst.msk [vmem:[#allocation2 + $0x10] sm:$0xff] %vm22, 0.0
    %26 = vst.msk [vmem:[#allocation2 + $0x18] sm:$0xff] %vm22, 0.0
    %27 = vst.msk [vmem:[#allocation2 + $0x20] sm:$0xff] %vm22, 0.0
    %28 = vst.msk [vmem:[#allocation2 + $0x28] sm:$0xff] %vm22, 0.0
    %29 = vst.msk [vmem:[#allocation2 + $0x30] sm:$0xff] %vm22, 0.0
    %30 = vst.msk [vmem:[#allocation2 + $0x38] sm:$0xff] %vm22, 0.0
    %31 = vst.msk [vmem:[#allocation2 + $0x40] sm:$0xff] %vm22, 0.0
    %32 = vst.msk [vmem:[#allocation2 + $0x48] sm:$0xff] %vm22, 0.0
    %33 = vst.msk [vmem:[#allocation2 + $0x50] sm:$0xff] %vm22, 0.0
    %34 = vst.msk [vmem:[#allocation2 + $0x58] sm:$0xff] %vm22, 0.0
    %35 = vst.msk [vmem:[#allocation2 + $0x60] sm:$0xff] %vm22, 0.0
    %36 = vst.msk [vmem:[#allocation2 + $0x68] sm:$0xff] %vm22, 0.0
    %37 = vst.msk [vmem:[#allocation2 + $0x70] sm:$0xff] %vm22, 0.0
    %38 = vst.msk [vmem:[#allocation2 + $0x78] sm:$0xff] %vm22, 0.0
  $region21: #{_lambda_.14} parent=0 // pred_fallthru
    _
  %v39 = vld [vmem:[#allocation2] sm:$0xff]
  %v40 = vld [vmem:[#allocation2 + $0x8] sm:$0xff]
  %v41 = vld [vmem:[#allocation2 + $0x10] sm:$0xff]
  %v42 = vld [vmem:[#allocation2 + $0x18] sm:$0xff]
  %v43 = vld [vmem:[#allocation2 + $0x20] sm:$0xff]
  %v44 = vld [vmem:[#allocation2 + $0x28] sm:$0xff]
  %v45 = vld [vmem:[#allocation2 + $0x30] sm:$0xff]
  %v46 = vld [vmem:[#allocation2 + $0x38] sm:$0xff]
  %v47 = vld [vmem:[#allocation2 + $0x40] sm:$0xff]
  %v48 = vld [vmem:[#allocation2 + $0x48] sm:$0xff]
  %v49 = vld [vmem:[#allocation2 + $0x50] sm:$0xff]
  %v50 = vld [vmem:[#allocation2 + $0x58] sm:$0xff]
  %v51 = vld [vmem:[#allocation2 + $0x60] sm:$0xff]
  %v52 = vld [vmem:[#allocation2 + $0x68] sm:$0xff]
  %v53 = vld [vmem:[#allocation2 + $0x70] sm:$0xff]
  %v54 = vld [vmem:[#allocation2 + $0x78] sm:$0xff]
  %v55 = vld [vmem:[%s0] sm:$0xf]
  %v56 = vld [vmem:[%s0 + $0x4] sm:$0xf]
  %v57 = vld [vmem:[%s0 + $0x8] sm:$0xf]
  %v58 = vld [vmem:[%s0 + $0xc] sm:$0xf]
  %v59 = vld [vmem:[%s0 + $0x10] sm:$0xf]
  %v60 = vld [vmem:[%s0 + $0x14] sm:$0xf]
  %v61 = vld [vmem:[%s0 + $0x18] sm:$0xf]
  %v62 = vld [vmem:[%s0 + $0x1c] sm:$0xf]
  %v63 = vld [vmem:[%s0 + $0x20] sm:$0xf]
  %v64 = vld [vmem:[%s0 + $0x24] sm:$0xf]
  %v65 = vld [vmem:[%s0 + $0x28] sm:$0xf]
  %v66 = vld [vmem:[%s0 + $0x2c] sm:$0xf]
  %v67 = vld [vmem:[%s0 + $0x30] sm:$0xf]
  %v68 = vld [vmem:[%s0 + $0x34] sm:$0xf]
  %v69 = vld [vmem:[%s0 + $0x38] sm:$0xf]
  %v70 = vld [vmem:[%s0 + $0x3c] sm:$0xf]
  %v71 = vld [vmem:[%s1] sm:$0xf]
  %v72 = vld [vmem:[%s1 + $0x4] sm:$0xf]
  %v89 = vunpack.c.l.b16 %v55
  %v90 = vunpack.c.l.b16 %v56
  %v91 = vunpack.c.l.b16 %v57
  %v92 = vunpack.c.l.b16 %v58
  %v93 = vunpack.c.l.b16 %v59
  %v94 = vunpack.c.l.b16 %v60
  %v95 = vunpack.c.l.b16 %v61
  %v96 = vunpack.c.l.b16 %v62
  %v97 = vunpack.c.l.b16 %v63
  %v98 = vunpack.c.l.b16 %v64
  %v99 = vunpack.c.l.b16 %v65
  %v100 = vunpack.c.l.b16 %v66
  %v101 = vunpack.c.l.b16 %v67
  %v102 = vunpack.c.l.b16 %v68
  %v103 = vunpack.c.l.b16 %v69
  %v104 = vunpack.c.l.b16 %v70
  %v105 = vpack.c.b16 %v90, %v89
  %v106 = vpack.c.b16 %v92, %v91
  %v107 = vpack.c.b16 %v94, %v93
  %v108 = vpack.c.b16 %v96, %v95
  %v109 = vpack.c.b16 %v98, %v97
  %v110 = vpack.c.b16 %v100, %v99
  %v111 = vpack.c.b16 %v102, %v101
  %v112 = vpack.c.b16 %v104, %v103
  %v115 = vunpack.c.l.b16 %v71
  %v116 = vunpack.c.l.b16 %v72
  %v117 = vpack.c.b16 %v116, %v115
  %vm119 = vcmask 130048
  %v121 = vsel %vm119, %v105, 0
  %v124 = vsel %vm119, %v106, 0
  %v127 = vsel %vm119, %v107, 0
  %v130 = vsel %vm119, %v108, 0
  %v133 = vsel %vm119, %v109, 0
  %v136 = vsel %vm119, %v110, 0
  %v139 = vsel %vm119, %v111, 0
  %v142 = vsel %vm119, %v112, 0
  %144 = vmatprep.subr.bf16.mxu0 0
  %145 = vmatpush1.bf16.msra.mxu0 %v117
  %146 = vmatprep.subr.bf16.mxu0 0
  %147 = vmatpush1.bf16.msra.mxu0 0
  %148 = vmatprep.subr.bf16.mxu0 0
  %149 = vmatpush1.bf16.msra.mxu0 0
  %150 = vmatprep.subr.bf16.mxu0 0
  %151 = vmatpush1.bf16.msra.mxu0 0
  %152 = vmatprep.subr.bf16.mxu0 0
  %153 = vmatpush1.bf16.msra.mxu0 0
  %154 = vmatprep.subr.bf16.mxu0 0
  %155 = vmatpush1.bf16.msra.mxu0 0
  %156 = vmatprep.subr.bf16.mxu0 0
  %157 = vmatpush1.bf16.msra.mxu0 0
  %158 = vmatprep.subr.bf16.mxu0 0
  %159 = vmatpush1.bf16.msra.mxu0 0
  %160 = vmatprep.subr.bf16.mxu0 0
  %161 = vmatpush1.bf16.msra.mxu0 0
  %162 = vmatprep.subr.bf16.mxu0 0
  %163 = vmatpush1.bf16.msra.mxu0 0
  %164 = vmatprep.subr.bf16.mxu0 0
  %165 = vmatpush1.bf16.msra.mxu0 0
  %166 = vmatprep.subr.bf16.mxu0 0
  %167 = vmatpush1.bf16.msra.mxu0 0
  %168 = vmatprep.subr.bf16.mxu0 0
  %169 = vmatpush1.bf16.msra.mxu0 0
  %170 = vmatprep.subr.bf16.mxu0 0
  %171 = vmatpush1.bf16.msra.mxu0 0
  %172 = vmatprep.subr.bf16.mxu0 0
  %173 = vmatpush1.bf16.msra.mxu0 0
  %174 = vmatprep.subr.bf16.mxu0 0
  %175 = vmatpush1.bf16.msra.mxu0 0
  %176 = vmatprep.mubr.bf16.mxu0 0
  %177 = vmatmul.mubr.bf16.gmra.mrb[0].mxu0 %v121
  %v178 = vpop.f32.mrb[0].mxu0
  %v179 = vadd.f32 0.0, %v178
  %v180 = vpop.f32.mrb[0].mxu0
  %v181 = vpop.f32.mrb[0].mxu0
  %v182 = vadd.f32 0.0, %v181
  %v183 = vpop.f32.mrb[0].mxu0
  %184 = vmatprep.mubr.bf16.mxu0 0
  %185 = vmatmul.mubr.bf16.gmra.mrb[0].mxu0 %v124
  %v186 = vpop.f32.mrb[0].mxu0
  %v187 = vadd.f32 0.0, %v186
  %v188 = vpop.f32.mrb[0].mxu0
  %v189 = vpop.f32.mrb[0].mxu0
  %v190 = vadd.f32 0.0, %v189
  %v191 = vpop.f32.mrb[0].mxu0
  %192 = vmatprep.mubr.bf16.mxu0 0
  %193 = vmatmul.mubr.bf16.gmra.mrb[0].mxu0 %v127
  %v194 = vpop.f32.mrb[0].mxu0
  %v195 = vadd.f32 0.0, %v194
  %v196 = vpop.f32.mrb[0].mxu0
  %v197 = vpop.f32.mrb[0].mxu0
  %v198 = vadd.f32 0.0, %v197
  %v199 = vpop.f32.mrb[0].mxu0
  %200 = vmatprep.mubr.bf16.mxu0 0
  %201 = vmatmul.mubr.bf16.gmra.mrb[0].mxu0 %v130
  %v202 = vpop.f32.mrb[0].mxu0
  %v203 = vadd.f32 0.0, %v202
  %v204 = vpop.f32.mrb[0].mxu0
  %v205 = vpop.f32.mrb[0].mxu0
  %v206 = vadd.f32 0.0, %v205
  %v207 = vpop.f32.mrb[0].mxu0
  %208 = vmatprep.mubr.bf16.mxu0 0
  %209 = vmatmul.mubr.bf16.gmra.mrb[0].mxu0 %v133
  %v210 = vpop.f32.mrb[0].mxu0
  %v211 = vadd.f32 0.0, %v210
  %v212 = vpop.f32.mrb[0].mxu0
  %v213 = vpop.f32.mrb[0].mxu0
  %v214 = vadd.f32 0.0, %v213
  %v215 = vpop.f32.mrb[0].mxu0
  %216 = vmatprep.mubr.bf16.mxu0 0
  %217 = vmatmul.mubr.bf16.gmra.mrb[0].mxu0 %v136
  %v218 = vpop.f32.mrb[0].mxu0
  %v219 = vadd.f32 0.0, %v218
  %v220 = vpop.f32.mrb[0].mxu0
  %v221 = vpop.f32.mrb[0].mxu0
  %v222 = vadd.f32 0.0, %v221
  %v223 = vpop.f32.mrb[0].mxu0
  %224 = vmatprep.mubr.bf16.mxu0 0
  %225 = vmatmul.mubr.bf16.gmra.mrb[0].mxu0 %v139
  %v226 = vpop.f32.mrb[0].mxu0
  %v227 = vadd.f32 0.0, %v226
  %v228 = vpop.f32.mrb[0].mxu0
  %v229 = vpop.f32.mrb[0].mxu0
  %v230 = vadd.f32 0.0, %v229
  %v231 = vpop.f32.mrb[0].mxu0
  %232 = vmatprep.mubr.bf16.mxu0 0
  %233 = vmatmul.mubr.bf16.gmra.mrb[0].mxu0 %v142
  %v234 = vpop.f32.mrb[0].mxu0
  %v235 = vadd.f32 0.0, %v234
  %v236 = vpop.f32.mrb[0].mxu0
  %v237 = vpop.f32.mrb[0].mxu0
  %v238 = vadd.f32 0.0, %v237
  %v239 = vpop.f32.mrb[0].mxu0
  %240 = vdwg.mxu0
  %v241 = vadd.f32 %v39, %v179
  %v242 = vadd.f32 %v40, %v182
  %v243 = vadd.f32 %v41, %v187
  %v244 = vadd.f32 %v42, %v190
  %v245 = vadd.f32 %v43, %v195
  %v246 = vadd.f32 %v44, %v198
  %v247 = vadd.f32 %v45, %v203
  %v248 = vadd.f32 %v46, %v206
  %v249 = vadd.f32 %v47, %v211
  %v250 = vadd.f32 %v48, %v214
  %v251 = vadd.f32 %v49, %v219
  %v252 = vadd.f32 %v50, %v222
  %v253 = vadd.f32 %v51, %v227
  %v254 = vadd.f32 %v52, %v230
  %v255 = vadd.f32 %v53, %v235
  %v256 = vadd.f32 %v54, %v238
  %vm257 = vcmask 261120
  %258 = vst.msk [vmem:[#allocation2] sm:$0xff] %vm257, %v241
  %259 = vst.msk [vmem:[#allocation2 + $0x8] sm:$0xff] %vm257, %v242
  %260 = vst.msk [vmem:[#allocation2 + $0x10] sm:$0xff] %vm257, %v243
  %261 = vst.msk [vmem:[#allocation2 + $0x18] sm:$0xff] %vm257, %v244
  %262 = vst.msk [vmem:[#allocation2 + $0x20] sm:$0xff] %vm257, %v245
  %263 = vst.msk [vmem:[#allocation2 + $0x28] sm:$0xff] %vm257, %v246
  %264 = vst.msk [vmem:[#allocation2 + $0x30] sm:$0xff] %vm257, %v247
  %265 = vst.msk [vmem:[#allocation2 + $0x38] sm:$0xff] %vm257, %v248
  %266 = vst.msk [vmem:[#allocation2 + $0x40] sm:$0xff] %vm257, %v249
  %267 = vst.msk [vmem:[#allocation2 + $0x48] sm:$0xff] %vm257, %v250
  %268 = vst.msk [vmem:[#allocation2 + $0x50] sm:$0xff] %vm257, %v251
  %269 = vst.msk [vmem:[#allocation2 + $0x58] sm:$0xff] %vm257, %v252
  %270 = vst.msk [vmem:[#allocation2 + $0x60] sm:$0xff] %vm257, %v253
  %271 = vst.msk [vmem:[#allocation2 + $0x68] sm:$0xff] %vm257, %v254
  %272 = vst.msk [vmem:[#allocation2 + $0x70] sm:$0xff] %vm257, %v255
  %273 = vst.msk [vmem:[#allocation2 + $0x78] sm:$0xff] %vm257, %v256
  // Predicated region
  $region22: #{_lambda_.14} parent=0 // pred_check
    %p274 = pneg %p18
  $region23: #{_lambda_.14} parent=0 // pred_check_branch
    %276 = sbr.rel (%p274) target = $region25
  $region24: #{_lambda_.14} parent=0 // pred_region
    %v277 = vld [vmem:[#allocation2] sm:$0xff]
    %v278 = vld [vmem:[#allocation2 + $0x8] sm:$0xff]
    %v279 = vld [vmem:[#allocation2 + $0x10] sm:$0xff]
    %v280 = vld [vmem:[#allocation2 + $0x18] sm:$0xff]
    %v281 = vld [vmem:[#allocation2 + $0x20] sm:$0xff]
    %v282 = vld [vmem:[#allocation2 + $0x28] sm:$0xff]
    %v283 = vld [vmem:[#allocation2 + $0x30] sm:$0xff]
    %v284 = vld [vmem:[#allocation2 + $0x38] sm:$0xff]
    %v285 = vld [vmem:[#allocation2 + $0x40] sm:$0xff]
    %v286 = vld [vmem:[#allocation2 + $0x48] sm:$0xff]
    %v287 = vld [vmem:[#allocation2 + $0x50] sm:$0xff]
    %v288 = vld [vmem:[#allocation2 + $0x58] sm:$0xff]
    %v289 = vld [vmem:[#allocation2 + $0x60] sm:$0xff]
    %v290 = vld [vmem:[#allocation2 + $0x68] sm:$0xff]
    %v291 = vld [vmem:[#allocation2 + $0x70] sm:$0xff]
    %v292 = vld [vmem:[#allocation2 + $0x78] sm:$0xff]
    %v293 = vld [vmem:[%s2] sm:$0x1]
    %v295 = vlaneseq
    %v296 = vshrl.u32 %v295, 7
    %v297 = vsub.s32 0, %v296
    %v298 = vrot.slane %v293, %v297
    %v300 = vmul.f32 %v277, %v298
    %v301 = vmul.f32 %v278, %v298
    %v302 = vmul.f32 %v279, %v298
    %v303 = vmul.f32 %v280, %v298
    %v304 = vmul.f32 %v281, %v298
    %v305 = vmul.f32 %v282, %v298
    %v306 = vmul.f32 %v283, %v298
    %v307 = vmul.f32 %v284, %v298
    %v308 = vmul.f32 %v285, %v298
    %v309 = vmul.f32 %v286, %v298
    %v310 = vmul.f32 %v287, %v298
    %v311 = vmul.f32 %v288, %v298
    %v312 = vmul.f32 %v289, %v298
    %v313 = vmul.f32 %v290, %v298
    %v314 = vmul.f32 %v291, %v298
    %v315 = vmul.f32 %v292, %v298
    %v316 = vld [vmem:[%s3] sm:$0x1]
    %v318 = vlaneseq
    %v319 = vshrl.u32 %v318, 7
    %v320 = vsub.s32 0, %v319
    %v321 = vrot.slane %v316, %v320
    %v323 = vadd.f32 %v300, %v321
    %v324 = vadd.f32 %v301, %v321
    %v325 = vadd.f32 %v302, %v321
    %v326 = vadd.f32 %v303, %v321
    %v327 = vadd.f32 %v304, %v321
    %v328 = vadd.f32 %v305, %v321
    %v329 = vadd.f32 %v306, %v321
    %v330 = vadd.f32 %v307, %v321
    %v331 = vadd.f32 %v308, %v321
    %v332 = vadd.f32 %v309, %v321
    %v333 = vadd.f32 %v310, %v321
    %v334 = vadd.f32 %v311, %v321
    %v335 = vadd.f32 %v312, %v321
    %v336 = vadd.f32 %v313, %v321
    %v337 = vadd.f32 %v314, %v321
    %v338 = vadd.f32 %v315, %v321
    %339 = vst.msk [vmem:[%s4] sm:$0xff] %vm257, %v323
    %340 = vst.msk [vmem:[%s4 + $0x8] sm:$0xff] %vm257, %v324
    %341 = vst.msk [vmem:[%s4 + $0x10] sm:$0xff] %vm257, %v325
    %342 = vst.msk [vmem:[%s4 + $0x18] sm:$0xff] %vm257, %v326
    %343 = vst.msk [vmem:[%s4 + $0x20] sm:$0xff] %vm257, %v327
    %344 = vst.msk [vmem:[%s4 + $0x28] sm:$0xff] %vm257, %v328
    %345 = vst.msk [vmem:[%s4 + $0x30] sm:$0xff] %vm257, %v329
    %346 = vst.msk [vmem:[%s4 + $0x38] sm:$0xff] %vm257, %v330
    %347 = vst.msk [vmem:[%s4 + $0x40] sm:$0xff] %vm257, %v331
    %348 = vst.msk [vmem:[%s4 + $0x48] sm:$0xff] %vm257, %v332
    %349 = vst.msk [vmem:[%s4 + $0x50] sm:$0xff] %vm257, %v333
    %350 = vst.msk [vmem:[%s4 + $0x58] sm:$0xff] %vm257, %v334
    %351 = vst.msk [vmem:[%s4 + $0x60] sm:$0xff] %vm257, %v335
    %352 = vst.msk [vmem:[%s4 + $0x68] sm:$0xff] %vm257, %v336
    %353 = vst.msk [vmem:[%s4 + $0x70] sm:$0xff] %vm257, %v337
    %354 = vst.msk [vmem:[%s4 + $0x78] sm:$0xff] %vm257, %v338
  $region25: #{_lambda_.14} parent=0 // pred_fallthru
    _
  // Predicated region
  $region26: #{_lambda_.14} parent=0 // pred_check
    _
  $region27: #{_lambda_.14} parent=0 // pred_check_branch
    %356 = sbr.rel (0) target = $region29
  $region28: #{_lambda_.14} parent=0 // pred_region
    _
  $region29: #{_lambda_.14} parent=0 // pred_fallthru
    _
  // Predicated region
  $region30: #{_lambda_.14} parent=0 // pred_check
    _
  $region31: #{_lambda_.14} parent=0 // pred_check_branch
    %358 = sbr.rel (0) target = $region33
  $region32: #{_lambda_.14} parent=0 // pred_region
    _
  $region33: #{_lambda_.14} parent=0 // pred_fallthru
    _

// kernel: _lambda_.16
$region0: #{_lambda_.16}
  #allocation0 [shape = 'u32[]', space=smem, size = 0x4, offset = 0x4, fixed_abs, tag = 'smem constant byte address 0x4 - core index']
  #allocation1 [shape = 'u32[144,128]{1,0:T(1,128)}', space=vmem, size = 0x12000, scoped, tag = 'internal scratch']
  #allocation2 [shape = 'f32[128,16]{1,0:T(8,128)}', space=vmem, size = 0x10000, scoped, tag = 'scratch operand']
  %s0 = inlined_call_operand.vmem [shape: bf16[128,32], index: 0, kind: input, shape index: {}]
  %s1 = inlined_call_operand.vmem [shape: bf16[32,16], index: 1, kind: input, shape index: {}]
  %s2 = inlined_call_operand.vmem [shape: f32[1,16], index: 2, kind: input, shape index: {}]
  %s3 = inlined_call_operand.vmem [shape: f32[1,16], index: 3, kind: input, shape index: {}]
  %s4 = inlined_call_operand.vmem [shape: f32[128,16], index: 4, kind: output, shape index: {}]
  %s5 = sld [smem:[#allocation0]]
  $region34: #{_lambda_.16} parent=0
    _
  %s7 = ssub.s32 1, %s5
  %s8 = scalar_select 0, %s7, %s5
  // Predicated region
  $region2: #{_lambda_.16} parent=0 // pred_check
    _
  $region3: #{_lambda_.16} parent=0 // pred_check_branch
    %10 = sbr.rel (0) target = $region5
  $region4: #{_lambda_.16} parent=0 // pred_region
    _
  $region5: #{_lambda_.16} parent=0 // pred_fallthru
    _
  // Predicated region
  $region6: #{_lambda_.16} parent=0 // pred_check
    _
  $region7: #{_lambda_.16} parent=0 // pred_check_branch
    %12 = sbr.rel (0) target = $region9
  $region8: #{_lambda_.16} parent=0 // pred_region
    _
  $region9: #{_lambda_.16} parent=0 // pred_fallthru
    _
  // Predicated region
  $region10: #{_lambda_.16} parent=0 // pred_check
    _
  $region11: #{_lambda_.16} parent=0 // pred_check_branch
    %14 = sbr.rel (0) target = $region13
  $region12: #{_lambda_.16} parent=0 // pred_region
    _
  $region13: #{_lambda_.16} parent=0 // pred_fallthru
    _
  // Predicated region
  $region14: #{_lambda_.16} parent=0 // pred_check
    _
  $region15: #{_lambda_.16} parent=0 // pred_check_branch
    %16 = sbr.rel (0) target = $region17
  $region16: #{_lambda_.16} parent=0 // pred_region
    _
  $region17: #{_lambda_.16} parent=0 // pred_fallthru
    _
  %p18 = scmp.eq.s32.totalorder 0, 0
  // Predicated region
  $region18: #{_lambda_.16} parent=0 // pred_check
    %p19 = pneg %p18
  $region19: #{_lambda_.16} parent=0 // pred_check_branch
    %21 = sbr.rel (%p19) target = $region21
  $region20: #{_lambda_.16} parent=0 // pred_region
    %vm22 = vcmask 130048
    %23 = vst.msk [vmem:[#allocation2] sm:$0xff] %vm22, 0.0
    %24 = vst.msk [vmem:[#allocation2 + $0x8] sm:$0xff] %vm22, 0.0
    %25 = vst.msk [vmem:[#allocation2 + $0x10] sm:$0xff] %vm22, 0.0
    %26 = vst.msk [vmem:[#allocation2 + $0x18] sm:$0xff] %vm22, 0.0
    %27 = vst.msk [vmem:[#allocation2 + $0x20] sm:$0xff] %vm22, 0.0
    %28 = vst.msk [vmem:[#allocation2 + $0x28] sm:$0xff] %vm22, 0.0
    %29 = vst.msk [vmem:[#allocation2 + $0x30] sm:$0xff] %vm22, 0.0
    %30 = vst.msk [vmem:[#allocation2 + $0x38] sm:$0xff] %vm22, 0.0
    %31 = vst.msk [vmem:[#allocation2 + $0x40] sm:$0xff] %vm22, 0.0
    %32 = vst.msk [vmem:[#allocation2 + $0x48] sm:$0xff] %vm22, 0.0
    %33 = vst.msk [vmem:[#allocation2 + $0x50] sm:$0xff] %vm22, 0.0
    %34 = vst.msk [vmem:[#allocation2 + $0x58] sm:$0xff] %vm22, 0.0
    %35 = vst.msk [vmem:[#allocation2 + $0x60] sm:$0xff] %vm22, 0.0
    %36 = vst.msk [vmem:[#allocation2 + $0x68] sm:$0xff] %vm22, 0.0
    %37 = vst.msk [vmem:[#allocation2 + $0x70] sm:$0xff] %vm22, 0.0
    %38 = vst.msk [vmem:[#allocation2 + $0x78] sm:$0xff] %vm22, 0.0
  $region21: #{_lambda_.16} parent=0 // pred_fallthru
    _
  %v39 = vld [vmem:[#allocation2] sm:$0xff]
  %v40 = vld [vmem:[#allocation2 + $0x8] sm:$0xff]
  %v41 = vld [vmem:[#allocation2 + $0x10] sm:$0xff]
  %v42 = vld [vmem:[#allocation2 + $0x18] sm:$0xff]
  %v43 = vld [vmem:[#allocation2 + $0x20] sm:$0xff]
  %v44 = vld [vmem:[#allocation2 + $0x28] sm:$0xff]
  %v45 = vld [vmem:[#allocation2 + $0x30] sm:$0xff]
  %v46 = vld [vmem:[#allocation2 + $0x38] sm:$0xff]
  %v47 = vld [vmem:[#allocation2 + $0x40] sm:$0xff]
  %v48 = vld [vmem:[#allocation2 + $0x48] sm:$0xff]
  %v49 = vld [vmem:[#allocation2 + $0x50] sm:$0xff]
  %v50 = vld [vmem:[#allocation2 + $0x58] sm:$0xff]
  %v51 = vld [vmem:[#allocation2 + $0x60] sm:$0xff]
  %v52 = vld [vmem:[#allocation2 + $0x68] sm:$0xff]
  %v53 = vld [vmem:[#allocation2 + $0x70] sm:$0xff]
  %v54 = vld [vmem:[#allocation2 + $0x78] sm:$0xff]
  %v55 = vld [vmem:[%s0] sm:$0xf]
  %v56 = vld [vmem:[%s0 + $0x4] sm:$0xf]
  %v57 = vld [vmem:[%s0 + $0x8] sm:$0xf]
  %v58 = vld [vmem:[%s0 + $0xc] sm:$0xf]
  %v59 = vld [vmem:[%s0 + $0x10] sm:$0xf]
  %v60 = vld [vmem:[%s0 + $0x14] sm:$0xf]
  %v61 = vld [vmem:[%s0 + $0x18] sm:$0xf]
  %v62 = vld [vmem:[%s0 + $0x1c] sm:$0xf]
  %v63 = vld [vmem:[%s0 + $0x20] sm:$0xf]
  %v64 = vld [vmem:[%s0 + $0x24] sm:$0xf]
  %v65 = vld [vmem:[%s0 + $0x28] sm:$0xf]
  %v66 = vld [vmem:[%s0 + $0x2c] sm:$0xf]
  %v67 = vld [vmem:[%s0 + $0x30] sm:$0xf]
  %v68 = vld [vmem:[%s0 + $0x34] sm:$0xf]
  %v69 = vld [vmem:[%s0 + $0x38] sm:$0xf]
  %v70 = vld [vmem:[%s0 + $0x3c] sm:$0xf]
  %v71 = vld [vmem:[%s1] sm:$0xf]
  %v72 = vld [vmem:[%s1 + $0x4] sm:$0xf]
  %v73 = vld [vmem:[%s1 + $0x8] sm:$0xf]
  %v74 = vld [vmem:[%s1 + $0xc] sm:$0xf]
  %v91 = vunpack.c.l.b16 %v55
  %v92 = vunpack.c.l.b16 %v56
  %v93 = vunpack.c.l.b16 %v57
  %v94 = vunpack.c.l.b16 %v58
  %v95 = vunpack.c.l.b16 %v59
  %v96 = vunpack.c.l.b16 %v60
  %v97 = vunpack.c.l.b16 %v61
  %v98 = vunpack.c.l.b16 %v62
  %v99 = vunpack.c.l.b16 %v63
  %v100 = vunpack.c.l.b16 %v64
  %v101 = vunpack.c.l.b16 %v65
  %v102 = vunpack.c.l.b16 %v66
  %v103 = vunpack.c.l.b16 %v67
  %v104 = vunpack.c.l.b16 %v68
  %v105 = vunpack.c.l.b16 %v69
  %v106 = vunpack.c.l.b16 %v70
  %v107 = vpack.c.b16 %v92, %v91
  %v108 = vpack.c.b16 %v94, %v93
  %v109 = vpack.c.b16 %v96, %v95
  %v110 = vpack.c.b16 %v98, %v97
  %v111 = vpack.c.b16 %v100, %v99
  %v112 = vpack.c.b16 %v102, %v101
  %v113 = vpack.c.b16 %v104, %v103
  %v114 = vpack.c.b16 %v106, %v105
  %v119 = vunpack.c.l.b16 %v71
  %v120 = vunpack.c.l.b16 %v72
  %v121 = vunpack.c.l.b16 %v73
  %v122 = vunpack.c.l.b16 %v74
  %v123 = vpack.c.b16 %v120, %v119
  %v124 = vpack.c.b16 %v122, %v121
  %vm127 = vcmask 261120
  %v129 = vsel %vm127, %v107, 0
  %v132 = vsel %vm127, %v108, 0
  %v135 = vsel %vm127, %v109, 0
  %v138 = vsel %vm127, %v110, 0
  %v141 = vsel %vm127, %v111, 0
  %v144 = vsel %vm127, %v112, 0
  %v147 = vsel %vm127, %v113, 0
  %v150 = vsel %vm127, %v114, 0
  %152 = vmatprep.subr.bf16.mxu0 0
  %153 = vmatpush1.bf16.msra.mxu0 %v123
  %154 = vmatprep.subr.bf16.mxu0 0
  %155 = vmatpush1.bf16.msra.mxu0 %v124
  %156 = vmatprep.subr.bf16.mxu0 0
  %157 = vmatpush1.bf16.msra.mxu0 0
  %158 = vmatprep.subr.bf16.mxu0 0
  %159 = vmatpush1.bf16.msra.mxu0 0
  %160 = vmatprep.subr.bf16.mxu0 0
  %161 = vmatpush1.bf16.msra.mxu0 0
  %162 = vmatprep.subr.bf16.mxu0 0
  %163 = vmatpush1.bf16.msra.mxu0 0
  %164 = vmatprep.subr.bf16.mxu0 0
  %165 = vmatpush1.bf16.msra.mxu0 0
  %166 = vmatprep.subr.bf16.mxu0 0
  %167 = vmatpush1.bf16.msra.mxu0 0
  %168 = vmatprep.subr.bf16.mxu0 0
  %169 = vmatpush1.bf16.msra.mxu0 0
  %170 = vmatprep.subr.bf16.mxu0 0
  %171 = vmatpush1.bf16.msra.mxu0 0
  %172 = vmatprep.subr.bf16.mxu0 0
  %173 = vmatpush1.bf16.msra.mxu0 0
  %174 = vmatprep.subr.bf16.mxu0 0
  %175 = vmatpush1.bf16.msra.mxu0 0
  %176 = vmatprep.subr.bf16.mxu0 0
  %177 = vmatpush1.bf16.msra.mxu0 0
  %178 = vmatprep.subr.bf16.mxu0 0
  %179 = vmatpush1.bf16.msra.mxu0 0
  %180 = vmatprep.subr.bf16.mxu0 0
  %181 = vmatpush1.bf16.msra.mxu0 0
  %182 = vmatprep.subr.bf16.mxu0 0
  %183 = vmatpush1.bf16.msra.mxu0 0
  %184 = vmatprep.mubr.bf16.mxu0 0
  %185 = vmatmul.mubr.bf16.gmra.mrb[0].mxu0 %v129
  %v186 = vpop.f32.mrb[0].mxu0
  %v187 = vadd.f32 0.0, %v186
  %v188 = vpop.f32.mrb[0].mxu0
  %v189 = vpop.f32.mrb[0].mxu0
  %v190 = vadd.f32 0.0, %v189
  %v191 = vpop.f32.mrb[0].mxu0
  %192 = vmatprep.mubr.bf16.mxu0 0
  %193 = vmatmul.mubr.bf16.gmra.mrb[0].mxu0 %v132
  %v194 = vpop.f32.mrb[0].mxu0
  %v195 = vadd.f32 0.0, %v194
  %v196 = vpop.f32.mrb[0].mxu0
  %v197 = vpop.f32.mrb[0].mxu0
  %v198 = vadd.f32 0.0, %v197
  %v199 = vpop.f32.mrb[0].mxu0
  %200 = vmatprep.mubr.bf16.mxu0 0
  %201 = vmatmul.mubr.bf16.gmra.mrb[0].mxu0 %v135
  %v202 = vpop.f32.mrb[0].mxu0
  %v203 = vadd.f32 0.0, %v202
  %v204 = vpop.f32.mrb[0].mxu0
  %v205 = vpop.f32.mrb[0].mxu0
  %v206 = vadd.f32 0.0, %v205
  %v207 = vpop.f32.mrb[0].mxu0
  %208 = vmatprep.mubr.bf16.mxu0 0
  %209 = vmatmul.mubr.bf16.gmra.mrb[0].mxu0 %v138
  %v210 = vpop.f32.mrb[0].mxu0
  %v211 = vadd.f32 0.0, %v210
  %v212 = vpop.f32.mrb[0].mxu0
  %v213 = vpop.f32.mrb[0].mxu0
  %v214 = vadd.f32 0.0, %v213
  %v215 = vpop.f32.mrb[0].mxu0
  %216 = vmatprep.mubr.bf16.mxu0 0
  %217 = vmatmul.mubr.bf16.gmra.mrb[0].mxu0 %v141
  %v218 = vpop.f32.mrb[0].mxu0
  %v219 = vadd.f32 0.0, %v218
  %v220 = vpop.f32.mrb[0].mxu0
  %v221 = vpop.f32.mrb[0].mxu0
  %v222 = vadd.f32 0.0, %v221
  %v223 = vpop.f32.mrb[0].mxu0
  %224 = vmatprep.mubr.bf16.mxu0 0
  %225 = vmatmul.mubr.bf16.gmra.mrb[0].mxu0 %v144
  %v226 = vpop.f32.mrb[0].mxu0
  %v227 = vadd.f32 0.0, %v226
  %v228 = vpop.f32.mrb[0].mxu0
  %v229 = vpop.f32.mrb[0].mxu0
  %v230 = vadd.f32 0.0, %v229
  %v231 = vpop.f32.mrb[0].mxu0
  %232 = vmatprep.mubr.bf16.mxu0 0
  %233 = vmatmul.mubr.bf16.gmra.mrb[0].mxu0 %v147
  %v234 = vpop.f32.mrb[0].mxu0
  %v235 = vadd.f32 0.0, %v234
  %v236 = vpop.f32.mrb[0].mxu0
  %v237 = vpop.f32.mrb[0].mxu0
  %v238 = vadd.f32 0.0, %v237
  %v239 = vpop.f32.mrb[0].mxu0
  %240 = vmatprep.mubr.bf16.mxu0 0
  %241 = vmatmul.mubr.bf16.gmra.mrb[0].mxu0 %v150
  %v242 = vpop.f32.mrb[0].mxu0
  %v243 = vadd.f32 0.0, %v242
  %v244 = vpop.f32.mrb[0].mxu0
  %v245 = vpop.f32.mrb[0].mxu0
  %v246 = vadd.f32 0.0, %v245
  %v247 = vpop.f32.mrb[0].mxu0
  %248 = vdwg.mxu0
  %v249 = vadd.f32 %v39, %v187
  %v250 = vadd.f32 %v40, %v190
  %v251 = vadd.f32 %v41, %v195
  %v252 = vadd.f32 %v42, %v198
  %v253 = vadd.f32 %v43, %v203
  %v254 = vadd.f32 %v44, %v206
  %v255 = vadd.f32 %v45, %v211
  %v256 = vadd.f32 %v46, %v214
  %v257 = vadd.f32 %v47, %v219
  %v258 = vadd.f32 %v48, %v222
  %v259 = vadd.f32 %v49, %v227
  %v260 = vadd.f32 %v50, %v230
  %v261 = vadd.f32 %v51, %v235
  %v262 = vadd.f32 %v52, %v238
  %v263 = vadd.f32 %v53, %v243
  %v264 = vadd.f32 %v54, %v246
  %vm265 = vcmask 130048
  %266 = vst.msk [vmem:[#allocation2] sm:$0xff] %vm265, %v249
  %267 = vst.msk [vmem:[#allocation2 + $0x8] sm:$0xff] %vm265, %v250
  %268 = vst.msk [vmem:[#allocation2 + $0x10] sm:$0xff] %vm265, %v251
  %269 = vst.msk [vmem:[#allocation2 + $0x18] sm:$0xff] %vm265, %v252
  %270 = vst.msk [vmem:[#allocation2 + $0x20] sm:$0xff] %vm265, %v253
  %271 = vst.msk [vmem:[#allocation2 + $0x28] sm:$0xff] %vm265, %v254
  %272 = vst.msk [vmem:[#allocation2 + $0x30] sm:$0xff] %vm265, %v255
  %273 = vst.msk [vmem:[#allocation2 + $0x38] sm:$0xff] %vm265, %v256
  %274 = vst.msk [vmem:[#allocation2 + $0x40] sm:$0xff] %vm265, %v257
  %275 = vst.msk [vmem:[#allocation2 + $0x48] sm:$0xff] %vm265, %v258
  %276 = vst.msk [vmem:[#allocation2 + $0x50] sm:$0xff] %vm265, %v259
  %277 = vst.msk [vmem:[#allocation2 + $0x58] sm:$0xff] %vm265, %v260
  %278 = vst.msk [vmem:[#allocation2 + $0x60] sm:$0xff] %vm265, %v261
  %279 = vst.msk [vmem:[#allocation2 + $0x68] sm:$0xff] %vm265, %v262
  %280 = vst.msk [vmem:[#allocation2 + $0x70] sm:$0xff] %vm265, %v263
  %281 = vst.msk [vmem:[#allocation2 + $0x78] sm:$0xff] %vm265, %v264
  // Predicated region
  $region22: #{_lambda_.16} parent=0 // pred_check
    %p282 = pneg %p18
  $region23: #{_lambda_.16} parent=0 // pred_check_branch
    %284 = sbr.rel (%p282) target = $region25
  $region24: #{_lambda_.16} parent=0 // pred_region
    %v285 = vld [vmem:[#allocation2] sm:$0xff]
    %v286 = vld [vmem:[#allocation2 + $0x8] sm:$0xff]
    %v287 = vld [vmem:[#allocation2 + $0x10] sm:$0xff]
    %v288 = vld [vmem:[#allocation2 + $0x18] sm:$0xff]
    %v289 = vld [vmem:[#allocation2 + $0x20] sm:$0xff]
    %v290 = vld [vmem:[#allocation2 + $0x28] sm:$0xff]
    %v291 = vld [vmem:[#allocation2 + $0x30] sm:$0xff]
    %v292 = vld [vmem:[#allocation2 + $0x38] sm:$0xff]
    %v293 = vld [vmem:[#allocation2 + $0x40] sm:$0xff]
    %v294 = vld [vmem:[#allocation2 + $0x48] sm:$0xff]
    %v295 = vld [vmem:[#allocation2 + $0x50] sm:$0xff]
    %v296 = vld [vmem:[#allocation2 + $0x58] sm:$0xff]
    %v297 = vld [vmem:[#allocation2 + $0x60] sm:$0xff]
    %v298 = vld [vmem:[#allocation2 + $0x68] sm:$0xff]
    %v299 = vld [vmem:[#allocation2 + $0x70] sm:$0xff]
    %v300 = vld [vmem:[#allocation2 + $0x78] sm:$0xff]
    %v301 = vld [vmem:[%s2] sm:$0x1]
    %v303 = vlaneseq
    %v304 = vshrl.u32 %v303, 7
    %v305 = vsub.s32 0, %v304
    %v306 = vrot.slane %v301, %v305
    %v308 = vmul.f32 %v285, %v306
    %v309 = vmul.f32 %v286, %v306
    %v310 = vmul.f32 %v287, %v306
    %v311 = vmul.f32 %v288, %v306
    %v312 = vmul.f32 %v289, %v306
    %v313 = vmul.f32 %v290, %v306
    %v314 = vmul.f32 %v291, %v306
    %v315 = vmul.f32 %v292, %v306
    %v316 = vmul.f32 %v293, %v306
    %v317 = vmul.f32 %v294, %v306
    %v318 = vmul.f32 %v295, %v306
    %v319 = vmul.f32 %v296, %v306
    %v320 = vmul.f32 %v297, %v306
    %v321 = vmul.f32 %v298, %v306
    %v322 = vmul.f32 %v299, %v306
    %v323 = vmul.f32 %v300, %v306
    %v324 = vld [vmem:[%s3] sm:$0x1]
    %v326 = vlaneseq
    %v327 = vshrl.u32 %v326, 7
    %v328 = vsub.s32 0, %v327
    %v329 = vrot.slane %v324, %v328
    %v331 = vadd.f32 %v308, %v329
    %v332 = vadd.f32 %v309, %v329
    %v333 = vadd.f32 %v310, %v329
    %v334 = vadd.f32 %v311, %v329
    %v335 = vadd.f32 %v312, %v329
    %v336 = vadd.f32 %v313, %v329
    %v337 = vadd.f32 %v314, %v329
    %v338 = vadd.f32 %v315, %v329
    %v339 = vadd.f32 %v316, %v329
    %v340 = vadd.f32 %v317, %v329
    %v341 = vadd.f32 %v318, %v329
    %v342 = vadd.f32 %v319, %v329
    %v343 = vadd.f32 %v320, %v329
    %v344 = vadd.f32 %v321, %v329
    %v345 = vadd.f32 %v322, %v329
    %v346 = vadd.f32 %v323, %v329
    %v347 = vmax.f32 %v331, 0.0
    %v348 = vmax.f32 %v332, 0.0
    %v349 = vmax.f32 %v333, 0.0
    %v350 = vmax.f32 %v334, 0.0
    %v351 = vmax.f32 %v335, 0.0
    %v352 = vmax.f32 %v336, 0.0
    %v353 = vmax.f32 %v337, 0.0
    %v354 = vmax.f32 %v338, 0.0
    %v355 = vmax.f32 %v339, 0.0
    %v356 = vmax.f32 %v340, 0.0
    %v357 = vmax.f32 %v341, 0.0
    %v358 = vmax.f32 %v342, 0.0
    %v359 = vmax.f32 %v343, 0.0
    %v360 = vmax.f32 %v344, 0.0
    %v361 = vmax.f32 %v345, 0.0
    %v362 = vmax.f32 %v346, 0.0
    %363 = vst.msk [vmem:[%s4] sm:$0xff] %vm265, %v347
    %364 = vst.msk [vmem:[%s4 + $0x8] sm:$0xff] %vm265, %v348
    %365 = vst.msk [vmem:[%s4 + $0x10] sm:$0xff] %vm265, %v349
    %366 = vst.msk [vmem:[%s4 + $0x18] sm:$0xff] %vm265, %v350
    %367 = vst.msk [vmem:[%s4 + $0x20] sm:$0xff] %vm265, %v351
    %368 = vst.msk [vmem:[%s4 + $0x28] sm:$0xff] %vm265, %v352
    %369 = vst.msk [vmem:[%s4 + $0x30] sm:$0xff] %vm265, %v353
    %370 = vst.msk [vmem:[%s4 + $0x38] sm:$0xff] %vm265, %v354
    %371 = vst.msk [vmem:[%s4 + $0x40] sm:$0xff] %vm265, %v355
    %372 = vst.msk [vmem:[%s4 + $0x48] sm:$0xff] %vm265, %v356
    %373 = vst.msk [vmem:[%s4 + $0x50] sm:$0xff] %vm265, %v357
    %374 = vst.msk [vmem:[%s4 + $0x58] sm:$0xff] %vm265, %v358
    %375 = vst.msk [vmem:[%s4 + $0x60] sm:$0xff] %vm265, %v359
    %376 = vst.msk [vmem:[%s4 + $0x68] sm:$0xff] %vm265, %v360
    %377 = vst.msk [vmem:[%s4 + $0x70] sm:$0xff] %vm265, %v361
    %378 = vst.msk [vmem:[%s4 + $0x78] sm:$0xff] %vm265, %v362
  $region25: #{_lambda_.16} parent=0 // pred_fallthru
    _
  // Predicated region
  $region26: #{_lambda_.16} parent=0 // pred_check
    _
  $region27: #{_lambda_.16} parent=0 // pred_check_branch
    %380 = sbr.rel (0) target = $region29
  $region28: #{_lambda_.16} parent=0 // pred_region
    _
  $region29: #{_lambda_.16} parent=0 // pred_fallthru
    _
  // Predicated region
  $region30: #{_lambda_.16} parent=0 // pred_check
    _
  $region31: #{_lambda_.16} parent=0 // pred_check_branch
    %382 = sbr.rel (0) target = $region33
  $region32: #{_lambda_.16} parent=0 // pred_region
    _
  $region33: #{_lambda_.16} parent=0 // pred_fallthru
    _

// kernel: _lambda_.15
$region0: #{_lambda_.15}
  #allocation0 [shape = 'u32[]', space=smem, size = 0x4, offset = 0x4, fixed_abs, tag = 'smem constant byte address 0x4 - core index']
  #allocation1 [shape = 'u32[144,128]{1,0:T(1,128)}', space=vmem, size = 0x12000, scoped, tag = 'internal scratch']
  #allocation2 [shape = 'f32[128,32]{1,0:T(8,128)}', space=vmem, size = 0x10000, scoped, tag = 'scratch operand']
  %s0 = inlined_call_operand.vmem [shape: bf16[128,16], index: 0, kind: input, shape index: {}]
  %s1 = inlined_call_operand.vmem [shape: bf16[16,32], index: 1, kind: input, shape index: {}]
  %s2 = inlined_call_operand.vmem [shape: f32[1,32], index: 2, kind: input, shape index: {}]
  %s3 = inlined_call_operand.vmem [shape: f32[1,32], index: 3, kind: input, shape index: {}]
  %s4 = inlined_call_operand.vmem [shape: f32[128,32], index: 4, kind: input, shape index: {}]
  %s5 = inlined_call_operand.vmem [shape: f32[128,32], index: 5, kind: output, shape index: {}]
  %s6 = sld [smem:[#allocation0]]
  $region38: #{_lambda_.15} parent=0
    _
  %s8 = ssub.s32 1, %s6
  %s9 = scalar_select 0, %s8, %s6
  // Predicated region
  $region2: #{_lambda_.15} parent=0 // pred_check
    _
  $region3: #{_lambda_.15} parent=0 // pred_check_branch
    %11 = sbr.rel (0) target = $region5
  $region4: #{_lambda_.15} parent=0 // pred_region
    _
  $region5: #{_lambda_.15} parent=0 // pred_fallthru
    _
  // Predicated region
  $region6: #{_lambda_.15} parent=0 // pred_check
    _
  $region7: #{_lambda_.15} parent=0 // pred_check_branch
    %13 = sbr.rel (0) target = $region9
  $region8: #{_lambda_.15} parent=0 // pred_region
    _
  $region9: #{_lambda_.15} parent=0 // pred_fallthru
    _
  // Predicated region
  $region10: #{_lambda_.15} parent=0 // pred_check
    _
  $region11: #{_lambda_.15} parent=0 // pred_check_branch
    %15 = sbr.rel (0) target = $region13
  $region12: #{_lambda_.15} parent=0 // pred_region
    _
  $region13: #{_lambda_.15} parent=0 // pred_fallthru
    _
  // Predicated region
  $region14: #{_lambda_.15} parent=0 // pred_check
    _
  $region15: #{_lambda_.15} parent=0 // pred_check_branch
    %17 = sbr.rel (0) target = $region17
  $region16: #{_lambda_.15} parent=0 // pred_region
    _
  $region17: #{_lambda_.15} parent=0 // pred_fallthru
    _
  // Predicated region
  $region18: #{_lambda_.15} parent=0 // pred_check
    _
  $region19: #{_lambda_.15} parent=0 // pred_check_branch
    %19 = sbr.rel (0) target = $region21
  $region20: #{_lambda_.15} parent=0 // pred_region
    _
  $region21: #{_lambda_.15} parent=0 // pred_fallthru
    _
  %p21 = scmp.eq.s32.totalorder 0, 0
  // Predicated region
  $region22: #{_lambda_.15} parent=0 // pred_check
    %p22 = pneg %p21
  $region23: #{_lambda_.15} parent=0 // pred_check_branch
    %24 = sbr.rel (%p22) target = $region25
  $region24: #{_lambda_.15} parent=0 // pred_region
    %vm25 = vcmask 261120
    %26 = vst.msk [vmem:[#allocation2] sm:$0xff] %vm25, 0.0
    %27 = vst.msk [vmem:[#allocation2 + $0x8] sm:$0xff] %vm25, 0.0
    %28 = vst.msk [vmem:[#allocation2 + $0x10] sm:$0xff] %vm25, 0.0
    %29 = vst.msk [vmem:[#allocation2 + $0x18] sm:$0xff] %vm25, 0.0
    %30 = vst.msk [vmem:[#allocation2 + $0x20] sm:$0xff] %vm25, 0.0
    %31 = vst.msk [vmem:[#allocation2 + $0x28] sm:$0xff] %vm25, 0.0
    %32 = vst.msk [vmem:[#allocation2 + $0x30] sm:$0xff] %vm25, 0.0
    %33 = vst.msk [vmem:[#allocation2 + $0x38] sm:$0xff] %vm25, 0.0
    %34 = vst.msk [vmem:[#allocation2 + $0x40] sm:$0xff] %vm25, 0.0
    %35 = vst.msk [vmem:[#allocation2 + $0x48] sm:$0xff] %vm25, 0.0
    %36 = vst.msk [vmem:[#allocation2 + $0x50] sm:$0xff] %vm25, 0.0
    %37 = vst.msk [vmem:[#allocation2 + $0x58] sm:$0xff] %vm25, 0.0
    %38 = vst.msk [vmem:[#allocation2 + $0x60] sm:$0xff] %vm25, 0.0
    %39 = vst.msk [vmem:[#allocation2 + $0x68] sm:$0xff] %vm25, 0.0
    %40 = vst.msk [vmem:[#allocation2 + $0x70] sm:$0xff] %vm25, 0.0
    %41 = vst.msk [vmem:[#allocation2 + $0x78] sm:$0xff] %vm25, 0.0
  $region25: #{_lambda_.15} parent=0 // pred_fallthru
    _
  %v42 = vld [vmem:[#allocation2] sm:$0xff]
  %v43 = vld [vmem:[#allocation2 + $0x8] sm:$0xff]
  %v44 = vld [vmem:[#allocation2 + $0x10] sm:$0xff]
  %v45 = vld [vmem:[#allocation2 + $0x18] sm:$0xff]
  %v46 = vld [vmem:[#allocation2 + $0x20] sm:$0xff]
  %v47 = vld [vmem:[#allocation2 + $0x28] sm:$0xff]
  %v48 = vld [vmem:[#allocation2 + $0x30] sm:$0xff]
  %v49 = vld [vmem:[#allocation2 + $0x38] sm:$0xff]
  %v50 = vld [vmem:[#allocation2 + $0x40] sm:$0xff]
  %v51 = vld [vmem:[#allocation2 + $0x48] sm:$0xff]
  %v52 = vld [vmem:[#allocation2 + $0x50] sm:$0xff]
  %v53 = vld [vmem:[#allocation2 + $0x58] sm:$0xff]
  %v54 = vld [vmem:[#allocation2 + $0x60] sm:$0xff]
  %v55 = vld [vmem:[#allocation2 + $0x68] sm:$0xff]
  %v56 = vld [vmem:[#allocation2 + $0x70] sm:$0xff]
  %v57 = vld [vmem:[#allocation2 + $0x78] sm:$0xff]
  %v58 = vld [vmem:[%s0] sm:$0xf]
  %v59 = vld [vmem:[%s0 + $0x4] sm:$0xf]
  %v60 = vld [vmem:[%s0 + $0x8] sm:$0xf]
  %v61 = vld [vmem:[%s0 + $0xc] sm:$0xf]
  %v62 = vld [vmem:[%s0 + $0x10] sm:$0xf]
  %v63 = vld [vmem:[%s0 + $0x14] sm:$0xf]
  %v64 = vld [vmem:[%s0 + $0x18] sm:$0xf]
  %v65 = vld [vmem:[%s0 + $0x1c] sm:$0xf]
  %v66 = vld [vmem:[%s0 + $0x20] sm:$0xf]
  %v67 = vld [vmem:[%s0 + $0x24] sm:$0xf]
  %v68 = vld [vmem:[%s0 + $0x28] sm:$0xf]
  %v69 = vld [vmem:[%s0 + $0x2c] sm:$0xf]
  %v70 = vld [vmem:[%s0 + $0x30] sm:$0xf]
  %v71 = vld [vmem:[%s0 + $0x34] sm:$0xf]
  %v72 = vld [vmem:[%s0 + $0x38] sm:$0xf]
  %v73 = vld [vmem:[%s0 + $0x3c] sm:$0xf]
  %v74 = vld [vmem:[%s1] sm:$0xf]
  %v75 = vld [vmem:[%s1 + $0x4] sm:$0xf]
  %v92 = vunpack.c.l.b16 %v58
  %v93 = vunpack.c.l.b16 %v59
  %v94 = vunpack.c.l.b16 %v60
  %v95 = vunpack.c.l.b16 %v61
  %v96 = vunpack.c.l.b16 %v62
  %v97 = vunpack.c.l.b16 %v63
  %v98 = vunpack.c.l.b16 %v64
  %v99 = vunpack.c.l.b16 %v65
  %v100 = vunpack.c.l.b16 %v66
  %v101 = vunpack.c.l.b16 %v67
  %v102 = vunpack.c.l.b16 %v68
  %v103 = vunpack.c.l.b16 %v69
  %v104 = vunpack.c.l.b16 %v70
  %v105 = vunpack.c.l.b16 %v71
  %v106 = vunpack.c.l.b16 %v72
  %v107 = vunpack.c.l.b16 %v73
  %v108 = vpack.c.b16 %v93, %v92
  %v109 = vpack.c.b16 %v95, %v94
  %v110 = vpack.c.b16 %v97, %v96
  %v111 = vpack.c.b16 %v99, %v98
  %v112 = vpack.c.b16 %v101, %v100
  %v113 = vpack.c.b16 %v103, %v102
  %v114 = vpack.c.b16 %v105, %v104
  %v115 = vpack.c.b16 %v107, %v106
  %v118 = vunpack.c.l.b16 %v74
  %v119 = vunpack.c.l.b16 %v75
  %v120 = vpack.c.b16 %v119, %v118
  %vm122 = vcmask 130048
  %v124 = vsel %vm122, %v108, 0
  %v127 = vsel %vm122, %v109, 0
  %v130 = vsel %vm122, %v110, 0
  %v133 = vsel %vm122, %v111, 0
  %v136 = vsel %vm122, %v112, 0
  %v139 = vsel %vm122, %v113, 0
  %v142 = vsel %vm122, %v114, 0
  %v145 = vsel %vm122, %v115, 0
  %147 = vmatprep.subr.bf16.mxu0 0
  %148 = vmatpush1.bf16.msra.mxu0 %v120
  %149 = vmatprep.subr.bf16.mxu0 0
  %150 = vmatpush1.bf16.msra.mxu0 0
  %151 = vmatprep.subr.bf16.mxu0 0
  %152 = vmatpush1.bf16.msra.mxu0 0
  %153 = vmatprep.subr.bf16.mxu0 0
  %154 = vmatpush1.bf16.msra.mxu0 0
  %155 = vmatprep.subr.bf16.mxu0 0
  %156 = vmatpush1.bf16.msra.mxu0 0
  %157 = vmatprep.subr.bf16.mxu0 0
  %158 = vmatpush1.bf16.msra.mxu0 0
  %159 = vmatprep.subr.bf16.mxu0 0
  %160 = vmatpush1.bf16.msra.mxu0 0
  %161 = vmatprep.subr.bf16.mxu0 0
  %162 = vmatpush1.bf16.msra.mxu0 0
  %163 = vmatprep.subr.bf16.mxu0 0
  %164 = vmatpush1.bf16.msra.mxu0 0
  %165 = vmatprep.subr.bf16.mxu0 0
  %166 = vmatpush1.bf16.msra.mxu0 0
  %167 = vmatprep.subr.bf16.mxu0 0
  %168 = vmatpush1.bf16.msra.mxu0 0
  %169 = vmatprep.subr.bf16.mxu0 0
  %170 = vmatpush1.bf16.msra.mxu0 0
  %171 = vmatprep.subr.bf16.mxu0 0
  %172 = vmatpush1.bf16.msra.mxu0 0
  %173 = vmatprep.subr.bf16.mxu0 0
  %174 = vmatpush1.bf16.msra.mxu0 0
  %175 = vmatprep.subr.bf16.mxu0 0
  %176 = vmatpush1.bf16.msra.mxu0 0
  %177 = vmatprep.subr.bf16.mxu0 0
  %178 = vmatpush1.bf16.msra.mxu0 0
  %179 = vmatprep.mubr.bf16.mxu0 0
  %180 = vmatmul.mubr.bf16.gmra.mrb[0].mxu0 %v124
  %v181 = vpop.f32.mrb[0].mxu0
  %v182 = vadd.f32 0.0, %v181
  %v183 = vpop.f32.mrb[0].mxu0
  %v184 = vpop.f32.mrb[0].mxu0
  %v185 = vadd.f32 0.0, %v184
  %v186 = vpop.f32.mrb[0].mxu0
  %187 = vmatprep.mubr.bf16.mxu0 0
  %188 = vmatmul.mubr.bf16.gmra.mrb[0].mxu0 %v127
  %v189 = vpop.f32.mrb[0].mxu0
  %v190 = vadd.f32 0.0, %v189
  %v191 = vpop.f32.mrb[0].mxu0
  %v192 = vpop.f32.mrb[0].mxu0
  %v193 = vadd.f32 0.0, %v192
  %v194 = vpop.f32.mrb[0].mxu0
  %195 = vmatprep.mubr.bf16.mxu0 0
  %196 = vmatmul.mubr.bf16.gmra.mrb[0].mxu0 %v130
  %v197 = vpop.f32.mrb[0].mxu0
  %v198 = vadd.f32 0.0, %v197
  %v199 = vpop.f32.mrb[0].mxu0
  %v200 = vpop.f32.mrb[0].mxu0
  %v201 = vadd.f32 0.0, %v200
  %v202 = vpop.f32.mrb[0].mxu0
  %203 = vmatprep.mubr.bf16.mxu0 0
  %204 = vmatmul.mubr.bf16.gmra.mrb[0].mxu0 %v133
  %v205 = vpop.f32.mrb[0].mxu0
  %v206 = vadd.f32 0.0, %v205
  %v207 = vpop.f32.mrb[0].mxu0
  %v208 = vpop.f32.mrb[0].mxu0
  %v209 = vadd.f32 0.0, %v208
  %v210 = vpop.f32.mrb[0].mxu0
  %211 = vmatprep.mubr.bf16.mxu0 0
  %212 = vmatmul.mubr.bf16.gmra.mrb[0].mxu0 %v136
  %v213 = vpop.f32.mrb[0].mxu0
  %v214 = vadd.f32 0.0, %v213
  %v215 = vpop.f32.mrb[0].mxu0
  %v216 = vpop.f32.mrb[0].mxu0
  %v217 = vadd.f32 0.0, %v216
  %v218 = vpop.f32.mrb[0].mxu0
  %219 = vmatprep.mubr.bf16.mxu0 0
  %220 = vmatmul.mubr.bf16.gmra.mrb[0].mxu0 %v139
  %v221 = vpop.f32.mrb[0].mxu0
  %v222 = vadd.f32 0.0, %v221
  %v223 = vpop.f32.mrb[0].mxu0
  %v224 = vpop.f32.mrb[0].mxu0
  %v225 = vadd.f32 0.0, %v224
  %v226 = vpop.f32.mrb[0].mxu0
  %227 = vmatprep.mubr.bf16.mxu0 0
  %228 = vmatmul.mubr.bf16.gmra.mrb[0].mxu0 %v142
  %v229 = vpop.f32.mrb[0].mxu0
  %v230 = vadd.f32 0.0, %v229
  %v231 = vpop.f32.mrb[0].mxu0
  %v232 = vpop.f32.mrb[0].mxu0
  %v233 = vadd.f32 0.0, %v232
  %v234 = vpop.f32.mrb[0].mxu0
  %235 = vmatprep.mubr.bf16.mxu0 0
  %236 = vmatmul.mubr.bf16.gmra.mrb[0].mxu0 %v145
  %v237 = vpop.f32.mrb[0].mxu0
  %v238 = vadd.f32 0.0, %v237
  %v239 = vpop.f32.mrb[0].mxu0
  %v240 = vpop.f32.mrb[0].mxu0
  %v241 = vadd.f32 0.0, %v240
  %v242 = vpop.f32.mrb[0].mxu0
  %243 = vdwg.mxu0
  %v244 = vadd.f32 %v42, %v182
  %v245 = vadd.f32 %v43, %v185
  %v246 = vadd.f32 %v44, %v190
  %v247 = vadd.f32 %v45, %v193
  %v248 = vadd.f32 %v46, %v198
  %v249 = vadd.f32 %v47, %v201
  %v250 = vadd.f32 %v48, %v206
  %v251 = vadd.f32 %v49, %v209
  %v252 = vadd.f32 %v50, %v214
  %v253 = vadd.f32 %v51, %v217
  %v254 = vadd.f32 %v52, %v222
  %v255 = vadd.f32 %v53, %v225
  %v256 = vadd.f32 %v54, %v230
  %v257 = vadd.f32 %v55, %v233
  %v258 = vadd.f32 %v56, %v238
  %v259 = vadd.f32 %v57, %v241
  %vm260 = vcmask 261120
  %261 = vst.msk [vmem:[#allocation2] sm:$0xff] %vm260, %v244
  %262 = vst.msk [vmem:[#allocation2 + $0x8] sm:$0xff] %vm260, %v245
  %263 = vst.msk [vmem:[#allocation2 + $0x10] sm:$0xff] %vm260, %v246
  %264 = vst.msk [vmem:[#allocation2 + $0x18] sm:$0xff] %vm260, %v247
  %265 = vst.msk [vmem:[#allocation2 + $0x20] sm:$0xff] %vm260, %v248
  %266 = vst.msk [vmem:[#allocation2 + $0x28] sm:$0xff] %vm260, %v249
  %267 = vst.msk [vmem:[#allocation2 + $0x30] sm:$0xff] %vm260, %v250
  %268 = vst.msk [vmem:[#allocation2 + $0x38] sm:$0xff] %vm260, %v251
  %269 = vst.msk [vmem:[#allocation2 + $0x40] sm:$0xff] %vm260, %v252
  %270 = vst.msk [vmem:[#allocation2 + $0x48] sm:$0xff] %vm260, %v253
  %271 = vst.msk [vmem:[#allocation2 + $0x50] sm:$0xff] %vm260, %v254
  %272 = vst.msk [vmem:[#allocation2 + $0x58] sm:$0xff] %vm260, %v255
  %273 = vst.msk [vmem:[#allocation2 + $0x60] sm:$0xff] %vm260, %v256
  %274 = vst.msk [vmem:[#allocation2 + $0x68] sm:$0xff] %vm260, %v257
  %275 = vst.msk [vmem:[#allocation2 + $0x70] sm:$0xff] %vm260, %v258
  %276 = vst.msk [vmem:[#allocation2 + $0x78] sm:$0xff] %vm260, %v259
  // Predicated region
  $region26: #{_lambda_.15} parent=0 // pred_check
    %p277 = pneg %p21
  $region27: #{_lambda_.15} parent=0 // pred_check_branch
    %279 = sbr.rel (%p277) target = $region29
  $region28: #{_lambda_.15} parent=0 // pred_region
    %v280 = vld [vmem:[#allocation2] sm:$0xff]
    %v281 = vld [vmem:[#allocation2 + $0x8] sm:$0xff]
    %v282 = vld [vmem:[#allocation2 + $0x10] sm:$0xff]
    %v283 = vld [vmem:[#allocation2 + $0x18] sm:$0xff]
    %v284 = vld [vmem:[#allocation2 + $0x20] sm:$0xff]
    %v285 = vld [vmem:[#allocation2 + $0x28] sm:$0xff]
    %v286 = vld [vmem:[#allocation2 + $0x30] sm:$0xff]
    %v287 = vld [vmem:[#allocation2 + $0x38] sm:$0xff]
    %v288 = vld [vmem:[#allocation2 + $0x40] sm:$0xff]
    %v289 = vld [vmem:[#allocation2 + $0x48] sm:$0xff]
    %v290 = vld [vmem:[#allocation2 + $0x50] sm:$0xff]
    %v291 = vld [vmem:[#allocation2 + $0x58] sm:$0xff]
    %v292 = vld [vmem:[#allocation2 + $0x60] sm:$0xff]
    %v293 = vld [vmem:[#allocation2 + $0x68] sm:$0xff]
    %v294 = vld [vmem:[#allocation2 + $0x70] sm:$0xff]
    %v295 = vld [vmem:[#allocation2 + $0x78] sm:$0xff]
    %v296 = vld [vmem:[%s2] sm:$0x1]
    %v298 = vlaneseq
    %v299 = vshrl.u32 %v298, 7
    %v300 = vsub.s32 0, %v299
    %v301 = vrot.slane %v296, %v300
    %v303 = vmul.f32 %v280, %v301
    %v304 = vmul.f32 %v281, %v301
    %v305 = vmul.f32 %v282, %v301
    %v306 = vmul.f32 %v283, %v301
    %v307 = vmul.f32 %v284, %v301
    %v308 = vmul.f32 %v285, %v301
    %v309 = vmul.f32 %v286, %v301
    %v310 = vmul.f32 %v287, %v301
    %v311 = vmul.f32 %v288, %v301
    %v312 = vmul.f32 %v289, %v301
    %v313 = vmul.f32 %v290, %v301
    %v314 = vmul.f32 %v291, %v301
    %v315 = vmul.f32 %v292, %v301
    %v316 = vmul.f32 %v293, %v301
    %v317 = vmul.f32 %v294, %v301
    %v318 = vmul.f32 %v295, %v301
    %v319 = vld [vmem:[%s3] sm:$0x1]
    %v321 = vlaneseq
    %v322 = vshrl.u32 %v321, 7
    %v323 = vsub.s32 0, %v322
    %v324 = vrot.slane %v319, %v323
    %v326 = vadd.f32 %v303, %v324
    %v327 = vadd.f32 %v304, %v324
    %v328 = vadd.f32 %v305, %v324
    %v329 = vadd.f32 %v306, %v324
    %v330 = vadd.f32 %v307, %v324
    %v331 = vadd.f32 %v308, %v324
    %v332 = vadd.f32 %v309, %v324
    %v333 = vadd.f32 %v310, %v324
    %v334 = vadd.f32 %v311, %v324
    %v335 = vadd.f32 %v312, %v324
    %v336 = vadd.f32 %v313, %v324
    %v337 = vadd.f32 %v314, %v324
    %v338 = vadd.f32 %v315, %v324
    %v339 = vadd.f32 %v316, %v324
    %v340 = vadd.f32 %v317, %v324
    %v341 = vadd.f32 %v318, %v324
    %v342 = vld [vmem:[%s4] sm:$0xff]
    %v343 = vld [vmem:[%s4 + $0x8] sm:$0xff]
    %v344 = vld [vmem:[%s4 + $0x10] sm:$0xff]
    %v345 = vld [vmem:[%s4 + $0x18] sm:$0xff]
    %v346 = vld [vmem:[%s4 + $0x20] sm:$0xff]
    %v347 = vld [vmem:[%s4 + $0x28] sm:$0xff]
    %v348 = vld [vmem:[%s4 + $0x30] sm:$0xff]
    %v349 = vld [vmem:[%s4 + $0x38] sm:$0xff]
    %v350 = vld [vmem:[%s4 + $0x40] sm:$0xff]
    %v351 = vld [vmem:[%s4 + $0x48] sm:$0xff]
    %v352 = vld [vmem:[%s4 + $0x50] sm:$0xff]
    %v353 = vld [vmem:[%s4 + $0x58] sm:$0xff]
    %v354 = vld [vmem:[%s4 + $0x60] sm:$0xff]
    %v355 = vld [vmem:[%s4 + $0x68] sm:$0xff]
    %v356 = vld [vmem:[%s4 + $0x70] sm:$0xff]
    %v357 = vld [vmem:[%s4 + $0x78] sm:$0xff]
    %v358 = vadd.f32 %v326, %v342
    %v359 = vadd.f32 %v327, %v343
    %v360 = vadd.f32 %v328, %v344
    %v361 = vadd.f32 %v329, %v345
    %v362 = vadd.f32 %v330, %v346
    %v363 = vadd.f32 %v331, %v347
    %v364 = vadd.f32 %v332, %v348
    %v365 = vadd.f32 %v333, %v349
    %v366 = vadd.f32 %v334, %v350
    %v367 = vadd.f32 %v335, %v351
    %v368 = vadd.f32 %v336, %v352
    %v369 = vadd.f32 %v337, %v353
    %v370 = vadd.f32 %v338, %v354
    %v371 = vadd.f32 %v339, %v355
    %v372 = vadd.f32 %v340, %v356
    %v373 = vadd.f32 %v341, %v357
    %v374 = vmax.f32 %v358, 0.0
    %v375 = vmax.f32 %v359, 0.0
    %v376 = vmax.f32 %v360, 0.0
    %v377 = vmax.f32 %v361, 0.0
    %v378 = vmax.f32 %v362, 0.0
    %v379 = vmax.f32 %v363, 0.0
    %v380 = vmax.f32 %v364, 0.0
    %v381 = vmax.f32 %v365, 0.0
    %v382 = vmax.f32 %v366, 0.0
    %v383 = vmax.f32 %v367, 0.0
    %v384 = vmax.f32 %v368, 0.0
    %v385 = vmax.f32 %v369, 0.0
    %v386 = vmax.f32 %v370, 0.0
    %v387 = vmax.f32 %v371, 0.0
    %v388 = vmax.f32 %v372, 0.0
    %v389 = vmax.f32 %v373, 0.0
    %390 = vst.msk [vmem:[%s5] sm:$0xff] %vm260, %v374
    %391 = vst.msk [vmem:[%s5 + $0x8] sm:$0xff] %vm260, %v375
    %392 = vst.msk [vmem:[%s5 + $0x10] sm:$0xff] %vm260, %v376
    %393 = vst.msk [vmem:[%s5 + $0x18] sm:$0xff] %vm260, %v377
    %394 = vst.msk [vmem:[%s5 + $0x20] sm:$0xff] %vm260, %v378
    %395 = vst.msk [vmem:[%s5 + $0x28] sm:$0xff] %vm260, %v379
    %396 = vst.msk [vmem:[%s5 + $0x30] sm:$0xff] %vm260, %v380
    %397 = vst.msk [vmem:[%s5 + $0x38] sm:$0xff] %vm260, %v381
    %398 = vst.msk [vmem:[%s5 + $0x40] sm:$0xff] %vm260, %v382
    %399 = vst.msk [vmem:[%s5 + $0x48] sm:$0xff] %vm260, %v383
    %400 = vst.msk [vmem:[%s5 + $0x50] sm:$0xff] %vm260, %v384
    %401 = vst.msk [vmem:[%s5 + $0x58] sm:$0xff] %vm260, %v385
    %402 = vst.msk [vmem:[%s5 + $0x60] sm:$0xff] %vm260, %v386
    %403 = vst.msk [vmem:[%s5 + $0x68] sm:$0xff] %vm260, %v387
    %404 = vst.msk [vmem:[%s5 + $0x70] sm:$0xff] %vm260, %v388
    %405 = vst.msk [vmem:[%s5 + $0x78] sm:$0xff] %vm260, %v389
  $region29: #{_lambda_.15} parent=0 // pred_fallthru
    _
  // Predicated region
  $region30: #{_lambda_.15} parent=0 // pred_check
    _
  $region31: #{_lambda_.15} parent=0 // pred_check_branch
    %407 = sbr.rel (0) target = $region33
  $region32: #{_lambda_.15} parent=0 // pred_region
    _
  $region33: #{_lambda_.15} parent=0 // pred_fallthru
    _
  // Predicated region
  $region34: #{_lambda_.15} parent=0 // pred_check
    _
  $region35: #{_lambda_.15} parent=0 // pred_check_branch
    %409 = sbr.rel (0) target = $region37
  $region36: #{_lambda_.15} parent=0 // pred_region
    _
  $region37: #{_lambda_.15} parent=0 // pred_fallthru
    _

// kernel: _lambda_.19
$region0: #{_lambda_.19}
  #allocation0 [shape = 'u32[]', space=smem, size = 0x4, offset = 0x4, fixed_abs, tag = 'smem constant byte address 0x4 - core index']
  #allocation1 [shape = 'u32[144,128]{1,0:T(1,128)}', space=vmem, size = 0x12000, scoped, tag = 'internal scratch']
  %s0 = inlined_call_operand.vmem [shape: f32[2,64,32], index: 0, kind: input, shape index: {}]
  %s1 = inlined_call_operand.vmem [shape: f32[32,6], index: 1, kind: input, shape index: {}]
  %s2 = inlined_call_operand.vmem [shape: f32[1,6], index: 2, kind: input, shape index: {}]
  %s3 = inlined_call_operand.hbm [shape: f32[2,6], index: 3, kind: output, shape index: {}]
  %s4 = sld [smem:[#allocation0]]
  $region22: #{_lambda_.19} parent=0
    _
  %s6 = ssub.s32 1, %s4
  %s7 = scalar_select 0, %s6, %s4
  $region1: #{_lambda_.19} parent=0
    #allocation2 [shape = 'u8[1024]{0}', space=vmem, size = 0x400, scoped, tag = 'output window, operand 0, single buffered']
    #allocation3 [shape = 's32[1]{0}', space=sflag, size = 0x4, scoped, tag = 'scoped memory for _lambda_.19']
    %8 = vsyncpa [#allocation3], 0
    // Predicated region
    $region2: #{_lambda_.19} parent=1 // pred_check
      _
    $region3: #{_lambda_.19} parent=1 // pred_check_branch
      %10 = sbr.rel (0) target = $region5
    $region4: #{_lambda_.19} parent=1 // pred_region
      _
    $region5: #{_lambda_.19} parent=1 // pred_fallthru
      _
    // Predicated region
    $region6: #{_lambda_.19} parent=1 // pred_check
      _
    $region7: #{_lambda_.19} parent=1 // pred_check_branch
      %12 = sbr.rel (0) target = $region9
    $region8: #{_lambda_.19} parent=1 // pred_region
      _
    $region9: #{_lambda_.19} parent=1 // pred_fallthru
      _
    // Predicated region
    $region10: #{_lambda_.19} parent=1 // pred_check
      _
    $region11: #{_lambda_.19} parent=1 // pred_check_branch
      %14 = sbr.rel (0) target = $region13
    $region12: #{_lambda_.19} parent=1 // pred_region
      _
    $region13: #{_lambda_.19} parent=1 // pred_fallthru
      _
    %v15 = vld [vmem:[%s0] sm:$0xff]
    %v16 = vld [vmem:[%s0 + $0x8] sm:$0xff]
    %v17 = vld [vmem:[%s0 + $0x10] sm:$0xff]
    %v18 = vld [vmem:[%s0 + $0x18] sm:$0xff]
    %v19 = vld [vmem:[%s0 + $0x20] sm:$0xff]
    %v20 = vld [vmem:[%s0 + $0x28] sm:$0xff]
    %v21 = vld [vmem:[%s0 + $0x30] sm:$0xff]
    %v22 = vld [vmem:[%s0 + $0x38] sm:$0xff]
    %v23 = vld [vmem:[%s0 + $0x40] sm:$0xff]
    %v24 = vld [vmem:[%s0 + $0x48] sm:$0xff]
    %v25 = vld [vmem:[%s0 + $0x50] sm:$0xff]
    %v26 = vld [vmem:[%s0 + $0x58] sm:$0xff]
    %v27 = vld [vmem:[%s0 + $0x60] sm:$0xff]
    %v28 = vld [vmem:[%s0 + $0x68] sm:$0xff]
    %v29 = vld [vmem:[%s0 + $0x70] sm:$0xff]
    %v30 = vld [vmem:[%s0 + $0x78] sm:$0xff]
    %vm31 = vcmask 261120
    %v32 = vsel %vm31, %v15, 0.0
    %v33 = vsel %vm31, %v16, 0.0
    %v34 = vadd.f32 %v32, %v33
    %v35 = vsel %vm31, %v17, 0.0
    %v36 = vadd.f32 %v34, %v35
    %v37 = vsel %vm31, %v18, 0.0
    %v38 = vadd.f32 %v36, %v37
    %v39 = vsel %vm31, %v19, 0.0
    %v40 = vadd.f32 %v38, %v39
    %v41 = vsel %vm31, %v20, 0.0
    %v42 = vadd.f32 %v40, %v41
    %v43 = vsel %vm31, %v21, 0.0
    %v44 = vadd.f32 %v42, %v43
    %v45 = vsel %vm31, %v22, 0.0
    %v46 = vadd.f32 %v44, %v45
    %v47 = vrot.slane %v46, 4
    %v48 = vadd.f32 %v46, %v47
    %v49 = vrot.slane %v48, 2
    %v50 = vadd.f32 %v48, %v49
    %v51 = vrot.slane %v50, 1
    %v52 = vadd.f32 %v50, %v51
    %v53 = vsel %vm31, %v23, 0.0
    %v54 = vsel %vm31, %v24, 0.0
    %v55 = vadd.f32 %v53, %v54
    %v56 = vsel %vm31, %v25, 0.0
    %v57 = vadd.f32 %v55, %v56
    %v58 = vsel %vm31, %v26, 0.0
    %v59 = vadd.f32 %v57, %v58
    %v60 = vsel %vm31, %v27, 0.0
    %v61 = vadd.f32 %v59, %v60
    %v62 = vsel %vm31, %v28, 0.0
    %v63 = vadd.f32 %v61, %v62
    %v64 = vsel %vm31, %v29, 0.0
    %v65 = vadd.f32 %v63, %v64
    %v66 = vsel %vm31, %v30, 0.0
    %v67 = vadd.f32 %v65, %v66
    %v68 = vrot.slane %v67, 4
    %v69 = vadd.f32 %v67, %v68
    %v70 = vrot.slane %v69, 2
    %v71 = vadd.f32 %v69, %v70
    %v72 = vrot.slane %v71, 1
    %v73 = vadd.f32 %v71, %v72
    %v74 = vrcp.pop 64.0
    %v75 = vmul.f32 %v52, %v74
    %v76 = vmul.f32 %v73, %v74
    %v77 = vld [vmem:[%s1] sm:$0xff]
    %v78 = vld [vmem:[%s1 + $0x8] sm:$0xff]
    %v79 = vld [vmem:[%s1 + $0x10] sm:$0xff]
    %v80 = vld [vmem:[%s1 + $0x18] sm:$0xff]
    %v81 = vld [vmem:[%s2] sm:$0x1]
    %v83 = vlaneseq
    %v84 = vshrl.u32 %v83, 7
    %v85 = vsub.s32 0, %v84
    %v86 = vrot.slane %v81, %v85
    %vm90 = vcmask 1041409
    %v91 = vsel %vm90, %v76, %v75
    %v92 = vsel %vm31, %v91, 0
    %94 = vmatprep.subr.mxu0 0.0
    %95 = vmatpush1.msra.mxu0 %v77
    %96 = vmatprep.subr.mxu0 0.0
    %97 = vmatpush1.msra.mxu0 %v78
    %98 = vmatprep.subr.mxu0 0.0
    %99 = vmatpush1.msra.mxu0 %v79
    %100 = vmatprep.subr.mxu0 0.0
    %101 = vmatpush1.msra.mxu0 %v80
    %102 = vmatprep.subr.mxu0 0.0
    %103 = vmatpush1.msra.mxu0 0.0
    %104 = vmatprep.subr.mxu0 0.0
    %105 = vmatpush1.msra.mxu0 0.0
    %106 = vmatprep.subr.mxu0 0.0
    %107 = vmatpush1.msra.mxu0 0.0
    %108 = vmatprep.subr.mxu0 0.0
    %109 = vmatpush1.msra.mxu0 0.0
    %110 = vmatprep.subr.mxu0 0.0
    %111 = vmatpush1.msra.mxu0 0.0
    %112 = vmatprep.subr.mxu0 0.0
    %113 = vmatpush1.msra.mxu0 0.0
    %114 = vmatprep.subr.mxu0 0.0
    %115 = vmatpush1.msra.mxu0 0.0
    %116 = vmatprep.subr.mxu0 0.0
    %117 = vmatpush1.msra.mxu0 0.0
    %118 = vmatprep.subr.mxu0 0.0
    %119 = vmatpush1.msra.mxu0 0.0
    %120 = vmatprep.subr.mxu0 0.0
    %121 = vmatpush1.msra.mxu0 0.0
    %122 = vmatprep.subr.mxu0 0.0
    %123 = vmatpush1.msra.mxu0 0.0
    %124 = vmatprep.subr.mxu0 0.0
    %125 = vmatpush1.msra.mxu0 0.0
    %126 = vmatprep.subr.mxu0 0.0
    %127 = vmatpush1.msra.mxu0 0.0
    %128 = vmatprep.subr.mxu0 0.0
    %129 = vmatpush1.msra.mxu0 0.0
    %130 = vmatprep.subr.mxu0 0.0
    %131 = vmatpush1.msra.mxu0 0.0
    %132 = vmatprep.subr.mxu0 0.0
    %133 = vmatpush1.msra.mxu0 0.0
    %134 = vmatprep.subr.mxu0 0.0
    %135 = vmatpush1.msra.mxu0 0.0
    %136 = vmatprep.subr.mxu0 0.0
    %137 = vmatpush1.msra.mxu0 0.0
    %138 = vmatprep.subr.mxu0 0.0
    %139 = vmatpush1.msra.mxu0 0.0
    %140 = vmatprep.subr.mxu0 0.0
    %141 = vmatpush1.msra.mxu0 0.0
    %142 = vmatprep.subr.mxu0 0.0
    %143 = vmatpush1.msra.mxu0 0.0
    %144 = vmatprep.subr.mxu0 0.0
    %145 = vmatpush1.msra.mxu0 0.0
    %146 = vmatprep.subr.mxu0 0.0
    %147 = vmatpush1.msra.mxu0 0.0
    %148 = vmatprep.subr.mxu0 0.0
    %149 = vmatpush1.msra.mxu0 0.0
    %150 = vmatprep.subr.mxu0 0.0
    %151 = vmatpush1.msra.mxu0 0.0
    %152 = vmatprep.subr.mxu0 0.0
    %153 = vmatpush1.msra.mxu0 0.0
    %154 = vmatprep.subr.mxu0 0.0
    %155 = vmatpush1.msra.mxu0 0.0
    %156 = vmatprep.subr.mxu0 0.0
    %157 = vmatpush1.msra.mxu0 0.0
    %158 = vmatprep.mubr.f32.mxu0 0.0
    %159 = vmatmul.mubr.f32.gmra.mrb[0].mxu0 %v92
    %v160 = vpop.f32.mrb[0].mxu0
    %v161 = vadd.f32 %v86, %v160
    %v162 = vpop.f32.mrb[0].mxu0
    %163 = vdwg.mxu0
    %vm164 = vcmask 41984
    %165 = vst.msk [vmem:[#allocation2] sm:$0x3] %vm164, %v161
    // Predicated region
    $region14: #{_lambda_.19} parent=1 // pred_check
      _
    $region15: #{_lambda_.19} parent=1 // pred_check_branch
      %167 = sbr.rel (0) target = $region17
    $region16: #{_lambda_.19} parent=1 // pred_region
      %s169 = ssub.s32 32, 32
      %170 = vsyncadd [#allocation3], %s169
      %s172 = sshll.u32 [#allocation2], 4
      %s173 = int_to_ptr.vmem [resolvable:$true] %s172
      %175 = dma.vmem_to_hbm [thread:$0]  %s173, 32, %s3, [#allocation3]
    $region17: #{_lambda_.19} parent=1 // pred_fallthru
      _
    // Predicated region
    $region18: #{_lambda_.19} parent=1 // pred_check
      _
    $region19: #{_lambda_.19} parent=1 // pred_check_branch
      %177 = sbr.rel (0) target = $region21
    $region20: #{_lambda_.19} parent=1 // pred_region
      %178 = dma.done [#allocation3], 32
    $region21: #{_lambda_.19} parent=1 // pred_fallthru
      _
    %179 = vsyncpa [#allocation3], 1

</llo_original>
